<compile_context>
chip_gen: v7x
topology: tpu7x:2x2x1
jax: 0.10.0
libtpu: 0.0.40
codegen_flags: <defaults>
</compile_context>

<pallas_src>
import jax
import jax.numpy as jnp
from jax.experimental import pallas as pl
from jax.experimental.pallas import tpu as pltpu

LATENT_DIM = 100
NUM_CLASSES = 10
IN_DIM = LATENT_DIM + NUM_CLASSES          # 110
H1, H2, H3 = 256, 512, 1024
OUT_DIM = 28 * 28                          # 784
OUT_DIM_PAD = 896                          # 7 * 128 (lane-dense output)
BN_EPS = 1e-5
LRELU_SLOPE = 0.2


def _leaky_relu(x):
    return jnp.where(x > 0, x, LRELU_SLOPE * x)


def _bn_lrelu(x, gamma, beta):
    # Train-mode BatchNorm1d: batch mean, biased variance; single reduction pass.
    mu = jnp.mean(x, axis=0, keepdims=True)
    ms = jnp.mean(x * x, axis=0, keepdims=True)
    var = ms - mu * mu
    y = (x - mu) * jax.lax.rsqrt(var + BN_EPS) * gamma + beta
    return _leaky_relu(y)


def generator_kernel(noise_ref, onehot_ref,
                     w1n_ref, w1l_ref, b1_ref,
                     w2_ref, b2_ref, g2_ref, be2_ref,
                     w3_ref, b3_ref, g3_ref, be3_ref,
                     w4_ref, b4_ref,
                     out_ref):
    noise = noise_ref[...].astype(jnp.bfloat16)     # (B, 100)
    onehot = onehot_ref[...].astype(jnp.bfloat16)   # (B, 10)

    # Linear(110 -> 256) split as two dots (replaces concat+pad) + LeakyReLU
    h = (jnp.dot(noise, w1n_ref[...], preferred_element_type=jnp.float32)
         + jnp.dot(onehot, w1l_ref[...], preferred_element_type=jnp.float32)
         + b1_ref[...])
    h = _leaky_relu(h)

    # Linear(256 -> 512) + BatchNorm1d(512) + LeakyReLU
    h = jnp.dot(h.astype(jnp.bfloat16), w2_ref[...],
                preferred_element_type=jnp.float32) + b2_ref[...]
    h = _bn_lrelu(h, g2_ref[...], be2_ref[...])

    # Linear(512 -> 1024) + BatchNorm1d(1024) + LeakyReLU
    h = jnp.dot(h.astype(jnp.bfloat16), w3_ref[...],
                preferred_element_type=jnp.float32) + b3_ref[...]
    h = _bn_lrelu(h, g3_ref[...], be3_ref[...])

    # Linear(1024 -> 784, padded to 896) + Tanh  (padded cols are zeros -> tanh(0)=0)
    h = jnp.dot(h.astype(jnp.bfloat16), w4_ref[...],
                preferred_element_type=jnp.float32) + b4_ref[...]
    out_ref[...] = jnp.tanh(h)


@jax.jit
def generator_forward(noise, labels_onehot, params):
    B = noise.shape[0]
    vmem = pl.BlockSpec(memory_space=pltpu.MemorySpace.VMEM)
    n_inputs = 2 + len(params)

    out = pl.pallas_call(
        generator_kernel,
        out_shape=jax.ShapeDtypeStruct((B, OUT_DIM_PAD), jnp.float32),
        in_specs=[vmem] * n_inputs,
        out_specs=vmem,
        compiler_params=pltpu.CompilerParams(vmem_limit_bytes=32 << 20),
    )(noise.astype(jnp.float32), labels_onehot.astype(jnp.float32), *params)

    # Drop lane padding, then NCHW view (done by the consumer-side fusion).
    return out[:, :OUT_DIM].reshape(B, 1, 28, 28)


def init_params(key):
    """Deterministic init matching PyTorch Linear defaults (uniform +/- 1/sqrt(fan_in))."""
    ks = jax.random.split(key, 8)

    def linear(kw, kb, fan_in, fan_out):
        bound = 1.0 / jnp.sqrt(fan_in)
        w = jax.random.uniform(kw, (fan_in, fan_out), jnp.float32, -bound, bound)
        b = jax.random.uniform(kb, (1, fan_out), jnp.float32, -bound, bound)
        return w, b

    w1, b1 = linear(ks[0], ks[1], IN_DIM, H1)        # (110, 256), (1, 256)
    w2, b2 = linear(ks[2], ks[3], H1, H2)            # (256, 512)
    w3, b3 = linear(ks[4], ks[5], H2, H3)            # (512, 1024)
    w4, b4 = linear(ks[6], ks[7], H3, OUT_DIM)       # (1024, 784)

    # Split first layer for the concat-free kernel; store weights in bf16.
    w1n = w1[:LATENT_DIM].astype(jnp.bfloat16)       # (100, 256)
    w1l = w1[LATENT_DIM:].astype(jnp.bfloat16)       # (10, 256)
    w2b = w2.astype(jnp.bfloat16)
    w3b = w3.astype(jnp.bfloat16)
    # Lane-pad last layer 784 -> 896 with zero columns.
    w4b = jnp.pad(w4, ((0, 0), (0, OUT_DIM_PAD - OUT_DIM))).astype(jnp.bfloat16)
    b4p = jnp.pad(b4, ((0, 0), (0, OUT_DIM_PAD - OUT_DIM)))

    g2, be2 = jnp.ones((1, H2), jnp.float32), jnp.zeros((1, H2), jnp.float32)
    g3, be3 = jnp.ones((1, H3), jnp.float32), jnp.zeros((1, H3), jnp.float32)

    return (w1n, w1l, b1, w2b, b2, g2, be2, w3b, b3, g3, be3, w4b, b4p)


def reference_forward(noise, labels_onehot, params):
    """Pure-JAX reference using the same bf16 weights / f32 accumulation."""
    (w1n, w1l, b1, w2, b2, g2, be2, w3, b3, g3, be3, w4, b4) = params
    n = noise.astype(jnp.bfloat16)
    l = labels_onehot.astype(jnp.bfloat16)
    h = (jnp.dot(n, w1n, preferred_element_type=jnp.float32)
         + jnp.dot(l, w1l, preferred_element_type=jnp.float32) + b1)
    h = _leaky_relu(h)
    h = jnp.dot(h.astype(jnp.bfloat16), w2, preferred_element_type=jnp.float32) + b2
    h = _bn_lrelu(h, g2, be2)
    h = jnp.dot(h.astype(jnp.bfloat16), w3, preferred_element_type=jnp.float32) + b3
    h = _bn_lrelu(h, g3, be3)
    h = jnp.dot(h.astype(jnp.bfloat16), w4, preferred_element_type=jnp.float32) + b4
    h = jnp.tanh(h)
    return h[:, :OUT_DIM].reshape(noise.shape[0], 1, 28, 28)


if __name__ == "__main__":
    key = jax.random.PRNGKey(0)
    k_param, k_noise, k_label = jax.random.split(key, 3)

    B = 8
    params = init_params(k_param)
    noise = jax.random.normal(k_noise, (B, LATENT_DIM), jnp.float32)
    labels = jax.random.randint(k_label, (B,), 0, NUM_CLASSES)
    labels_onehot = jax.nn.one_hot(labels, NUM_CLASSES, dtype=jnp.float32)

    out = generator_forward(noise, labels_onehot, params)
    out = jax.block_until_ready(out)

    ref = reference_forward(noise, labels_onehot, params)
    assert out.shape == (B, 1, 28, 28), out.shape
    assert jnp.allclose(out, ref, atol=1e-2, rtol=1e-2), (
        "mismatch vs reference, max err = "
        f"{float(jnp.max(jnp.abs(out - ref)))}")

    print("KERNEL_OK")
</pallas_src>

<mosaic_0001>
module attributes {stable_mosaic.version = 11 : i64} {
  func.func @generator_kernel(%arg0: memref<8x100xf32, #tpu.memory_space<vmem>>, %arg1: memref<8x10xf32, #tpu.memory_space<vmem>>, %arg2: memref<100x256xbf16, #tpu.memory_space<vmem>>, %arg3: memref<10x256xbf16, #tpu.memory_space<vmem>>, %arg4: memref<1x256xf32, #tpu.memory_space<vmem>>, %arg5: memref<256x512xbf16, #tpu.memory_space<vmem>>, %arg6: memref<1x512xf32, #tpu.memory_space<vmem>>, %arg7: memref<1x512xf32, #tpu.memory_space<vmem>>, %arg8: memref<1x512xf32, #tpu.memory_space<vmem>>, %arg9: memref<512x1024xbf16, #tpu.memory_space<vmem>>, %arg10: memref<1x1024xf32, #tpu.memory_space<vmem>>, %arg11: memref<1x1024xf32, #tpu.memory_space<vmem>>, %arg12: memref<1x1024xf32, #tpu.memory_space<vmem>>, %arg13: memref<1024x896xbf16, #tpu.memory_space<vmem>>, %arg14: memref<1x896xf32, #tpu.memory_space<vmem>>, %arg15: memref<8x896xf32, #tpu.memory_space<vmem>>) attributes {dimension_semantics = [], scalar_prefetch = 0 : i64, scratch_operands = 0 : i64, tpu.core_type = #tpu.core_type<tc>} {
    %c0 = arith.constant 0 : index
    %c0_0 = arith.constant 0 : index
    %0 = vector.load %arg0[%c0, %c0_0] : memref<8x100xf32, #tpu.memory_space<vmem>>, vector<8x100xf32>
    %1 = arith.truncf %0 : vector<8x100xf32> to vector<8x100xbf16>
    %c0_1 = arith.constant 0 : index
    %c0_2 = arith.constant 0 : index
    %2 = vector.load %arg1[%c0_1, %c0_2] : memref<8x10xf32, #tpu.memory_space<vmem>>, vector<8x10xf32>
    %3 = arith.truncf %2 : vector<8x10xf32> to vector<8x10xbf16>
    %c0_3 = arith.constant 0 : index
    %c0_4 = arith.constant 0 : index
    %4 = vector.load %arg2[%c0_3, %c0_4] : memref<100x256xbf16, #tpu.memory_space<vmem>>, vector<100x256xbf16>
    %cst = arith.constant dense<0.000000e+00> : vector<8x256xf32>
    %5 = tpu.matmul %1, %4, %cst {dimension_numbers = #tpu.dot_dimension_numbers<[1], [0], [0], [1], [0, 0, 1, 1], [], []>} : vector<8x100xbf16>, vector<100x256xbf16>, vector<8x256xf32> -> vector<8x256xf32>
    %c0_5 = arith.constant 0 : index
    %c0_6 = arith.constant 0 : index
    %6 = vector.load %arg3[%c0_5, %c0_6] : memref<10x256xbf16, #tpu.memory_space<vmem>>, vector<10x256xbf16>
    %cst_7 = arith.constant dense<0.000000e+00> : vector<8x256xf32>
    %7 = tpu.matmul %3, %6, %cst_7 {dimension_numbers = #tpu.dot_dimension_numbers<[1], [0], [0], [1], [0, 0, 1, 1], [], []>} : vector<8x10xbf16>, vector<10x256xbf16>, vector<8x256xf32> -> vector<8x256xf32>
    %8 = arith.addf %5, %7 : vector<8x256xf32>
    %c0_8 = arith.constant 0 : index
    %c0_9 = arith.constant 0 : index
    %9 = vector.load %arg4[%c0_8, %c0_9] : memref<1x256xf32, #tpu.memory_space<vmem>>, vector<1x256xf32>
    %10 = vector.broadcast %9 : vector<1x256xf32> to vector<8x256xf32>
    %11 = arith.addf %8, %10 : vector<8x256xf32>
    %cst_10 = arith.constant 0.000000e+00 : f32
    %12 = vector.broadcast %cst_10 : f32 to vector<8x256xf32>
    %13 = arith.cmpf ogt, %11, %12 : vector<8x256xf32>
    %cst_11 = arith.constant 2.000000e-01 : f32
    %14 = vector.broadcast %cst_11 : f32 to vector<8x256xf32>
    %15 = arith.mulf %14, %11 : vector<8x256xf32>
    %16 = arith.select %13, %11, %15 : vector<8x256xi1>, vector<8x256xf32>
    %17 = arith.truncf %16 : vector<8x256xf32> to vector<8x256xbf16>
    %c0_12 = arith.constant 0 : index
    %c0_13 = arith.constant 0 : index
    %18 = vector.load %arg5[%c0_12, %c0_13] : memref<256x512xbf16, #tpu.memory_space<vmem>>, vector<256x512xbf16>
    %cst_14 = arith.constant dense<0.000000e+00> : vector<8x512xf32>
    %19 = tpu.matmul %17, %18, %cst_14 {dimension_numbers = #tpu.dot_dimension_numbers<[1], [0], [0], [1], [0, 0, 1, 1], [], []>} : vector<8x256xbf16>, vector<256x512xbf16>, vector<8x512xf32> -> vector<8x512xf32>
    %c0_15 = arith.constant 0 : index
    %c0_16 = arith.constant 0 : index
    %20 = vector.load %arg6[%c0_15, %c0_16] : memref<1x512xf32, #tpu.memory_space<vmem>>, vector<1x512xf32>
    %21 = vector.broadcast %20 : vector<1x512xf32> to vector<8x512xf32>
    %22 = arith.addf %19, %21 : vector<8x512xf32>
    %c0_17 = arith.constant 0 : index
    %c0_18 = arith.constant 0 : index
    %23 = vector.load %arg7[%c0_17, %c0_18] : memref<1x512xf32, #tpu.memory_space<vmem>>, vector<1x512xf32>
    %c0_19 = arith.constant 0 : index
    %c0_20 = arith.constant 0 : index
    %24 = vector.load %arg8[%c0_19, %c0_20] : memref<1x512xf32, #tpu.memory_space<vmem>>, vector<1x512xf32>
    %cst_21 = arith.constant dense<0.000000e+00> : vector<512xf32>
    %25 = vector.multi_reduction <add>, %22, %cst_21 [0] : vector<8x512xf32> to vector<512xf32>
    %26 = vector.shape_cast %25 : vector<512xf32> to vector<1x512xf32>
    %cst_22 = arith.constant 8.000000e+00 : f32
    %27 = vector.broadcast %cst_22 : f32 to vector<1x512xf32>
    %28 = arith.divf %26, %27 : vector<1x512xf32>
    %29 = arith.mulf %22, %22 : vector<8x512xf32>
    %cst_23 = arith.constant dense<0.000000e+00> : vector<512xf32>
    %30 = vector.multi_reduction <add>, %29, %cst_23 [0] : vector<8x512xf32> to vector<512xf32>
    %31 = vector.shape_cast %30 : vector<512xf32> to vector<1x512xf32>
    %cst_24 = arith.constant 8.000000e+00 : f32
    %32 = vector.broadcast %cst_24 : f32 to vector<1x512xf32>
    %33 = arith.divf %31, %32 : vector<1x512xf32>
    %34 = arith.mulf %28, %28 : vector<1x512xf32>
    %35 = arith.subf %33, %34 : vector<1x512xf32>
    %36 = vector.broadcast %28 : vector<1x512xf32> to vector<8x512xf32>
    %37 = arith.subf %22, %36 : vector<8x512xf32>
    %cst_25 = arith.constant 9.99999974E-6 : f32
    %38 = vector.broadcast %cst_25 : f32 to vector<1x512xf32>
    %39 = arith.addf %35, %38 : vector<1x512xf32>
    %40 = math.rsqrt %39 : vector<1x512xf32>
    %41 = vector.broadcast %40 : vector<1x512xf32> to vector<8x512xf32>
    %42 = arith.mulf %37, %41 : vector<8x512xf32>
    %43 = vector.broadcast %23 : vector<1x512xf32> to vector<8x512xf32>
    %44 = arith.mulf %42, %43 : vector<8x512xf32>
    %45 = vector.broadcast %24 : vector<1x512xf32> to vector<8x512xf32>
    %46 = arith.addf %44, %45 : vector<8x512xf32>
    %cst_26 = arith.constant 0.000000e+00 : f32
    %47 = vector.broadcast %cst_26 : f32 to vector<8x512xf32>
    %48 = arith.cmpf ogt, %46, %47 : vector<8x512xf32>
    %cst_27 = arith.constant 2.000000e-01 : f32
    %49 = vector.broadcast %cst_27 : f32 to vector<8x512xf32>
    %50 = arith.mulf %49, %46 : vector<8x512xf32>
    %51 = arith.select %48, %46, %50 : vector<8x512xi1>, vector<8x512xf32>
    %52 = arith.truncf %51 : vector<8x512xf32> to vector<8x512xbf16>
    %c0_28 = arith.constant 0 : index
    %c0_29 = arith.constant 0 : index
    %53 = vector.load %arg9[%c0_28, %c0_29] : memref<512x1024xbf16, #tpu.memory_space<vmem>>, vector<512x1024xbf16>
    %cst_30 = arith.constant dense<0.000000e+00> : vector<8x1024xf32>
    %54 = tpu.matmul %52, %53, %cst_30 {dimension_numbers = #tpu.dot_dimension_numbers<[1], [0], [0], [1], [0, 0, 1, 1], [], []>} : vector<8x512xbf16>, vector<512x1024xbf16>, vector<8x1024xf32> -> vector<8x1024xf32>
    %c0_31 = arith.constant 0 : index
    %c0_32 = arith.constant 0 : index
    %55 = vector.load %arg10[%c0_31, %c0_32] : memref<1x1024xf32, #tpu.memory_space<vmem>>, vector<1x1024xf32>
    %56 = vector.broadcast %55 : vector<1x1024xf32> to vector<8x1024xf32>
    %57 = arith.addf %54, %56 : vector<8x1024xf32>
    %c0_33 = arith.constant 0 : index
    %c0_34 = arith.constant 0 : index
    %58 = vector.load %arg11[%c0_33, %c0_34] : memref<1x1024xf32, #tpu.memory_space<vmem>>, vector<1x1024xf32>
    %c0_35 = arith.constant 0 : index
    %c0_36 = arith.constant 0 : index
    %59 = vector.load %arg12[%c0_35, %c0_36] : memref<1x1024xf32, #tpu.memory_space<vmem>>, vector<1x1024xf32>
    %cst_37 = arith.constant dense<0.000000e+00> : vector<1024xf32>
    %60 = vector.multi_reduction <add>, %57, %cst_37 [0] : vector<8x1024xf32> to vector<1024xf32>
    %61 = vector.shape_cast %60 : vector<1024xf32> to vector<1x1024xf32>
    %cst_38 = arith.constant 8.000000e+00 : f32
    %62 = vector.broadcast %cst_38 : f32 to vector<1x1024xf32>
    %63 = arith.divf %61, %62 : vector<1x1024xf32>
    %64 = arith.mulf %57, %57 : vector<8x1024xf32>
    %cst_39 = arith.constant dense<0.000000e+00> : vector<1024xf32>
    %65 = vector.multi_reduction <add>, %64, %cst_39 [0] : vector<8x1024xf32> to vector<1024xf32>
    %66 = vector.shape_cast %65 : vector<1024xf32> to vector<1x1024xf32>
    %cst_40 = arith.constant 8.000000e+00 : f32
    %67 = vector.broadcast %cst_40 : f32 to vector<1x1024xf32>
    %68 = arith.divf %66, %67 : vector<1x1024xf32>
    %69 = arith.mulf %63, %63 : vector<1x1024xf32>
    %70 = arith.subf %68, %69 : vector<1x1024xf32>
    %71 = vector.broadcast %63 : vector<1x1024xf32> to vector<8x1024xf32>
    %72 = arith.subf %57, %71 : vector<8x1024xf32>
    %cst_41 = arith.constant 9.99999974E-6 : f32
    %73 = vector.broadcast %cst_41 : f32 to vector<1x1024xf32>
    %74 = arith.addf %70, %73 : vector<1x1024xf32>
    %75 = math.rsqrt %74 : vector<1x1024xf32>
    %76 = vector.broadcast %75 : vector<1x1024xf32> to vector<8x1024xf32>
    %77 = arith.mulf %72, %76 : vector<8x1024xf32>
    %78 = vector.broadcast %58 : vector<1x1024xf32> to vector<8x1024xf32>
    %79 = arith.mulf %77, %78 : vector<8x1024xf32>
    %80 = vector.broadcast %59 : vector<1x1024xf32> to vector<8x1024xf32>
    %81 = arith.addf %79, %80 : vector<8x1024xf32>
    %cst_42 = arith.constant 0.000000e+00 : f32
    %82 = vector.broadcast %cst_42 : f32 to vector<8x1024xf32>
    %83 = arith.cmpf ogt, %81, %82 : vector<8x1024xf32>
    %cst_43 = arith.constant 2.000000e-01 : f32
    %84 = vector.broadcast %cst_43 : f32 to vector<8x1024xf32>
    %85 = arith.mulf %84, %81 : vector<8x1024xf32>
    %86 = arith.select %83, %81, %85 : vector<8x1024xi1>, vector<8x1024xf32>
    %87 = arith.truncf %86 : vector<8x1024xf32> to vector<8x1024xbf16>
    %c0_44 = arith.constant 0 : index
    %c0_45 = arith.constant 0 : index
    %88 = vector.load %arg13[%c0_44, %c0_45] : memref<1024x896xbf16, #tpu.memory_space<vmem>>, vector<1024x896xbf16>
    %cst_46 = arith.constant dense<0.000000e+00> : vector<8x896xf32>
    %89 = tpu.matmul %87, %88, %cst_46 {dimension_numbers = #tpu.dot_dimension_numbers<[1], [0], [0], [1], [0, 0, 1, 1], [], []>} : vector<8x1024xbf16>, vector<1024x896xbf16>, vector<8x896xf32> -> vector<8x896xf32>
    %c0_47 = arith.constant 0 : index
    %c0_48 = arith.constant 0 : index
    %90 = vector.load %arg14[%c0_47, %c0_48] : memref<1x896xf32, #tpu.memory_space<vmem>>, vector<1x896xf32>
    %91 = vector.broadcast %90 : vector<1x896xf32> to vector<8x896xf32>
    %92 = arith.addf %89, %91 : vector<8x896xf32>
    %93 = math.tanh %92 : vector<8x896xf32>
    %c0_49 = arith.constant 0 : index
    %c0_50 = arith.constant 0 : index
    %94 = vector.load %arg15[%c0_49, %c0_50] : memref<8x896xf32, #tpu.memory_space<vmem>>, vector<8x896xf32>
    tpu.vector_store %arg15[%c0_49, %c0_50], %93 {strides = array<i32>} : memref<8x896xf32, #tpu.memory_space<vmem>>, vector<8x896xf32>,
    return
  }
}

</mosaic_0001>

<llo_original>
// kernel: generator_forward.1
$region0: #{generator_forward.1}
  #allocation0 [shape = 'u32[]', space=smem, size = 0x4, offset = 0x4, fixed_abs, tag = 'smem constant byte address 0x4 - core index']
  #allocation1 [shape = 'u32[144,128]{1,0:T(1,128)}', space=vmem, size = 0x12000, scoped, tag = 'internal scratch']
  %s0 = inlined_call_operand.hbm [shape: f32[8,100], index: 0, kind: input, shape index: {}]
  %s1 = inlined_call_operand.hbm [shape: f32[8,10], index: 1, kind: input, shape index: {}]
  %s2 = inlined_call_operand.hbm [shape: bf16[100,256], index: 2, kind: input, shape index: {}]
  %s3 = inlined_call_operand.hbm [shape: bf16[10,256], index: 3, kind: input, shape index: {}]
  %s4 = inlined_call_operand.hbm [shape: f32[1,256], index: 4, kind: input, shape index: {}]
  %s5 = inlined_call_operand.hbm [shape: bf16[256,512], index: 5, kind: input, shape index: {}]
  %s6 = inlined_call_operand.hbm [shape: f32[1,512], index: 6, kind: input, shape index: {}]
  %s7 = inlined_call_operand.hbm [shape: f32[1,512], index: 7, kind: input, shape index: {}]
  %s8 = inlined_call_operand.hbm [shape: f32[1,512], index: 8, kind: input, shape index: {}]
  %s9 = inlined_call_operand.hbm [shape: bf16[512,1024], index: 9, kind: input, shape index: {}]
  %s10 = inlined_call_operand.hbm [shape: f32[1,1024], index: 10, kind: input, shape index: {}]
  %s11 = inlined_call_operand.hbm [shape: f32[1,1024], index: 11, kind: input, shape index: {}]
  %s12 = inlined_call_operand.hbm [shape: f32[1,1024], index: 12, kind: input, shape index: {}]
  %s13 = inlined_call_operand.hbm [shape: bf16[1024,896], index: 13, kind: input, shape index: {}]
  %s14 = inlined_call_operand.hbm [shape: f32[1,896], index: 14, kind: input, shape index: {}]
  %s15 = inlined_call_operand.vmem [shape: f32[8,896], index: 15, kind: output, shape index: {}]
  %s16 = sld [smem:[#allocation0]]
  $region130: #{generator_forward.1} parent=0
    _
  %s18 = ssub.s32 1, %s16
  %s19 = scalar_select 0, %s18, %s16
  $region1: #{generator_forward.1} parent=0
    #allocation2 [shape = 'u8[4096]{0}', space=vmem, size = 0x1000, scoped, tag = 'input window, operand 0, single buffered']
    #allocation3 [shape = 's32[1]{0}', space=sflag, size = 0x4, scoped, tag = 'scoped memory for generator_forward.1']
    #allocation4 [shape = 'u8[4096]{0}', space=vmem, size = 0x1000, scoped, tag = 'input window, operand 1, single buffered']
    #allocation5 [shape = 's32[1]{0}', space=sflag, size = 0x4, scoped, tag = 'scoped memory for generator_forward.1']
    #allocation6 [shape = 'u8[53248]{0}', space=vmem, size = 0xd000, scoped, tag = 'input window, operand 2, single buffered']
    #allocation7 [shape = 'u8[8192]{0}', space=vmem, size = 0x2000, scoped, tag = 'input window, operand 3, single buffered']
    #allocation8 [shape = 's32[1]{0}', space=sflag, size = 0x4, scoped, tag = 'scoped memory for generator_forward.1']
    #allocation9 [shape = 'u8[1024]{0}', space=vmem, size = 0x400, scoped, tag = 'input window, operand 4, single buffered']
    #allocation10 [shape = 'u8[262144]{0}', space=vmem, size = 0x40000, scoped, tag = 'input window, operand 5, single buffered']
    #allocation11 [shape = 's32[1]{0}', space=sflag, size = 0x4, scoped, tag = 'scoped memory for generator_forward.1']
    #allocation12 [shape = 'u8[2048]{0}', space=vmem, size = 0x800, scoped, tag = 'input window, operand 6, single buffered']
    #allocation13 [shape = 'u8[2048]{0}', space=vmem, size = 0x800, scoped, tag = 'input window, operand 7, single buffered']
    #allocation14 [shape = 's32[1]{0}', space=sflag, size = 0x4, scoped, tag = 'scoped memory for generator_forward.1']
    #allocation15 [shape = 'u8[2048]{0}', space=vmem, size = 0x800, scoped, tag = 'input window, operand 8, single buffered']
    #allocation16 [shape = 'u8[1048576]{0}', space=vmem, size = 0x100000, scoped, tag = 'input window, operand 9, single buffered']
    #allocation17 [shape = 's32[1]{0}', space=sflag, size = 0x4, scoped, tag = 'scoped memory for generator_forward.1']
    #allocation18 [shape = 'u8[4096]{0}', space=vmem, size = 0x1000, scoped, tag = 'input window, operand 10, single buffered']
    #allocation19 [shape = 'u8[4096]{0}', space=vmem, size = 0x1000, scoped, tag = 'input window, operand 11, single buffered']
    #allocation20 [shape = 's32[1]{0}', space=sflag, size = 0x4, scoped, tag = 'scoped memory for generator_forward.1']
    #allocation21 [shape = 'u8[4096]{0}', space=vmem, size = 0x1000, scoped, tag = 'input window, operand 12, single buffered']
    #allocation22 [shape = 'u8[1835008]{0}', space=vmem, size = 0x1c0000, scoped, tag = 'input window, operand 13, single buffered']
    #allocation23 [shape = 's32[1]{0}', space=sflag, size = 0x4, scoped, tag = 'scoped memory for generator_forward.1']
    #allocation24 [shape = 'u8[3584]{0}', space=vmem, size = 0x1000, scoped, tag = 'input window, operand 14, single buffered']
    %20 = vsyncpa [#allocation3], 0
    %21 = vsyncpa [#allocation5], 0
    %22 = vsyncpa [#allocation8], 0
    %23 = vsyncpa [#allocation11], 0
    %24 = vsyncpa [#allocation14], 0
    %25 = vsyncpa [#allocation17], 0
    %26 = vsyncpa [#allocation20], 0
    %27 = vsyncpa [#allocation23], 0
    // Predicated region
    $region2: #{generator_forward.1} parent=1 // pred_check
      _
    $region3: #{generator_forward.1} parent=1 // pred_check_branch
      %29 = sbr.rel (0) target = $region5
    $region4: #{generator_forward.1} parent=1 // pred_region
      %s31 = ssub.s32 128, 128
      %32 = vsyncadd [#allocation3], %s31
      %s34 = sshll.u32 [#allocation2], 4
      %s35 = int_to_ptr.vmem [resolvable:$true] %s34
      %37 = dma.hbm_to_vmem [thread:$0]  %s0, 128, %s35, [#allocation3]
    $region5: #{generator_forward.1} parent=1 // pred_fallthru
      _
    // Predicated region
    $region6: #{generator_forward.1} parent=1 // pred_check
      _
    $region7: #{generator_forward.1} parent=1 // pred_check_branch
      %39 = sbr.rel (0) target = $region9
    $region8: #{generator_forward.1} parent=1 // pred_region
      %s41 = ssub.s32 128, 128
      %42 = vsyncadd [#allocation5], %s41
      %s44 = sshll.u32 [#allocation4], 4
      %s45 = int_to_ptr.vmem [resolvable:$true] %s44
      %47 = dma.hbm_to_vmem [thread:$0]  %s1, 128, %s45, [#allocation5]
    $region9: #{generator_forward.1} parent=1 // pred_fallthru
      _
    // Predicated region
    $region10: #{generator_forward.1} parent=1 // pred_check
      _
    $region11: #{generator_forward.1} parent=1 // pred_check_branch
      %49 = sbr.rel (0) target = $region13
    $region12: #{generator_forward.1} parent=1 // pred_region
      %s51 = ssub.s32 1664, 1664
      %52 = vsyncadd [#allocation5], %s51
      %s53 = sshll.u32 [#allocation6], 4
      %s54 = int_to_ptr.vmem [resolvable:$true] %s53
      %59 = dma.hbm_to_vmem [thread:$0]  %s2, 1664, %s54, [#allocation5], 128, 128, 8
    $region13: #{generator_forward.1} parent=1 // pred_fallthru
      _
    // Predicated region
    $region14: #{generator_forward.1} parent=1 // pred_check
      _
    $region15: #{generator_forward.1} parent=1 // pred_check_branch
      %61 = sbr.rel (0) target = $region17
    $region16: #{generator_forward.1} parent=1 // pred_region
      %s63 = ssub.s32 256, 256
      %64 = vsyncadd [#allocation8], %s63
      %s65 = sshll.u32 [#allocation7], 4
      %s66 = int_to_ptr.vmem [resolvable:$true] %s65
      %71 = dma.hbm_to_vmem [thread:$0]  %s3, 256, %s66, [#allocation8], 128, 128, 8
    $region17: #{generator_forward.1} parent=1 // pred_fallthru
      _
    // Predicated region
    $region18: #{generator_forward.1} parent=1 // pred_check
      _
    $region19: #{generator_forward.1} parent=1 // pred_check_branch
      %73 = sbr.rel (0) target = $region21
    $region20: #{generator_forward.1} parent=1 // pred_region
      %s75 = ssub.s32 32, 32
      %76 = vsyncadd [#allocation8], %s75
      %s78 = sshll.u32 [#allocation9], 4
      %s79 = int_to_ptr.vmem [resolvable:$true] %s78
      %81 = dma.hbm_to_vmem [thread:$0]  %s4, 32, %s79, [#allocation8]
    $region21: #{generator_forward.1} parent=1 // pred_fallthru
      _
    // Predicated region
    $region22: #{generator_forward.1} parent=1 // pred_check
      _
    $region23: #{generator_forward.1} parent=1 // pred_check_branch
      %83 = sbr.rel (0) target = $region25
    $region24: #{generator_forward.1} parent=1 // pred_region
      %s85 = ssub.s32 8192, 8192
      %86 = vsyncadd [#allocation11], %s85
      %s87 = sshll.u32 [#allocation10], 4
      %s88 = int_to_ptr.vmem [resolvable:$true] %s87
      %93 = dma.hbm_to_vmem [thread:$0]  %s5, 8192, %s88, [#allocation11], 256, 256, 16
    $region25: #{generator_forward.1} parent=1 // pred_fallthru
      _
    // Predicated region
    $region26: #{generator_forward.1} parent=1 // pred_check
      _
    $region27: #{generator_forward.1} parent=1 // pred_check_branch
      %95 = sbr.rel (0) target = $region29
    $region28: #{generator_forward.1} parent=1 // pred_region
      %s97 = ssub.s32 64, 64
      %98 = vsyncadd [#allocation11], %s97
      %s100 = sshll.u32 [#allocation12], 4
      %s101 = int_to_ptr.vmem [resolvable:$true] %s100
      %103 = dma.hbm_to_vmem [thread:$0]  %s6, 64, %s101, [#allocation11]
    $region29: #{generator_forward.1} parent=1 // pred_fallthru
      _
    // Predicated region
    $region30: #{generator_forward.1} parent=1 // pred_check
      _
    $region31: #{generator_forward.1} parent=1 // pred_check_branch
      %105 = sbr.rel (0) target = $region33
    $region32: #{generator_forward.1} parent=1 // pred_region
      %s107 = ssub.s32 64, 64
      %108 = vsyncadd [#allocation14], %s107
      %s110 = sshll.u32 [#allocation13], 4
      %s111 = int_to_ptr.vmem [resolvable:$true] %s110
      %113 = dma.hbm_to_vmem [thread:$0]  %s7, 64, %s111, [#allocation14]
    $region33: #{generator_forward.1} parent=1 // pred_fallthru
      _
    // Predicated region
    $region34: #{generator_forward.1} parent=1 // pred_check
      _
    $region35: #{generator_forward.1} parent=1 // pred_check_branch
      %115 = sbr.rel (0) target = $region37
    $region36: #{generator_forward.1} parent=1 // pred_region
      %s117 = ssub.s32 64, 64
      %118 = vsyncadd [#allocation14], %s117
      %s120 = sshll.u32 [#allocation15], 4
      %s121 = int_to_ptr.vmem [resolvable:$true] %s120
      %123 = dma.hbm_to_vmem [thread:$0]  %s8, 64, %s121, [#allocation14]
    $region37: #{generator_forward.1} parent=1 // pred_fallthru
      _
    // Predicated region
    $region38: #{generator_forward.1} parent=1 // pred_check
      _
    $region39: #{generator_forward.1} parent=1 // pred_check_branch
      %125 = sbr.rel (0) target = $region41
    $region40: #{generator_forward.1} parent=1 // pred_region
      %s127 = ssub.s32 32768, 32768
      %128 = vsyncadd [#allocation17], %s127
      %s129 = sshll.u32 [#allocation16], 4
      %s130 = int_to_ptr.vmem [resolvable:$true] %s129
      %135 = dma.hbm_to_vmem [thread:$0]  %s9, 32768, %s130, [#allocation17], 512, 512, 32
    $region41: #{generator_forward.1} parent=1 // pred_fallthru
      _
    // Predicated region
    $region42: #{generator_forward.1} parent=1 // pred_check
      _
    $region43: #{generator_forward.1} parent=1 // pred_check_branch
      %137 = sbr.rel (0) target = $region45
    $region44: #{generator_forward.1} parent=1 // pred_region
      %s139 = ssub.s32 128, 128
      %140 = vsyncadd [#allocation17], %s139
      %s142 = sshll.u32 [#allocation18], 4
      %s143 = int_to_ptr.vmem [resolvable:$true] %s142
      %145 = dma.hbm_to_vmem [thread:$0]  %s10, 128, %s143, [#allocation17]
    $region45: #{generator_forward.1} parent=1 // pred_fallthru
      _
    // Predicated region
    $region46: #{generator_forward.1} parent=1 // pred_check
      _
    $region47: #{generator_forward.1} parent=1 // pred_check_branch
      %147 = sbr.rel (0) target = $region49
    $region48: #{generator_forward.1} parent=1 // pred_region
      %s149 = ssub.s32 128, 128
      %150 = vsyncadd [#allocation20], %s149
      %s152 = sshll.u32 [#allocation19], 4
      %s153 = int_to_ptr.vmem [resolvable:$true] %s152
      %155 = dma.hbm_to_vmem [thread:$0]  %s11, 128, %s153, [#allocation20]
    $region49: #{generator_forward.1} parent=1 // pred_fallthru
      _
    // Predicated region
    $region50: #{generator_forward.1} parent=1 // pred_check
      _
    $region51: #{generator_forward.1} parent=1 // pred_check_branch
      %157 = sbr.rel (0) target = $region53
    $region52: #{generator_forward.1} parent=1 // pred_region
      %s159 = ssub.s32 128, 128
      %160 = vsyncadd [#allocation20], %s159
      %s162 = sshll.u32 [#allocation21], 4
      %s163 = int_to_ptr.vmem [resolvable:$true] %s162
      %165 = dma.hbm_to_vmem [thread:$0]  %s12, 128, %s163, [#allocation20]
    $region53: #{generator_forward.1} parent=1 // pred_fallthru
      _
    // Predicated region
    $region54: #{generator_forward.1} parent=1 // pred_check
      _
    $region55: #{generator_forward.1} parent=1 // pred_check_branch
      %167 = sbr.rel (0) target = $region57
    $region56: #{generator_forward.1} parent=1 // pred_region
      %s169 = ssub.s32 57344, 57344
      %170 = vsyncadd [#allocation23], %s169
      %s171 = sshll.u32 [#allocation22], 4
      %s172 = int_to_ptr.vmem [resolvable:$true] %s171
      %177 = dma.hbm_to_vmem [thread:$0]  %s13, 57344, %s172, [#allocation23], 448, 448, 28
    $region57: #{generator_forward.1} parent=1 // pred_fallthru
      _
    // Predicated region
    $region58: #{generator_forward.1} parent=1 // pred_check
      _
    $region59: #{generator_forward.1} parent=1 // pred_check_branch
      %179 = sbr.rel (0) target = $region61
    $region60: #{generator_forward.1} parent=1 // pred_region
      %s181 = ssub.s32 112, 112
      %182 = vsyncadd [#allocation23], %s181
      %s184 = sshll.u32 [#allocation24], 4
      %s185 = int_to_ptr.vmem [resolvable:$true] %s184
      %187 = dma.hbm_to_vmem [thread:$0]  %s14, 112, %s185, [#allocation23]
    $region61: #{generator_forward.1} parent=1 // pred_fallthru
      _
    // Predicated region
    $region62: #{generator_forward.1} parent=1 // pred_check
      _
    $region63: #{generator_forward.1} parent=1 // pred_check_branch
      %189 = sbr.rel (0) target = $region65
    $region64: #{generator_forward.1} parent=1 // pred_region
      %190 = dma.done [#allocation3], 128
    $region65: #{generator_forward.1} parent=1 // pred_fallthru
      _
    // Predicated region
    $region66: #{generator_forward.1} parent=1 // pred_check
      _
    $region67: #{generator_forward.1} parent=1 // pred_check_branch
      %192 = sbr.rel (0) target = $region69
    $region68: #{generator_forward.1} parent=1 // pred_region
      %193 = dma.done [#allocation5], 128
    $region69: #{generator_forward.1} parent=1 // pred_fallthru
      _
    // Predicated region
    $region70: #{generator_forward.1} parent=1 // pred_check
      _
    $region71: #{generator_forward.1} parent=1 // pred_check_branch
      %195 = sbr.rel (0) target = $region73
    $region72: #{generator_forward.1} parent=1 // pred_region
      %196 = dma.done [#allocation5], 1664
    $region73: #{generator_forward.1} parent=1 // pred_fallthru
      _
    // Predicated region
    $region74: #{generator_forward.1} parent=1 // pred_check
      _
    $region75: #{generator_forward.1} parent=1 // pred_check_branch
      %198 = sbr.rel (0) target = $region77
    $region76: #{generator_forward.1} parent=1 // pred_region
      %199 = dma.done [#allocation8], 256
    $region77: #{generator_forward.1} parent=1 // pred_fallthru
      _
    // Predicated region
    $region78: #{generator_forward.1} parent=1 // pred_check
      _
    $region79: #{generator_forward.1} parent=1 // pred_check_branch
      %201 = sbr.rel (0) target = $region81
    $region80: #{generator_forward.1} parent=1 // pred_region
      %202 = dma.done [#allocation8], 32
    $region81: #{generator_forward.1} parent=1 // pred_fallthru
      _
    // Predicated region
    $region82: #{generator_forward.1} parent=1 // pred_check
      _
    $region83: #{generator_forward.1} parent=1 // pred_check_branch
      %204 = sbr.rel (0) target = $region85
    $region84: #{generator_forward.1} parent=1 // pred_region
      %205 = dma.done [#allocation11], 8192
    $region85: #{generator_forward.1} parent=1 // pred_fallthru
      _
    // Predicated region
    $region86: #{generator_forward.1} parent=1 // pred_check
      _
    $region87: #{generator_forward.1} parent=1 // pred_check_branch
      %207 = sbr.rel (0) target = $region89
    $region88: #{generator_forward.1} parent=1 // pred_region
      %208 = dma.done [#allocation11], 64
    $region89: #{generator_forward.1} parent=1 // pred_fallthru
      _
    // Predicated region
    $region90: #{generator_forward.1} parent=1 // pred_check
      _
    $region91: #{generator_forward.1} parent=1 // pred_check_branch
      %210 = sbr.rel (0) target = $region93
    $region92: #{generator_forward.1} parent=1 // pred_region
      %211 = dma.done [#allocation14], 64
    $region93: #{generator_forward.1} parent=1 // pred_fallthru
      _
    // Predicated region
    $region94: #{generator_forward.1} parent=1 // pred_check
      _
    $region95: #{generator_forward.1} parent=1 // pred_check_branch
      %213 = sbr.rel (0) target = $region97
    $region96: #{generator_forward.1} parent=1 // pred_region
      %214 = dma.done [#allocation14], 64
    $region97: #{generator_forward.1} parent=1 // pred_fallthru
      _
    // Predicated region
    $region98: #{generator_forward.1} parent=1 // pred_check
      _
    $region99: #{generator_forward.1} parent=1 // pred_check_branch
      %216 = sbr.rel (0) target = $region101
    $region100: #{generator_forward.1} parent=1 // pred_region
      %217 = dma.done [#allocation17], 32768
    $region101: #{generator_forward.1} parent=1 // pred_fallthru
      _
    // Predicated region
    $region102: #{generator_forward.1} parent=1 // pred_check
      _
    $region103: #{generator_forward.1} parent=1 // pred_check_branch
      %219 = sbr.rel (0) target = $region105
    $region104: #{generator_forward.1} parent=1 // pred_region
      %220 = dma.done [#allocation17], 128
    $region105: #{generator_forward.1} parent=1 // pred_fallthru
      _
    // Predicated region
    $region106: #{generator_forward.1} parent=1 // pred_check
      _
    $region107: #{generator_forward.1} parent=1 // pred_check_branch
      %222 = sbr.rel (0) target = $region109
    $region108: #{generator_forward.1} parent=1 // pred_region
      %223 = dma.done [#allocation20], 128
    $region109: #{generator_forward.1} parent=1 // pred_fallthru
      _
    // Predicated region
    $region110: #{generator_forward.1} parent=1 // pred_check
      _
    $region111: #{generator_forward.1} parent=1 // pred_check_branch
      %225 = sbr.rel (0) target = $region113
    $region112: #{generator_forward.1} parent=1 // pred_region
      %226 = dma.done [#allocation20], 128
    $region113: #{generator_forward.1} parent=1 // pred_fallthru
      _
    // Predicated region
    $region114: #{generator_forward.1} parent=1 // pred_check
      _
    $region115: #{generator_forward.1} parent=1 // pred_check_branch
      %228 = sbr.rel (0) target = $region117
    $region116: #{generator_forward.1} parent=1 // pred_region
      %229 = dma.done [#allocation23], 57344
    $region117: #{generator_forward.1} parent=1 // pred_fallthru
      _
    // Predicated region
    $region118: #{generator_forward.1} parent=1 // pred_check
      _
    $region119: #{generator_forward.1} parent=1 // pred_check_branch
      %231 = sbr.rel (0) target = $region121
    $region120: #{generator_forward.1} parent=1 // pred_region
      %232 = dma.done [#allocation23], 112
    $region121: #{generator_forward.1} parent=1 // pred_fallthru
      _
    %v234 = vld [vmem:[#allocation2] sm:$0xff]
    %v235 = vpack.c.bf16 %v234, %v234
    %v236 = vld [vmem:[#allocation4] sm:$0xff]
    %v237 = vpack.c.bf16 %v236, %v236
    %v238 = vld [vmem:[#allocation6] sm:$0xff]
    %v239 = vld [vmem:[#allocation6 + $0x8] sm:$0xff]
    %v240 = vld [vmem:[#allocation6 + $0x10] sm:$0xff]
    %v241 = vld [vmem:[#allocation6 + $0x18] sm:$0xff]
    %v242 = vld [vmem:[#allocation6 + $0x20] sm:$0xff]
    %v243 = vld [vmem:[#allocation6 + $0x28] sm:$0xff]
    %v244 = vld [vmem:[#allocation6 + $0x30] sm:$0xff]
    %v245 = vld [vmem:[#allocation6 + $0x38] sm:$0xff]
    %v246 = vld [vmem:[#allocation6 + $0x40] sm:$0xff]
    %v247 = vld [vmem:[#allocation6 + $0x48] sm:$0xff]
    %v248 = vld [vmem:[#allocation6 + $0x50] sm:$0xff]
    %v249 = vld [vmem:[#allocation6 + $0x58] sm:$0xff]
    %v250 = vld [vmem:[#allocation6 + $0x60] sm:$0x33]
    %v251 = vld [vmem:[#allocation7] sm:$0xff]
    %v252 = vld [vmem:[#allocation7 + $0x8] sm:$0x11]
    %v255 = vunpack.c.l.b16 %v251
    %v256 = vunpack.c.h.b16 %v251
    %v257 = vunpack.c.l.b16 %v252
    %v258 = vunpack.c.h.b16 %v252
    %v259 = vpack.c.b16 %v257, %v255
    %v260 = vpack.c.b16 %v258, %v256
    %vm261 = vcmask 80896
    %v263 = vsel %vm261, %v237, 0
    %vm265 = vcmask 1044480
    %v267 = vsel %vm265, %v259, 0
    %v270 = vsel %vm265, %v260, 0
    %272 = vmatprep.subr.bf16.mxu0 %v270
    %273 = vmatpush1.bf16.msra.mxu0 %v267
    %274 = vmatprep.subr.bf16.mxu0 0
    %275 = vmatpush1.bf16.msra.mxu0 0
    %276 = vmatprep.subr.bf16.mxu0 0
    %277 = vmatpush1.bf16.msra.mxu0 0
    %278 = vmatprep.subr.bf16.mxu0 0
    %279 = vmatpush1.bf16.msra.mxu0 0
    %280 = vmatprep.subr.bf16.mxu0 0
    %281 = vmatpush1.bf16.msra.mxu0 0
    %282 = vmatprep.subr.bf16.mxu0 0
    %283 = vmatpush1.bf16.msra.mxu0 0
    %284 = vmatprep.subr.bf16.mxu0 0
    %285 = vmatpush1.bf16.msra.mxu0 0
    %286 = vmatprep.subr.bf16.mxu0 0
    %287 = vmatpush1.bf16.msra.mxu0 0
    %288 = vmatprep.subr.bf16.mxu0 0
    %289 = vmatpush1.bf16.msra.mxu0 0
    %290 = vmatprep.subr.bf16.mxu0 0
    %291 = vmatpush1.bf16.msra.mxu0 0
    %292 = vmatprep.subr.bf16.mxu0 0
    %293 = vmatpush1.bf16.msra.mxu0 0
    %294 = vmatprep.subr.bf16.mxu0 0
    %295 = vmatpush1.bf16.msra.mxu0 0
    %296 = vmatprep.subr.bf16.mxu0 0
    %297 = vmatpush1.bf16.msra.mxu0 0
    %298 = vmatprep.subr.bf16.mxu0 0
    %299 = vmatpush1.bf16.msra.mxu0 0
    %300 = vmatprep.subr.bf16.mxu0 0
    %301 = vmatpush1.bf16.msra.mxu0 0
    %302 = vmatprep.subr.bf16.mxu0 0
    %303 = vmatpush1.bf16.msra.mxu0 0
    %304 = vmatprep.mubr.bf16.mxu0 0
    %305 = vmatmul.mubr.bf16.gmra.mrb[0].mxu0 %v263
    %v306 = vpop.f32.mrb[0].mxu0
    %v307 = vadd.f32 0.0, %v306
    %v308 = vpop.f32.mrb[0].mxu0
    %v309 = vadd.f32 0.0, %v308
    %v310 = vpop.f32.mrb[0].mxu0
    %v311 = vpop.f32.mrb[0].mxu0
    %312 = vdwg.mxu0
    %v326 = vunpack.c.l.b16 %v238
    %v327 = vunpack.c.h.b16 %v238
    %v328 = vunpack.c.l.b16 %v239
    %v329 = vunpack.c.h.b16 %v239
    %v330 = vunpack.c.l.b16 %v240
    %v331 = vunpack.c.h.b16 %v240
    %v332 = vunpack.c.l.b16 %v241
    %v333 = vunpack.c.h.b16 %v241
    %v334 = vunpack.c.l.b16 %v242
    %v335 = vunpack.c.h.b16 %v242
    %v336 = vunpack.c.l.b16 %v243
    %v337 = vunpack.c.h.b16 %v243
    %v338 = vunpack.c.l.b16 %v244
    %v339 = vunpack.c.h.b16 %v244
    %v340 = vunpack.c.l.b16 %v245
    %v341 = vunpack.c.h.b16 %v245
    %v342 = vunpack.c.l.b16 %v246
    %v343 = vunpack.c.h.b16 %v246
    %v344 = vunpack.c.l.b16 %v247
    %v345 = vunpack.c.h.b16 %v247
    %v346 = vunpack.c.l.b16 %v248
    %v347 = vunpack.c.h.b16 %v248
    %v348 = vunpack.c.l.b16 %v249
    %v349 = vunpack.c.h.b16 %v249
    %v350 = vunpack.c.l.b16 %v250
    %v351 = vunpack.c.h.b16 %v250
    %v352 = vpack.c.b16 %v328, %v326
    %v353 = vpack.c.b16 %v329, %v327
    %v354 = vpack.c.b16 %v332, %v330
    %v355 = vpack.c.b16 %v333, %v331
    %v356 = vpack.c.b16 %v336, %v334
    %v357 = vpack.c.b16 %v337, %v335
    %v358 = vpack.c.b16 %v340, %v338
    %v359 = vpack.c.b16 %v341, %v339
    %v360 = vpack.c.b16 %v344, %v342
    %v361 = vpack.c.b16 %v345, %v343
    %v362 = vpack.c.b16 %v348, %v346
    %v363 = vpack.c.b16 %v349, %v347
    %v364 = vpack.c.b16 %v350, %v350
    %v365 = vpack.c.b16 %v351, %v351
    %vm378 = vcmask 818176
    %v380 = vsel %vm378, %v235, 0
    %vm382 = vcmask 1041408
    %v384 = vsel %vm382, %v364, 0
    %v387 = vsel %vm382, %v365, 0
    %389 = vmatprep.subr.bf16.mxu0 %v353
    %390 = vmatpush1.bf16.msra.mxu0 %v352
    %391 = vmatprep.subr.bf16.mxu0 %v355
    %392 = vmatpush1.bf16.msra.mxu0 %v354
    %393 = vmatprep.subr.bf16.mxu0 %v357
    %394 = vmatpush1.bf16.msra.mxu0 %v356
    %395 = vmatprep.subr.bf16.mxu0 %v359
    %396 = vmatpush1.bf16.msra.mxu0 %v358
    %397 = vmatprep.subr.bf16.mxu0 %v361
    %398 = vmatpush1.bf16.msra.mxu0 %v360
    %399 = vmatprep.subr.bf16.mxu0 %v363
    %400 = vmatpush1.bf16.msra.mxu0 %v362
    %401 = vmatprep.subr.bf16.mxu0 %v387
    %402 = vmatpush1.bf16.msra.mxu0 %v384
    %403 = vmatprep.subr.bf16.mxu0 0
    %404 = vmatpush1.bf16.msra.mxu0 0
    %405 = vmatprep.subr.bf16.mxu0 0
    %406 = vmatpush1.bf16.msra.mxu0 0
    %407 = vmatprep.subr.bf16.mxu0 0
    %408 = vmatpush1.bf16.msra.mxu0 0
    %409 = vmatprep.subr.bf16.mxu0 0
    %410 = vmatpush1.bf16.msra.mxu0 0
    %411 = vmatprep.subr.bf16.mxu0 0
    %412 = vmatpush1.bf16.msra.mxu0 0
    %413 = vmatprep.subr.bf16.mxu0 0
    %414 = vmatpush1.bf16.msra.mxu0 0
    %415 = vmatprep.subr.bf16.mxu0 0
    %416 = vmatpush1.bf16.msra.mxu0 0
    %417 = vmatprep.subr.bf16.mxu0 0
    %418 = vmatpush1.bf16.msra.mxu0 0
    %419 = vmatprep.subr.bf16.mxu0 0
    %420 = vmatpush1.bf16.msra.mxu0 0
    %421 = vmatprep.mubr.bf16.mxu0 0
    %422 = vmatmul.mubr.bf16.gmra.mrb[0].mxu0 %v380
    %v423 = vpop.f32.mrb[0].mxu0
    %v424 = vadd.f32 %v307, %v423
    %v425 = vpop.f32.mrb[0].mxu0
    %v426 = vadd.f32 %v309, %v425
    %v427 = vpop.f32.mrb[0].mxu0
    %v428 = vpop.f32.mrb[0].mxu0
    %429 = vdwg.mxu0
    %v430 = vld [vmem:[#allocation9] sm:$0x3]
    %v432 = vlaneseq
    %v433 = vshrl.u32 %v432, 7
    %v434 = vsub.s32 0, %v433
    %v435 = vrot.slane %v430, %v434
    %v436 = vlaneseq
    %v437 = vshrl.u32 %v436, 7
    %v438 = vsub.s32 1, %v437
    %v439 = vrot.slane %v430, %v438
    %v442 = vadd.f32 %v424, %v435
    %v443 = vadd.f32 %v426, %v439
    %vm444 = vcmp.gt.f32.partialorder %v442, 0.0
    %vm445 = vcmp.gt.f32.partialorder %v443, 0.0
    %v446 = vmul.f32 %v442, 0.2
    %v447 = vmul.f32 %v443, 0.2
    %v448 = vsel %vm444, %v442, %v446
    %v449 = vsel %vm445, %v443, %v447
    %v450 = vpack.c.bf16 %v448, %v448
    %v451 = vpack.c.bf16 %v449, %v449
    %v452 = vld [vmem:[#allocation10] sm:$0xff]
    %v453 = vld [vmem:[#allocation10 + $0x8] sm:$0xff]
    %v454 = vld [vmem:[#allocation10 + $0x10] sm:$0xff]
    %v455 = vld [vmem:[#allocation10 + $0x18] sm:$0xff]
    %v456 = vld [vmem:[#allocation10 + $0x20] sm:$0xff]
    %v457 = vld [vmem:[#allocation10 + $0x28] sm:$0xff]
    %v458 = vld [vmem:[#allocation10 + $0x30] sm:$0xff]
    %v459 = vld [vmem:[#allocation10 + $0x38] sm:$0xff]
    %v460 = vld [vmem:[#allocation10 + $0x40] sm:$0xff]
    %v461 = vld [vmem:[#allocation10 + $0x48] sm:$0xff]
    %v462 = vld [vmem:[#allocation10 + $0x50] sm:$0xff]
    %v463 = vld [vmem:[#allocation10 + $0x58] sm:$0xff]
    %v464 = vld [vmem:[#allocation10 + $0x60] sm:$0xff]
    %v465 = vld [vmem:[#allocation10 + $0x68] sm:$0xff]
    %v466 = vld [vmem:[#allocation10 + $0x70] sm:$0xff]
    %v467 = vld [vmem:[#allocation10 + $0x78] sm:$0xff]
    %v468 = vld [vmem:[#allocation10 + $0x80] sm:$0xff]
    %v469 = vld [vmem:[#allocation10 + $0x88] sm:$0xff]
    %v470 = vld [vmem:[#allocation10 + $0x90] sm:$0xff]
    %v471 = vld [vmem:[#allocation10 + $0x98] sm:$0xff]
    %v472 = vld [vmem:[#allocation10 + $0xa0] sm:$0xff]
    %v473 = vld [vmem:[#allocation10 + $0xa8] sm:$0xff]
    %v474 = vld [vmem:[#allocation10 + $0xb0] sm:$0xff]
    %v475 = vld [vmem:[#allocation10 + $0xb8] sm:$0xff]
    %v476 = vld [vmem:[#allocation10 + $0xc0] sm:$0xff]
    %v477 = vld [vmem:[#allocation10 + $0xc8] sm:$0xff]
    %v478 = vld [vmem:[#allocation10 + $0xd0] sm:$0xff]
    %v479 = vld [vmem:[#allocation10 + $0xd8] sm:$0xff]
    %v480 = vld [vmem:[#allocation10 + $0xe0] sm:$0xff]
    %v481 = vld [vmem:[#allocation10 + $0xe8] sm:$0xff]
    %v482 = vld [vmem:[#allocation10 + $0xf0] sm:$0xff]
    %v483 = vld [vmem:[#allocation10 + $0xf8] sm:$0xff]
    %v484 = vld [vmem:[#allocation10 + $0x100] sm:$0xff]
    %v485 = vld [vmem:[#allocation10 + $0x108] sm:$0xff]
    %v486 = vld [vmem:[#allocation10 + $0x110] sm:$0xff]
    %v487 = vld [vmem:[#allocation10 + $0x118] sm:$0xff]
    %v488 = vld [vmem:[#allocation10 + $0x120] sm:$0xff]
    %v489 = vld [vmem:[#allocation10 + $0x128] sm:$0xff]
    %v490 = vld [vmem:[#allocation10 + $0x130] sm:$0xff]
    %v491 = vld [vmem:[#allocation10 + $0x138] sm:$0xff]
    %v492 = vld [vmem:[#allocation10 + $0x140] sm:$0xff]
    %v493 = vld [vmem:[#allocation10 + $0x148] sm:$0xff]
    %v494 = vld [vmem:[#allocation10 + $0x150] sm:$0xff]
    %v495 = vld [vmem:[#allocation10 + $0x158] sm:$0xff]
    %v496 = vld [vmem:[#allocation10 + $0x160] sm:$0xff]
    %v497 = vld [vmem:[#allocation10 + $0x168] sm:$0xff]
    %v498 = vld [vmem:[#allocation10 + $0x170] sm:$0xff]
    %v499 = vld [vmem:[#allocation10 + $0x178] sm:$0xff]
    %v500 = vld [vmem:[#allocation10 + $0x180] sm:$0xff]
    %v501 = vld [vmem:[#allocation10 + $0x188] sm:$0xff]
    %v502 = vld [vmem:[#allocation10 + $0x190] sm:$0xff]
    %v503 = vld [vmem:[#allocation10 + $0x198] sm:$0xff]
    %v504 = vld [vmem:[#allocation10 + $0x1a0] sm:$0xff]
    %v505 = vld [vmem:[#allocation10 + $0x1a8] sm:$0xff]
    %v506 = vld [vmem:[#allocation10 + $0x1b0] sm:$0xff]
    %v507 = vld [vmem:[#allocation10 + $0x1b8] sm:$0xff]
    %v508 = vld [vmem:[#allocation10 + $0x1c0] sm:$0xff]
    %v509 = vld [vmem:[#allocation10 + $0x1c8] sm:$0xff]
    %v510 = vld [vmem:[#allocation10 + $0x1d0] sm:$0xff]
    %v511 = vld [vmem:[#allocation10 + $0x1d8] sm:$0xff]
    %v512 = vld [vmem:[#allocation10 + $0x1e0] sm:$0xff]
    %v513 = vld [vmem:[#allocation10 + $0x1e8] sm:$0xff]
    %v514 = vld [vmem:[#allocation10 + $0x1f0] sm:$0xff]
    %v515 = vld [vmem:[#allocation10 + $0x1f8] sm:$0xff]
    %v516 = vld [vmem:[#allocation12] sm:$0xf]
    %v518 = vlaneseq
    %v519 = vshrl.u32 %v518, 7
    %v520 = vsub.s32 0, %v519
    %v521 = vrot.slane %v516, %v520
    %v522 = vlaneseq
    %v523 = vshrl.u32 %v522, 7
    %v524 = vsub.s32 1, %v523
    %v525 = vrot.slane %v516, %v524
    %v526 = vlaneseq
    %v527 = vshrl.u32 %v526, 7
    %v528 = vsub.s32 2, %v527
    %v529 = vrot.slane %v516, %v528
    %v530 = vlaneseq
    %v531 = vshrl.u32 %v530, 7
    %v532 = vsub.s32 3, %v531
    %v533 = vrot.slane %v516, %v532
    %v602 = vunpack.c.l.b16 %v452
    %v603 = vunpack.c.h.b16 %v452
    %v604 = vunpack.c.l.b16 %v453
    %v605 = vunpack.c.h.b16 %v453
    %v606 = vunpack.c.l.b16 %v454
    %v607 = vunpack.c.h.b16 %v454
    %v608 = vunpack.c.l.b16 %v455
    %v609 = vunpack.c.h.b16 %v455
    %v610 = vunpack.c.l.b16 %v456
    %v611 = vunpack.c.h.b16 %v456
    %v612 = vunpack.c.l.b16 %v457
    %v613 = vunpack.c.h.b16 %v457
    %v614 = vunpack.c.l.b16 %v458
    %v615 = vunpack.c.h.b16 %v458
    %v616 = vunpack.c.l.b16 %v459
    %v617 = vunpack.c.h.b16 %v459
    %v618 = vunpack.c.l.b16 %v460
    %v619 = vunpack.c.h.b16 %v460
    %v620 = vunpack.c.l.b16 %v461
    %v621 = vunpack.c.h.b16 %v461
    %v622 = vunpack.c.l.b16 %v462
    %v623 = vunpack.c.h.b16 %v462
    %v624 = vunpack.c.l.b16 %v463
    %v625 = vunpack.c.h.b16 %v463
    %v626 = vunpack.c.l.b16 %v464
    %v627 = vunpack.c.h.b16 %v464
    %v628 = vunpack.c.l.b16 %v465
    %v629 = vunpack.c.h.b16 %v465
    %v630 = vunpack.c.l.b16 %v466
    %v631 = vunpack.c.h.b16 %v466
    %v632 = vunpack.c.l.b16 %v467
    %v633 = vunpack.c.h.b16 %v467
    %v634 = vunpack.c.l.b16 %v468
    %v635 = vunpack.c.h.b16 %v468
    %v636 = vunpack.c.l.b16 %v469
    %v637 = vunpack.c.h.b16 %v469
    %v638 = vunpack.c.l.b16 %v470
    %v639 = vunpack.c.h.b16 %v470
    %v640 = vunpack.c.l.b16 %v471
    %v641 = vunpack.c.h.b16 %v471
    %v642 = vunpack.c.l.b16 %v472
    %v643 = vunpack.c.h.b16 %v472
    %v644 = vunpack.c.l.b16 %v473
    %v645 = vunpack.c.h.b16 %v473
    %v646 = vunpack.c.l.b16 %v474
    %v647 = vunpack.c.h.b16 %v474
    %v648 = vunpack.c.l.b16 %v475
    %v649 = vunpack.c.h.b16 %v475
    %v650 = vunpack.c.l.b16 %v476
    %v651 = vunpack.c.h.b16 %v476
    %v652 = vunpack.c.l.b16 %v477
    %v653 = vunpack.c.h.b16 %v477
    %v654 = vunpack.c.l.b16 %v478
    %v655 = vunpack.c.h.b16 %v478
    %v656 = vunpack.c.l.b16 %v479
    %v657 = vunpack.c.h.b16 %v479
    %v658 = vunpack.c.l.b16 %v480
    %v659 = vunpack.c.h.b16 %v480
    %v660 = vunpack.c.l.b16 %v481
    %v661 = vunpack.c.h.b16 %v481
    %v662 = vunpack.c.l.b16 %v482
    %v663 = vunpack.c.h.b16 %v482
    %v664 = vunpack.c.l.b16 %v483
    %v665 = vunpack.c.h.b16 %v483
    %v666 = vunpack.c.l.b16 %v484
    %v667 = vunpack.c.h.b16 %v484
    %v668 = vunpack.c.l.b16 %v485
    %v669 = vunpack.c.h.b16 %v485
    %v670 = vunpack.c.l.b16 %v486
    %v671 = vunpack.c.h.b16 %v486
    %v672 = vunpack.c.l.b16 %v487
    %v673 = vunpack.c.h.b16 %v487
    %v674 = vunpack.c.l.b16 %v488
    %v675 = vunpack.c.h.b16 %v488
    %v676 = vunpack.c.l.b16 %v489
    %v677 = vunpack.c.h.b16 %v489
    %v678 = vunpack.c.l.b16 %v490
    %v679 = vunpack.c.h.b16 %v490
    %v680 = vunpack.c.l.b16 %v491
    %v681 = vunpack.c.h.b16 %v491
    %v682 = vunpack.c.l.b16 %v492
    %v683 = vunpack.c.h.b16 %v492
    %v684 = vunpack.c.l.b16 %v493
    %v685 = vunpack.c.h.b16 %v493
    %v686 = vunpack.c.l.b16 %v494
    %v687 = vunpack.c.h.b16 %v494
    %v688 = vunpack.c.l.b16 %v495
    %v689 = vunpack.c.h.b16 %v495
    %v690 = vunpack.c.l.b16 %v496
    %v691 = vunpack.c.h.b16 %v496
    %v692 = vunpack.c.l.b16 %v497
    %v693 = vunpack.c.h.b16 %v497
    %v694 = vunpack.c.l.b16 %v498
    %v695 = vunpack.c.h.b16 %v498
    %v696 = vunpack.c.l.b16 %v499
    %v697 = vunpack.c.h.b16 %v499
    %v698 = vunpack.c.l.b16 %v500
    %v699 = vunpack.c.h.b16 %v500
    %v700 = vunpack.c.l.b16 %v501
    %v701 = vunpack.c.h.b16 %v501
    %v702 = vunpack.c.l.b16 %v502
    %v703 = vunpack.c.h.b16 %v502
    %v704 = vunpack.c.l.b16 %v503
    %v705 = vunpack.c.h.b16 %v503
    %v706 = vunpack.c.l.b16 %v504
    %v707 = vunpack.c.h.b16 %v504
    %v708 = vunpack.c.l.b16 %v505
    %v709 = vunpack.c.h.b16 %v505
    %v710 = vunpack.c.l.b16 %v506
    %v711 = vunpack.c.h.b16 %v506
    %v712 = vunpack.c.l.b16 %v507
    %v713 = vunpack.c.h.b16 %v507
    %v714 = vunpack.c.l.b16 %v508
    %v715 = vunpack.c.h.b16 %v508
    %v716 = vunpack.c.l.b16 %v509
    %v717 = vunpack.c.h.b16 %v509
    %v718 = vunpack.c.l.b16 %v510
    %v719 = vunpack.c.h.b16 %v510
    %v720 = vunpack.c.l.b16 %v511
    %v721 = vunpack.c.h.b16 %v511
    %v722 = vunpack.c.l.b16 %v512
    %v723 = vunpack.c.h.b16 %v512
    %v724 = vunpack.c.l.b16 %v513
    %v725 = vunpack.c.h.b16 %v513
    %v726 = vunpack.c.l.b16 %v514
    %v727 = vunpack.c.h.b16 %v514
    %v728 = vunpack.c.l.b16 %v515
    %v729 = vunpack.c.h.b16 %v515
    %v730 = vpack.c.b16 %v606, %v602
    %v731 = vpack.c.b16 %v607, %v603
    %v732 = vpack.c.b16 %v608, %v604
    %v733 = vpack.c.b16 %v609, %v605
    %v734 = vpack.c.b16 %v614, %v610
    %v735 = vpack.c.b16 %v615, %v611
    %v736 = vpack.c.b16 %v616, %v612
    %v737 = vpack.c.b16 %v617, %v613
    %v738 = vpack.c.b16 %v622, %v618
    %v739 = vpack.c.b16 %v623, %v619
    %v740 = vpack.c.b16 %v624, %v620
    %v741 = vpack.c.b16 %v625, %v621
    %v742 = vpack.c.b16 %v630, %v626
    %v743 = vpack.c.b16 %v631, %v627
    %v744 = vpack.c.b16 %v632, %v628
    %v745 = vpack.c.b16 %v633, %v629
    %v746 = vpack.c.b16 %v638, %v634
    %v747 = vpack.c.b16 %v639, %v635
    %v748 = vpack.c.b16 %v640, %v636
    %v749 = vpack.c.b16 %v641, %v637
    %v750 = vpack.c.b16 %v646, %v642
    %v751 = vpack.c.b16 %v647, %v643
    %v752 = vpack.c.b16 %v648, %v644
    %v753 = vpack.c.b16 %v649, %v645
    %v754 = vpack.c.b16 %v654, %v650
    %v755 = vpack.c.b16 %v655, %v651
    %v756 = vpack.c.b16 %v656, %v652
    %v757 = vpack.c.b16 %v657, %v653
    %v758 = vpack.c.b16 %v662, %v658
    %v759 = vpack.c.b16 %v663, %v659
    %v760 = vpack.c.b16 %v664, %v660
    %v761 = vpack.c.b16 %v665, %v661
    %v762 = vpack.c.b16 %v670, %v666
    %v763 = vpack.c.b16 %v671, %v667
    %v764 = vpack.c.b16 %v672, %v668
    %v765 = vpack.c.b16 %v673, %v669
    %v766 = vpack.c.b16 %v678, %v674
    %v767 = vpack.c.b16 %v679, %v675
    %v768 = vpack.c.b16 %v680, %v676
    %v769 = vpack.c.b16 %v681, %v677
    %v770 = vpack.c.b16 %v686, %v682
    %v771 = vpack.c.b16 %v687, %v683
    %v772 = vpack.c.b16 %v688, %v684
    %v773 = vpack.c.b16 %v689, %v685
    %v774 = vpack.c.b16 %v694, %v690
    %v775 = vpack.c.b16 %v695, %v691
    %v776 = vpack.c.b16 %v696, %v692
    %v777 = vpack.c.b16 %v697, %v693
    %v778 = vpack.c.b16 %v702, %v698
    %v779 = vpack.c.b16 %v703, %v699
    %v780 = vpack.c.b16 %v704, %v700
    %v781 = vpack.c.b16 %v705, %v701
    %v782 = vpack.c.b16 %v710, %v706
    %v783 = vpack.c.b16 %v711, %v707
    %v784 = vpack.c.b16 %v712, %v708
    %v785 = vpack.c.b16 %v713, %v709
    %v786 = vpack.c.b16 %v718, %v714
    %v787 = vpack.c.b16 %v719, %v715
    %v788 = vpack.c.b16 %v720, %v716
    %v789 = vpack.c.b16 %v721, %v717
    %v790 = vpack.c.b16 %v726, %v722
    %v791 = vpack.c.b16 %v727, %v723
    %v792 = vpack.c.b16 %v728, %v724
    %v793 = vpack.c.b16 %v729, %v725
    %858 = vmatprep.subr.bf16.mxu0 %v731
    %859 = vmatpush1.bf16.msra.mxu0 %v730
    %860 = vmatprep.subr.bf16.mxu0 %v735
    %861 = vmatpush1.bf16.msra.mxu0 %v734
    %862 = vmatprep.subr.bf16.mxu0 %v739
    %863 = vmatpush1.bf16.msra.mxu0 %v738
    %864 = vmatprep.subr.bf16.mxu0 %v743
    %865 = vmatpush1.bf16.msra.mxu0 %v742
    %866 = vmatprep.subr.bf16.mxu0 %v747
    %867 = vmatpush1.bf16.msra.mxu0 %v746
    %868 = vmatprep.subr.bf16.mxu0 %v751
    %869 = vmatpush1.bf16.msra.mxu0 %v750
    %870 = vmatprep.subr.bf16.mxu0 %v755
    %871 = vmatpush1.bf16.msra.mxu0 %v754
    %872 = vmatprep.subr.bf16.mxu0 %v759
    %873 = vmatpush1.bf16.msra.mxu0 %v758
    %874 = vmatprep.subr.bf16.mxu0 %v763
    %875 = vmatpush1.bf16.msra.mxu0 %v762
    %876 = vmatprep.subr.bf16.mxu0 %v767
    %877 = vmatpush1.bf16.msra.mxu0 %v766
    %878 = vmatprep.subr.bf16.mxu0 %v771
    %879 = vmatpush1.bf16.msra.mxu0 %v770
    %880 = vmatprep.subr.bf16.mxu0 %v775
    %881 = vmatpush1.bf16.msra.mxu0 %v774
    %882 = vmatprep.subr.bf16.mxu0 %v779
    %883 = vmatpush1.bf16.msra.mxu0 %v778
    %884 = vmatprep.subr.bf16.mxu0 %v783
    %885 = vmatpush1.bf16.msra.mxu0 %v782
    %886 = vmatprep.subr.bf16.mxu0 %v787
    %887 = vmatpush1.bf16.msra.mxu0 %v786
    %888 = vmatprep.subr.bf16.mxu0 %v791
    %889 = vmatpush1.bf16.msra.mxu0 %v790
    %890 = vmatprep.mubr.bf16.mxu0 %v451
    %891 = vmatmul.mubr.bf16.gmra.mrb[0].mxu0 %v450
    %v892 = vpop.f32.mrb[0].mxu0
    %v893 = vadd.f32 %v521, %v892
    %v894 = vpop.f32.mrb[0].mxu0
    %v895 = vadd.f32 %v525, %v894
    %v896 = vpop.f32.mrb[0].mxu0
    %v897 = vpop.f32.mrb[0].mxu0
    %898 = vdwg.mxu0
    %899 = vmatprep.subr.bf16.mxu0 %v733
    %900 = vmatpush1.bf16.msra.mxu0 %v732
    %901 = vmatprep.subr.bf16.mxu0 %v737
    %902 = vmatpush1.bf16.msra.mxu0 %v736
    %903 = vmatprep.subr.bf16.mxu0 %v741
    %904 = vmatpush1.bf16.msra.mxu0 %v740
    %905 = vmatprep.subr.bf16.mxu0 %v745
    %906 = vmatpush1.bf16.msra.mxu0 %v744
    %907 = vmatprep.subr.bf16.mxu0 %v749
    %908 = vmatpush1.bf16.msra.mxu0 %v748
    %909 = vmatprep.subr.bf16.mxu0 %v753
    %910 = vmatpush1.bf16.msra.mxu0 %v752
    %911 = vmatprep.subr.bf16.mxu0 %v757
    %912 = vmatpush1.bf16.msra.mxu0 %v756
    %913 = vmatprep.subr.bf16.mxu0 %v761
    %914 = vmatpush1.bf16.msra.mxu0 %v760
    %915 = vmatprep.subr.bf16.mxu0 %v765
    %916 = vmatpush1.bf16.msra.mxu0 %v764
    %917 = vmatprep.subr.bf16.mxu0 %v769
    %918 = vmatpush1.bf16.msra.mxu0 %v768
    %919 = vmatprep.subr.bf16.mxu0 %v773
    %920 = vmatpush1.bf16.msra.mxu0 %v772
    %921 = vmatprep.subr.bf16.mxu0 %v777
    %922 = vmatpush1.bf16.msra.mxu0 %v776
    %923 = vmatprep.subr.bf16.mxu0 %v781
    %924 = vmatpush1.bf16.msra.mxu0 %v780
    %925 = vmatprep.subr.bf16.mxu0 %v785
    %926 = vmatpush1.bf16.msra.mxu0 %v784
    %927 = vmatprep.subr.bf16.mxu0 %v789
    %928 = vmatpush1.bf16.msra.mxu0 %v788
    %929 = vmatprep.subr.bf16.mxu0 %v793
    %930 = vmatpush1.bf16.msra.mxu0 %v792
    %931 = vmatprep.mubr.bf16.mxu0 %v451
    %932 = vmatmul.mubr.bf16.gmra.mrb[0].mxu0 %v450
    %v933 = vpop.f32.mrb[0].mxu0
    %v934 = vadd.f32 %v529, %v933
    %v935 = vpop.f32.mrb[0].mxu0
    %v936 = vadd.f32 %v533, %v935
    %v937 = vpop.f32.mrb[0].mxu0
    %v938 = vpop.f32.mrb[0].mxu0
    %939 = vdwg.mxu0
    %v940 = vld [vmem:[#allocation13] sm:$0xf]
    %v941 = vld [vmem:[#allocation15] sm:$0xf]
    %v942 = vrot.slane %v893, 4
    %v943 = vadd.f32 %v893, %v942
    %v944 = vrot.slane %v943, 2
    %v945 = vadd.f32 %v943, %v944
    %v946 = vrot.slane %v945, 1
    %v947 = vadd.f32 %v945, %v946
    %v948 = vrot.slane %v895, 4
    %v949 = vadd.f32 %v895, %v948
    %v950 = vrot.slane %v949, 2
    %v951 = vadd.f32 %v949, %v950
    %v952 = vrot.slane %v951, 1
    %v953 = vadd.f32 %v951, %v952
    %v954 = vrot.slane %v934, 4
    %v955 = vadd.f32 %v934, %v954
    %v956 = vrot.slane %v955, 2
    %v957 = vadd.f32 %v955, %v956
    %v958 = vrot.slane %v957, 1
    %v959 = vadd.f32 %v957, %v958
    %v960 = vrot.slane %v936, 4
    %v961 = vadd.f32 %v936, %v960
    %v962 = vrot.slane %v961, 2
    %v963 = vadd.f32 %v961, %v962
    %v964 = vrot.slane %v963, 1
    %v965 = vadd.f32 %v963, %v964
    %v966 = vrcp.pop 8.0
    %v967 = vmul.f32 %v947, %v966
    %v968 = vmul.f32 %v953, %v966
    %v969 = vmul.f32 %v959, %v966
    %v970 = vmul.f32 %v965, %v966
    %v971 = vmul.f32 %v893, %v893
    %v972 = vmul.f32 %v895, %v895
    %v973 = vmul.f32 %v934, %v934
    %v974 = vmul.f32 %v936, %v936
    %v975 = vrot.slane %v971, 4
    %v976 = vadd.f32 %v971, %v975
    %v977 = vrot.slane %v976, 2
    %v978 = vadd.f32 %v976, %v977
    %v979 = vrot.slane %v978, 1
    %v980 = vadd.f32 %v978, %v979
    %v981 = vrot.slane %v972, 4
    %v982 = vadd.f32 %v972, %v981
    %v983 = vrot.slane %v982, 2
    %v984 = vadd.f32 %v982, %v983
    %v985 = vrot.slane %v984, 1
    %v986 = vadd.f32 %v984, %v985
    %v987 = vrot.slane %v973, 4
    %v988 = vadd.f32 %v973, %v987
    %v989 = vrot.slane %v988, 2
    %v990 = vadd.f32 %v988, %v989
    %v991 = vrot.slane %v990, 1
    %v992 = vadd.f32 %v990, %v991
    %v993 = vrot.slane %v974, 4
    %v994 = vadd.f32 %v974, %v993
    %v995 = vrot.slane %v994, 2
    %v996 = vadd.f32 %v994, %v995
    %v997 = vrot.slane %v996, 1
    %v998 = vadd.f32 %v996, %v997
    %v999 = vmul.f32 %v980, %v966
    %v1000 = vmul.f32 %v986, %v966
    %v1001 = vmul.f32 %v992, %v966
    %v1002 = vmul.f32 %v998, %v966
    %v1003 = vmul.f32 %v967, %v967
    %v1004 = vmul.f32 %v968, %v968
    %v1005 = vmul.f32 %v969, %v969
    %v1006 = vmul.f32 %v970, %v970
    %v1007 = vsub.f32 %v999, %v1003
    %v1008 = vsub.f32 %v1000, %v1004
    %v1009 = vsub.f32 %v1001, %v1005
    %v1010 = vsub.f32 %v1002, %v1006
    %v1011 = vsub.f32 %v893, %v967
    %v1012 = vsub.f32 %v895, %v968
    %v1013 = vsub.f32 %v934, %v969
    %v1014 = vsub.f32 %v936, %v970
    %v1015 = vadd.f32 %v1007, 1e-05
    %v1016 = vadd.f32 %v1008, 1e-05
    %v1017 = vadd.f32 %v1009, 1e-05
    %v1018 = vadd.f32 %v1010, 1e-05
    %v1019 = vrsqrt.pop %v1015
    %v1020 = vrsqrt.pop %v1016
    %v1021 = vrsqrt.pop %v1017
    %v1022 = vrsqrt.pop %v1018
    %v1023 = vmul.f32 %v1011, %v1019
    %v1024 = vmul.f32 %v1012, %v1020
    %v1025 = vmul.f32 %v1013, %v1021
    %v1026 = vmul.f32 %v1014, %v1022
    %v1028 = vlaneseq
    %v1029 = vshrl.u32 %v1028, 7
    %v1030 = vsub.s32 0, %v1029
    %v1031 = vrot.slane %v940, %v1030
    %v1032 = vlaneseq
    %v1033 = vshrl.u32 %v1032, 7
    %v1034 = vsub.s32 1, %v1033
    %v1035 = vrot.slane %v940, %v1034
    %v1036 = vlaneseq
    %v1037 = vshrl.u32 %v1036, 7
    %v1038 = vsub.s32 2, %v1037
    %v1039 = vrot.slane %v940, %v1038
    %v1040 = vlaneseq
    %v1041 = vshrl.u32 %v1040, 7
    %v1042 = vsub.s32 3, %v1041
    %v1043 = vrot.slane %v940, %v1042
    %v1048 = vmul.f32 %v1023, %v1031
    %v1049 = vmul.f32 %v1024, %v1035
    %v1050 = vmul.f32 %v1025, %v1039
    %v1051 = vmul.f32 %v1026, %v1043
    %v1053 = vlaneseq
    %v1054 = vshrl.u32 %v1053, 7
    %v1055 = vsub.s32 0, %v1054
    %v1056 = vrot.slane %v941, %v1055
    %v1057 = vlaneseq
    %v1058 = vshrl.u32 %v1057, 7
    %v1059 = vsub.s32 1, %v1058
    %v1060 = vrot.slane %v941, %v1059
    %v1061 = vlaneseq
    %v1062 = vshrl.u32 %v1061, 7
    %v1063 = vsub.s32 2, %v1062
    %v1064 = vrot.slane %v941, %v1063
    %v1065 = vlaneseq
    %v1066 = vshrl.u32 %v1065, 7
    %v1067 = vsub.s32 3, %v1066
    %v1068 = vrot.slane %v941, %v1067
    %v1073 = vadd.f32 %v1048, %v1056
    %v1074 = vadd.f32 %v1049, %v1060
    %v1075 = vadd.f32 %v1050, %v1064
    %v1076 = vadd.f32 %v1051, %v1068
    %vm1077 = vcmp.gt.f32.partialorder %v1073, 0.0
    %vm1078 = vcmp.gt.f32.partialorder %v1074, 0.0
    %vm1079 = vcmp.gt.f32.partialorder %v1075, 0.0
    %vm1080 = vcmp.gt.f32.partialorder %v1076, 0.0
    %v1081 = vmul.f32 %v1073, 0.2
    %v1082 = vmul.f32 %v1074, 0.2
    %v1083 = vmul.f32 %v1075, 0.2
    %v1084 = vmul.f32 %v1076, 0.2
    %v1085 = vsel %vm1077, %v1073, %v1081
    %v1086 = vsel %vm1078, %v1074, %v1082
    %v1087 = vsel %vm1079, %v1075, %v1083
    %v1088 = vsel %vm1080, %v1076, %v1084
    %v1089 = vpack.c.bf16 %v1085, %v1085
    %v1090 = vpack.c.bf16 %v1086, %v1086
    %v1091 = vpack.c.bf16 %v1087, %v1087
    %v1092 = vpack.c.bf16 %v1088, %v1088
    %v1093 = vld [vmem:[#allocation16] sm:$0xff]
    %v1094 = vld [vmem:[#allocation16 + $0x8] sm:$0xff]
    %v1095 = vld [vmem:[#allocation16 + $0x10] sm:$0xff]
    %v1096 = vld [vmem:[#allocation16 + $0x18] sm:$0xff]
    %v1097 = vld [vmem:[#allocation16 + $0x20] sm:$0xff]
    %v1098 = vld [vmem:[#allocation16 + $0x28] sm:$0xff]
    %v1099 = vld [vmem:[#allocation16 + $0x30] sm:$0xff]
    %v1100 = vld [vmem:[#allocation16 + $0x38] sm:$0xff]
    %v1101 = vld [vmem:[#allocation16 + $0x40] sm:$0xff]
    %v1102 = vld [vmem:[#allocation16 + $0x48] sm:$0xff]
    %v1103 = vld [vmem:[#allocation16 + $0x50] sm:$0xff]
    %v1104 = vld [vmem:[#allocation16 + $0x58] sm:$0xff]
    %v1105 = vld [vmem:[#allocation16 + $0x60] sm:$0xff]
    %v1106 = vld [vmem:[#allocation16 + $0x68] sm:$0xff]
    %v1107 = vld [vmem:[#allocation16 + $0x70] sm:$0xff]
    %v1108 = vld [vmem:[#allocation16 + $0x78] sm:$0xff]
    %v1109 = vld [vmem:[#allocation16 + $0x80] sm:$0xff]
    %v1110 = vld [vmem:[#allocation16 + $0x88] sm:$0xff]
    %v1111 = vld [vmem:[#allocation16 + $0x90] sm:$0xff]
    %v1112 = vld [vmem:[#allocation16 + $0x98] sm:$0xff]
    %v1113 = vld [vmem:[#allocation16 + $0xa0] sm:$0xff]
    %v1114 = vld [vmem:[#allocation16 + $0xa8] sm:$0xff]
    %v1115 = vld [vmem:[#allocation16 + $0xb0] sm:$0xff]
    %v1116 = vld [vmem:[#allocation16 + $0xb8] sm:$0xff]
    %v1117 = vld [vmem:[#allocation16 + $0xc0] sm:$0xff]
    %v1118 = vld [vmem:[#allocation16 + $0xc8] sm:$0xff]
    %v1119 = vld [vmem:[#allocation16 + $0xd0] sm:$0xff]
    %v1120 = vld [vmem:[#allocation16 + $0xd8] sm:$0xff]
    %v1121 = vld [vmem:[#allocation16 + $0xe0] sm:$0xff]
    %v1122 = vld [vmem:[#allocation16 + $0xe8] sm:$0xff]
    %v1123 = vld [vmem:[#allocation16 + $0xf0] sm:$0xff]
    %v1124 = vld [vmem:[#allocation16 + $0xf8] sm:$0xff]
    %v1125 = vld [vmem:[#allocation16 + $0x100] sm:$0xff]
    %v1126 = vld [vmem:[#allocation16 + $0x108] sm:$0xff]
    %v1127 = vld [vmem:[#allocation16 + $0x110] sm:$0xff]
    %v1128 = vld [vmem:[#allocation16 + $0x118] sm:$0xff]
    %v1129 = vld [vmem:[#allocation16 + $0x120] sm:$0xff]
    %v1130 = vld [vmem:[#allocation16 + $0x128] sm:$0xff]
    %v1131 = vld [vmem:[#allocation16 + $0x130] sm:$0xff]
    %v1132 = vld [vmem:[#allocation16 + $0x138] sm:$0xff]
    %v1133 = vld [vmem:[#allocation16 + $0x140] sm:$0xff]
    %v1134 = vld [vmem:[#allocation16 + $0x148] sm:$0xff]
    %v1135 = vld [vmem:[#allocation16 + $0x150] sm:$0xff]
    %v1136 = vld [vmem:[#allocation16 + $0x158] sm:$0xff]
    %v1137 = vld [vmem:[#allocation16 + $0x160] sm:$0xff]
    %v1138 = vld [vmem:[#allocation16 + $0x168] sm:$0xff]
    %v1139 = vld [vmem:[#allocation16 + $0x170] sm:$0xff]
    %v1140 = vld [vmem:[#allocation16 + $0x178] sm:$0xff]
    %v1141 = vld [vmem:[#allocation16 + $0x180] sm:$0xff]
    %v1142 = vld [vmem:[#allocation16 + $0x188] sm:$0xff]
    %v1143 = vld [vmem:[#allocation16 + $0x190] sm:$0xff]
    %v1144 = vld [vmem:[#allocation16 + $0x198] sm:$0xff]
    %v1145 = vld [vmem:[#allocation16 + $0x1a0] sm:$0xff]
    %v1146 = vld [vmem:[#allocation16 + $0x1a8] sm:$0xff]
    %v1147 = vld [vmem:[#allocation16 + $0x1b0] sm:$0xff]
    %v1148 = vld [vmem:[#allocation16 + $0x1b8] sm:$0xff]
    %v1149 = vld [vmem:[#allocation16 + $0x1c0] sm:$0xff]
    %v1150 = vld [vmem:[#allocation16 + $0x1c8] sm:$0xff]
    %v1151 = vld [vmem:[#allocation16 + $0x1d0] sm:$0xff]
    %v1152 = vld [vmem:[#allocation16 + $0x1d8] sm:$0xff]
    %v1153 = vld [vmem:[#allocation16 + $0x1e0] sm:$0xff]
    %v1154 = vld [vmem:[#allocation16 + $0x1e8] sm:$0xff]
    %v1155 = vld [vmem:[#allocation16 + $0x1f0] sm:$0xff]
    %v1156 = vld [vmem:[#allocation16 + $0x1f8] sm:$0xff]
    %v1157 = vld [vmem:[#allocation16 + $0x200] sm:$0xff]
    %v1158 = vld [vmem:[#allocation16 + $0x208] sm:$0xff]
    %v1159 = vld [vmem:[#allocation16 + $0x210] sm:$0xff]
    %v1160 = vld [vmem:[#allocation16 + $0x218] sm:$0xff]
    %v1161 = vld [vmem:[#allocation16 + $0x220] sm:$0xff]
    %v1162 = vld [vmem:[#allocation16 + $0x228] sm:$0xff]
    %v1163 = vld [vmem:[#allocation16 + $0x230] sm:$0xff]
    %v1164 = vld [vmem:[#allocation16 + $0x238] sm:$0xff]
    %v1165 = vld [vmem:[#allocation16 + $0x240] sm:$0xff]
    %v1166 = vld [vmem:[#allocation16 + $0x248] sm:$0xff]
    %v1167 = vld [vmem:[#allocation16 + $0x250] sm:$0xff]
    %v1168 = vld [vmem:[#allocation16 + $0x258] sm:$0xff]
    %v1169 = vld [vmem:[#allocation16 + $0x260] sm:$0xff]
    %v1170 = vld [vmem:[#allocation16 + $0x268] sm:$0xff]
    %v1171 = vld [vmem:[#allocation16 + $0x270] sm:$0xff]
    %v1172 = vld [vmem:[#allocation16 + $0x278] sm:$0xff]
    %v1173 = vld [vmem:[#allocation16 + $0x280] sm:$0xff]
    %v1174 = vld [vmem:[#allocation16 + $0x288] sm:$0xff]
    %v1175 = vld [vmem:[#allocation16 + $0x290] sm:$0xff]
    %v1176 = vld [vmem:[#allocation16 + $0x298] sm:$0xff]
    %v1177 = vld [vmem:[#allocation16 + $0x2a0] sm:$0xff]
    %v1178 = vld [vmem:[#allocation16 + $0x2a8] sm:$0xff]
    %v1179 = vld [vmem:[#allocation16 + $0x2b0] sm:$0xff]
    %v1180 = vld [vmem:[#allocation16 + $0x2b8] sm:$0xff]
    %v1181 = vld [vmem:[#allocation16 + $0x2c0] sm:$0xff]
    %v1182 = vld [vmem:[#allocation16 + $0x2c8] sm:$0xff]
    %v1183 = vld [vmem:[#allocation16 + $0x2d0] sm:$0xff]
    %v1184 = vld [vmem:[#allocation16 + $0x2d8] sm:$0xff]
    %v1185 = vld [vmem:[#allocation16 + $0x2e0] sm:$0xff]
    %v1186 = vld [vmem:[#allocation16 + $0x2e8] sm:$0xff]
    %v1187 = vld [vmem:[#allocation16 + $0x2f0] sm:$0xff]
    %v1188 = vld [vmem:[#allocation16 + $0x2f8] sm:$0xff]
    %v1189 = vld [vmem:[#allocation16 + $0x300] sm:$0xff]
    %v1190 = vld [vmem:[#allocation16 + $0x308] sm:$0xff]
    %v1191 = vld [vmem:[#allocation16 + $0x310] sm:$0xff]
    %v1192 = vld [vmem:[#allocation16 + $0x318] sm:$0xff]
    %v1193 = vld [vmem:[#allocation16 + $0x320] sm:$0xff]
    %v1194 = vld [vmem:[#allocation16 + $0x328] sm:$0xff]
    %v1195 = vld [vmem:[#allocation16 + $0x330] sm:$0xff]
    %v1196 = vld [vmem:[#allocation16 + $0x338] sm:$0xff]
    %v1197 = vld [vmem:[#allocation16 + $0x340] sm:$0xff]
    %v1198 = vld [vmem:[#allocation16 + $0x348] sm:$0xff]
    %v1199 = vld [vmem:[#allocation16 + $0x350] sm:$0xff]
    %v1200 = vld [vmem:[#allocation16 + $0x358] sm:$0xff]
    %v1201 = vld [vmem:[#allocation16 + $0x360] sm:$0xff]
    %v1202 = vld [vmem:[#allocation16 + $0x368] sm:$0xff]
    %v1203 = vld [vmem:[#allocation16 + $0x370] sm:$0xff]
    %v1204 = vld [vmem:[#allocation16 + $0x378] sm:$0xff]
    %v1205 = vld [vmem:[#allocation16 + $0x380] sm:$0xff]
    %v1206 = vld [vmem:[#allocation16 + $0x388] sm:$0xff]
    %v1207 = vld [vmem:[#allocation16 + $0x390] sm:$0xff]
    %v1208 = vld [vmem:[#allocation16 + $0x398] sm:$0xff]
    %v1209 = vld [vmem:[#allocation16 + $0x3a0] sm:$0xff]
    %v1210 = vld [vmem:[#allocation16 + $0x3a8] sm:$0xff]
    %v1211 = vld [vmem:[#allocation16 + $0x3b0] sm:$0xff]
    %v1212 = vld [vmem:[#allocation16 + $0x3b8] sm:$0xff]
    %v1213 = vld [vmem:[#allocation16 + $0x3c0] sm:$0xff]
    %v1214 = vld [vmem:[#allocation16 + $0x3c8] sm:$0xff]
    %v1215 = vld [vmem:[#allocation16 + $0x3d0] sm:$0xff]
    %v1216 = vld [vmem:[#allocation16 + $0x3d8] sm:$0xff]
    %v1217 = vld [vmem:[#allocation16 + $0x3e0] sm:$0xff]
    %v1218 = vld [vmem:[#allocation16 + $0x3e8] sm:$0xff]
    %v1219 = vld [vmem:[#allocation16 + $0x3f0] sm:$0xff]
    %v1220 = vld [vmem:[#allocation16 + $0x3f8] sm:$0xff]
    %v1221 = vld [vmem:[#allocation16 + $0x400] sm:$0xff]
    %v1222 = vld [vmem:[#allocation16 + $0x408] sm:$0xff]
    %v1223 = vld [vmem:[#allocation16 + $0x410] sm:$0xff]
    %v1224 = vld [vmem:[#allocation16 + $0x418] sm:$0xff]
    %v1225 = vld [vmem:[#allocation16 + $0x420] sm:$0xff]
    %v1226 = vld [vmem:[#allocation16 + $0x428] sm:$0xff]
    %v1227 = vld [vmem:[#allocation16 + $0x430] sm:$0xff]
    %v1228 = vld [vmem:[#allocation16 + $0x438] sm:$0xff]
    %v1229 = vld [vmem:[#allocation16 + $0x440] sm:$0xff]
    %v1230 = vld [vmem:[#allocation16 + $0x448] sm:$0xff]
    %v1231 = vld [vmem:[#allocation16 + $0x450] sm:$0xff]
    %v1232 = vld [vmem:[#allocation16 + $0x458] sm:$0xff]
    %v1233 = vld [vmem:[#allocation16 + $0x460] sm:$0xff]
    %v1234 = vld [vmem:[#allocation16 + $0x468] sm:$0xff]
    %v1235 = vld [vmem:[#allocation16 + $0x470] sm:$0xff]
    %v1236 = vld [vmem:[#allocation16 + $0x478] sm:$0xff]
    %v1237 = vld [vmem:[#allocation16 + $0x480] sm:$0xff]
    %v1238 = vld [vmem:[#allocation16 + $0x488] sm:$0xff]
    %v1239 = vld [vmem:[#allocation16 + $0x490] sm:$0xff]
    %v1240 = vld [vmem:[#allocation16 + $0x498] sm:$0xff]
    %v1241 = vld [vmem:[#allocation16 + $0x4a0] sm:$0xff]
    %v1242 = vld [vmem:[#allocation16 + $0x4a8] sm:$0xff]
    %v1243 = vld [vmem:[#allocation16 + $0x4b0] sm:$0xff]
    %v1244 = vld [vmem:[#allocation16 + $0x4b8] sm:$0xff]
    %v1245 = vld [vmem:[#allocation16 + $0x4c0] sm:$0xff]
    %v1246 = vld [vmem:[#allocation16 + $0x4c8] sm:$0xff]
    %v1247 = vld [vmem:[#allocation16 + $0x4d0] sm:$0xff]
    %v1248 = vld [vmem:[#allocation16 + $0x4d8] sm:$0xff]
    %v1249 = vld [vmem:[#allocation16 + $0x4e0] sm:$0xff]
    %v1250 = vld [vmem:[#allocation16 + $0x4e8] sm:$0xff]
    %v1251 = vld [vmem:[#allocation16 + $0x4f0] sm:$0xff]
    %v1252 = vld [vmem:[#allocation16 + $0x4f8] sm:$0xff]
    %v1253 = vld [vmem:[#allocation16 + $0x500] sm:$0xff]
    %v1254 = vld [vmem:[#allocation16 + $0x508] sm:$0xff]
    %v1255 = vld [vmem:[#allocation16 + $0x510] sm:$0xff]
    %v1256 = vld [vmem:[#allocation16 + $0x518] sm:$0xff]
    %v1257 = vld [vmem:[#allocation16 + $0x520] sm:$0xff]
    %v1258 = vld [vmem:[#allocation16 + $0x528] sm:$0xff]
    %v1259 = vld [vmem:[#allocation16 + $0x530] sm:$0xff]
    %v1260 = vld [vmem:[#allocation16 + $0x538] sm:$0xff]
    %v1261 = vld [vmem:[#allocation16 + $0x540] sm:$0xff]
    %v1262 = vld [vmem:[#allocation16 + $0x548] sm:$0xff]
    %v1263 = vld [vmem:[#allocation16 + $0x550] sm:$0xff]
    %v1264 = vld [vmem:[#allocation16 + $0x558] sm:$0xff]
    %v1265 = vld [vmem:[#allocation16 + $0x560] sm:$0xff]
    %v1266 = vld [vmem:[#allocation16 + $0x568] sm:$0xff]
    %v1267 = vld [vmem:[#allocation16 + $0x570] sm:$0xff]
    %v1268 = vld [vmem:[#allocation16 + $0x578] sm:$0xff]
    %v1269 = vld [vmem:[#allocation16 + $0x580] sm:$0xff]
    %v1270 = vld [vmem:[#allocation16 + $0x588] sm:$0xff]
    %v1271 = vld [vmem:[#allocation16 + $0x590] sm:$0xff]
    %v1272 = vld [vmem:[#allocation16 + $0x598] sm:$0xff]
    %v1273 = vld [vmem:[#allocation16 + $0x5a0] sm:$0xff]
    %v1274 = vld [vmem:[#allocation16 + $0x5a8] sm:$0xff]
    %v1275 = vld [vmem:[#allocation16 + $0x5b0] sm:$0xff]
    %v1276 = vld [vmem:[#allocation16 + $0x5b8] sm:$0xff]
    %v1277 = vld [vmem:[#allocation16 + $0x5c0] sm:$0xff]
    %v1278 = vld [vmem:[#allocation16 + $0x5c8] sm:$0xff]
    %v1279 = vld [vmem:[#allocation16 + $0x5d0] sm:$0xff]
    %v1280 = vld [vmem:[#allocation16 + $0x5d8] sm:$0xff]
    %v1281 = vld [vmem:[#allocation16 + $0x5e0] sm:$0xff]
    %v1282 = vld [vmem:[#allocation16 + $0x5e8] sm:$0xff]
    %v1283 = vld [vmem:[#allocation16 + $0x5f0] sm:$0xff]
    %v1284 = vld [vmem:[#allocation16 + $0x5f8] sm:$0xff]
    %v1285 = vld [vmem:[#allocation16 + $0x600] sm:$0xff]
    %v1286 = vld [vmem:[#allocation16 + $0x608] sm:$0xff]
    %v1287 = vld [vmem:[#allocation16 + $0x610] sm:$0xff]
    %v1288 = vld [vmem:[#allocation16 + $0x618] sm:$0xff]
    %v1289 = vld [vmem:[#allocation16 + $0x620] sm:$0xff]
    %v1290 = vld [vmem:[#allocation16 + $0x628] sm:$0xff]
    %v1291 = vld [vmem:[#allocation16 + $0x630] sm:$0xff]
    %v1292 = vld [vmem:[#allocation16 + $0x638] sm:$0xff]
    %v1293 = vld [vmem:[#allocation16 + $0x640] sm:$0xff]
    %v1294 = vld [vmem:[#allocation16 + $0x648] sm:$0xff]
    %v1295 = vld [vmem:[#allocation16 + $0x650] sm:$0xff]
    %v1296 = vld [vmem:[#allocation16 + $0x658] sm:$0xff]
    %v1297 = vld [vmem:[#allocation16 + $0x660] sm:$0xff]
    %v1298 = vld [vmem:[#allocation16 + $0x668] sm:$0xff]
    %v1299 = vld [vmem:[#allocation16 + $0x670] sm:$0xff]
    %v1300 = vld [vmem:[#allocation16 + $0x678] sm:$0xff]
    %v1301 = vld [vmem:[#allocation16 + $0x680] sm:$0xff]
    %v1302 = vld [vmem:[#allocation16 + $0x688] sm:$0xff]
    %v1303 = vld [vmem:[#allocation16 + $0x690] sm:$0xff]
    %v1304 = vld [vmem:[#allocation16 + $0x698] sm:$0xff]
    %v1305 = vld [vmem:[#allocation16 + $0x6a0] sm:$0xff]
    %v1306 = vld [vmem:[#allocation16 + $0x6a8] sm:$0xff]
    %v1307 = vld [vmem:[#allocation16 + $0x6b0] sm:$0xff]
    %v1308 = vld [vmem:[#allocation16 + $0x6b8] sm:$0xff]
    %v1309 = vld [vmem:[#allocation16 + $0x6c0] sm:$0xff]
    %v1310 = vld [vmem:[#allocation16 + $0x6c8] sm:$0xff]
    %v1311 = vld [vmem:[#allocation16 + $0x6d0] sm:$0xff]
    %v1312 = vld [vmem:[#allocation16 + $0x6d8] sm:$0xff]
    %v1313 = vld [vmem:[#allocation16 + $0x6e0] sm:$0xff]
    %v1314 = vld [vmem:[#allocation16 + $0x6e8] sm:$0xff]
    %v1315 = vld [vmem:[#allocation16 + $0x6f0] sm:$0xff]
    %v1316 = vld [vmem:[#allocation16 + $0x6f8] sm:$0xff]
    %v1317 = vld [vmem:[#allocation16 + $0x700] sm:$0xff]
    %v1318 = vld [vmem:[#allocation16 + $0x708] sm:$0xff]
    %v1319 = vld [vmem:[#allocation16 + $0x710] sm:$0xff]
    %v1320 = vld [vmem:[#allocation16 + $0x718] sm:$0xff]
    %v1321 = vld [vmem:[#allocation16 + $0x720] sm:$0xff]
    %v1322 = vld [vmem:[#allocation16 + $0x728] sm:$0xff]
    %v1323 = vld [vmem:[#allocation16 + $0x730] sm:$0xff]
    %v1324 = vld [vmem:[#allocation16 + $0x738] sm:$0xff]
    %v1325 = vld [vmem:[#allocation16 + $0x740] sm:$0xff]
    %v1326 = vld [vmem:[#allocation16 + $0x748] sm:$0xff]
    %v1327 = vld [vmem:[#allocation16 + $0x750] sm:$0xff]
    %v1328 = vld [vmem:[#allocation16 + $0x758] sm:$0xff]
    %v1329 = vld [vmem:[#allocation16 + $0x760] sm:$0xff]
    %v1330 = vld [vmem:[#allocation16 + $0x768] sm:$0xff]
    %v1331 = vld [vmem:[#allocation16 + $0x770] sm:$0xff]
    %v1332 = vld [vmem:[#allocation16 + $0x778] sm:$0xff]
    %v1333 = vld [vmem:[#allocation16 + $0x780] sm:$0xff]
    %v1334 = vld [vmem:[#allocation16 + $0x788] sm:$0xff]
    %v1335 = vld [vmem:[#allocation16 + $0x790] sm:$0xff]
    %v1336 = vld [vmem:[#allocation16 + $0x798] sm:$0xff]
    %v1337 = vld [vmem:[#allocation16 + $0x7a0] sm:$0xff]
    %v1338 = vld [vmem:[#allocation16 + $0x7a8] sm:$0xff]
    %v1339 = vld [vmem:[#allocation16 + $0x7b0] sm:$0xff]
    %v1340 = vld [vmem:[#allocation16 + $0x7b8] sm:$0xff]
    %v1341 = vld [vmem:[#allocation16 + $0x7c0] sm:$0xff]
    %v1342 = vld [vmem:[#allocation16 + $0x7c8] sm:$0xff]
    %v1343 = vld [vmem:[#allocation16 + $0x7d0] sm:$0xff]
    %v1344 = vld [vmem:[#allocation16 + $0x7d8] sm:$0xff]
    %v1345 = vld [vmem:[#allocation16 + $0x7e0] sm:$0xff]
    %v1346 = vld [vmem:[#allocation16 + $0x7e8] sm:$0xff]
    %v1347 = vld [vmem:[#allocation16 + $0x7f0] sm:$0xff]
    %v1348 = vld [vmem:[#allocation16 + $0x7f8] sm:$0xff]
    %v1349 = vld [vmem:[#allocation18] sm:$0xff]
    %v1351 = vlaneseq
    %v1352 = vshrl.u32 %v1351, 7
    %v1353 = vsub.s32 0, %v1352
    %v1354 = vrot.slane %v1349, %v1353
    %v1355 = vlaneseq
    %v1356 = vshrl.u32 %v1355, 7
    %v1357 = vsub.s32 1, %v1356
    %v1358 = vrot.slane %v1349, %v1357
    %v1359 = vlaneseq
    %v1360 = vshrl.u32 %v1359, 7
    %v1361 = vsub.s32 2, %v1360
    %v1362 = vrot.slane %v1349, %v1361
    %v1363 = vlaneseq
    %v1364 = vshrl.u32 %v1363, 7
    %v1365 = vsub.s32 3, %v1364
    %v1366 = vrot.slane %v1349, %v1365
    %v1367 = vlaneseq
    %v1368 = vshrl.u32 %v1367, 7
    %v1369 = vsub.s32 4, %v1368
    %v1370 = vrot.slane %v1349, %v1369
    %v1371 = vlaneseq
    %v1372 = vshrl.u32 %v1371, 7
    %v1373 = vsub.s32 5, %v1372
    %v1374 = vrot.slane %v1349, %v1373
    %v1375 = vlaneseq
    %v1376 = vshrl.u32 %v1375, 7
    %v1377 = vsub.s32 6, %v1376
    %v1378 = vrot.slane %v1349, %v1377
    %v1379 = vlaneseq
    %v1380 = vshrl.u32 %v1379, 7
    %v1381 = vsub.s32 7, %v1380
    %v1382 = vrot.slane %v1349, %v1381
    %v1647 = vunpack.c.l.b16 %v1093
    %v1648 = vunpack.c.h.b16 %v1093
    %v1649 = vunpack.c.l.b16 %v1094
    %v1650 = vunpack.c.h.b16 %v1094
    %v1651 = vunpack.c.l.b16 %v1095
    %v1652 = vunpack.c.h.b16 %v1095
    %v1653 = vunpack.c.l.b16 %v1096
    %v1654 = vunpack.c.h.b16 %v1096
    %v1655 = vunpack.c.l.b16 %v1097
    %v1656 = vunpack.c.h.b16 %v1097
    %v1657 = vunpack.c.l.b16 %v1098
    %v1658 = vunpack.c.h.b16 %v1098
    %v1659 = vunpack.c.l.b16 %v1099
    %v1660 = vunpack.c.h.b16 %v1099
    %v1661 = vunpack.c.l.b16 %v1100
    %v1662 = vunpack.c.h.b16 %v1100
    %v1663 = vunpack.c.l.b16 %v1101
    %v1664 = vunpack.c.h.b16 %v1101
    %v1665 = vunpack.c.l.b16 %v1102
    %v1666 = vunpack.c.h.b16 %v1102
    %v1667 = vunpack.c.l.b16 %v1103
    %v1668 = vunpack.c.h.b16 %v1103
    %v1669 = vunpack.c.l.b16 %v1104
    %v1670 = vunpack.c.h.b16 %v1104
    %v1671 = vunpack.c.l.b16 %v1105
    %v1672 = vunpack.c.h.b16 %v1105
    %v1673 = vunpack.c.l.b16 %v1106
    %v1674 = vunpack.c.h.b16 %v1106
    %v1675 = vunpack.c.l.b16 %v1107
    %v1676 = vunpack.c.h.b16 %v1107
    %v1677 = vunpack.c.l.b16 %v1108
    %v1678 = vunpack.c.h.b16 %v1108
    %v1679 = vunpack.c.l.b16 %v1109
    %v1680 = vunpack.c.h.b16 %v1109
    %v1681 = vunpack.c.l.b16 %v1110
    %v1682 = vunpack.c.h.b16 %v1110
    %v1683 = vunpack.c.l.b16 %v1111
    %v1684 = vunpack.c.h.b16 %v1111
    %v1685 = vunpack.c.l.b16 %v1112
    %v1686 = vunpack.c.h.b16 %v1112
    %v1687 = vunpack.c.l.b16 %v1113
    %v1688 = vunpack.c.h.b16 %v1113
    %v1689 = vunpack.c.l.b16 %v1114
    %v1690 = vunpack.c.h.b16 %v1114
    %v1691 = vunpack.c.l.b16 %v1115
    %v1692 = vunpack.c.h.b16 %v1115
    %v1693 = vunpack.c.l.b16 %v1116
    %v1694 = vunpack.c.h.b16 %v1116
    %v1695 = vunpack.c.l.b16 %v1117
    %v1696 = vunpack.c.h.b16 %v1117
    %v1697 = vunpack.c.l.b16 %v1118
    %v1698 = vunpack.c.h.b16 %v1118
    %v1699 = vunpack.c.l.b16 %v1119
    %v1700 = vunpack.c.h.b16 %v1119
    %v1701 = vunpack.c.l.b16 %v1120
    %v1702 = vunpack.c.h.b16 %v1120
    %v1703 = vunpack.c.l.b16 %v1121
    %v1704 = vunpack.c.h.b16 %v1121
    %v1705 = vunpack.c.l.b16 %v1122
    %v1706 = vunpack.c.h.b16 %v1122
    %v1707 = vunpack.c.l.b16 %v1123
    %v1708 = vunpack.c.h.b16 %v1123
    %v1709 = vunpack.c.l.b16 %v1124
    %v1710 = vunpack.c.h.b16 %v1124
    %v1711 = vunpack.c.l.b16 %v1125
    %v1712 = vunpack.c.h.b16 %v1125
    %v1713 = vunpack.c.l.b16 %v1126
    %v1714 = vunpack.c.h.b16 %v1126
    %v1715 = vunpack.c.l.b16 %v1127
    %v1716 = vunpack.c.h.b16 %v1127
    %v1717 = vunpack.c.l.b16 %v1128
    %v1718 = vunpack.c.h.b16 %v1128
    %v1719 = vunpack.c.l.b16 %v1129
    %v1720 = vunpack.c.h.b16 %v1129
    %v1721 = vunpack.c.l.b16 %v1130
    %v1722 = vunpack.c.h.b16 %v1130
    %v1723 = vunpack.c.l.b16 %v1131
    %v1724 = vunpack.c.h.b16 %v1131
    %v1725 = vunpack.c.l.b16 %v1132
    %v1726 = vunpack.c.h.b16 %v1132
    %v1727 = vunpack.c.l.b16 %v1133
    %v1728 = vunpack.c.h.b16 %v1133
    %v1729 = vunpack.c.l.b16 %v1134
    %v1730 = vunpack.c.h.b16 %v1134
    %v1731 = vunpack.c.l.b16 %v1135
    %v1732 = vunpack.c.h.b16 %v1135
    %v1733 = vunpack.c.l.b16 %v1136
    %v1734 = vunpack.c.h.b16 %v1136
    %v1735 = vunpack.c.l.b16 %v1137
    %v1736 = vunpack.c.h.b16 %v1137
    %v1737 = vunpack.c.l.b16 %v1138
    %v1738 = vunpack.c.h.b16 %v1138
    %v1739 = vunpack.c.l.b16 %v1139
    %v1740 = vunpack.c.h.b16 %v1139
    %v1741 = vunpack.c.l.b16 %v1140
    %v1742 = vunpack.c.h.b16 %v1140
    %v1743 = vunpack.c.l.b16 %v1141
    %v1744 = vunpack.c.h.b16 %v1141
    %v1745 = vunpack.c.l.b16 %v1142
    %v1746 = vunpack.c.h.b16 %v1142
    %v1747 = vunpack.c.l.b16 %v1143
    %v1748 = vunpack.c.h.b16 %v1143
    %v1749 = vunpack.c.l.b16 %v1144
    %v1750 = vunpack.c.h.b16 %v1144
    %v1751 = vunpack.c.l.b16 %v1145
    %v1752 = vunpack.c.h.b16 %v1145
    %v1753 = vunpack.c.l.b16 %v1146
    %v1754 = vunpack.c.h.b16 %v1146
    %v1755 = vunpack.c.l.b16 %v1147
    %v1756 = vunpack.c.h.b16 %v1147
    %v1757 = vunpack.c.l.b16 %v1148
    %v1758 = vunpack.c.h.b16 %v1148
    %v1759 = vunpack.c.l.b16 %v1149
    %v1760 = vunpack.c.h.b16 %v1149
    %v1761 = vunpack.c.l.b16 %v1150
    %v1762 = vunpack.c.h.b16 %v1150
    %v1763 = vunpack.c.l.b16 %v1151
    %v1764 = vunpack.c.h.b16 %v1151
    %v1765 = vunpack.c.l.b16 %v1152
    %v1766 = vunpack.c.h.b16 %v1152
    %v1767 = vunpack.c.l.b16 %v1153
    %v1768 = vunpack.c.h.b16 %v1153
    %v1769 = vunpack.c.l.b16 %v1154
    %v1770 = vunpack.c.h.b16 %v1154
    %v1771 = vunpack.c.l.b16 %v1155
    %v1772 = vunpack.c.h.b16 %v1155
    %v1773 = vunpack.c.l.b16 %v1156
    %v1774 = vunpack.c.h.b16 %v1156
    %v1775 = vunpack.c.l.b16 %v1157
    %v1776 = vunpack.c.h.b16 %v1157
    %v1777 = vunpack.c.l.b16 %v1158
    %v1778 = vunpack.c.h.b16 %v1158
    %v1779 = vunpack.c.l.b16 %v1159
    %v1780 = vunpack.c.h.b16 %v1159
    %v1781 = vunpack.c.l.b16 %v1160
    %v1782 = vunpack.c.h.b16 %v1160
    %v1783 = vunpack.c.l.b16 %v1161
    %v1784 = vunpack.c.h.b16 %v1161
    %v1785 = vunpack.c.l.b16 %v1162
    %v1786 = vunpack.c.h.b16 %v1162
    %v1787 = vunpack.c.l.b16 %v1163
    %v1788 = vunpack.c.h.b16 %v1163
    %v1789 = vunpack.c.l.b16 %v1164
    %v1790 = vunpack.c.h.b16 %v1164
    %v1791 = vunpack.c.l.b16 %v1165
    %v1792 = vunpack.c.h.b16 %v1165
    %v1793 = vunpack.c.l.b16 %v1166
    %v1794 = vunpack.c.h.b16 %v1166
    %v1795 = vunpack.c.l.b16 %v1167
    %v1796 = vunpack.c.h.b16 %v1167
    %v1797 = vunpack.c.l.b16 %v1168
    %v1798 = vunpack.c.h.b16 %v1168
    %v1799 = vunpack.c.l.b16 %v1169
    %v1800 = vunpack.c.h.b16 %v1169
    %v1801 = vunpack.c.l.b16 %v1170
    %v1802 = vunpack.c.h.b16 %v1170
    %v1803 = vunpack.c.l.b16 %v1171
    %v1804 = vunpack.c.h.b16 %v1171
    %v1805 = vunpack.c.l.b16 %v1172
    %v1806 = vunpack.c.h.b16 %v1172
    %v1807 = vunpack.c.l.b16 %v1173
    %v1808 = vunpack.c.h.b16 %v1173
    %v1809 = vunpack.c.l.b16 %v1174
    %v1810 = vunpack.c.h.b16 %v1174
    %v1811 = vunpack.c.l.b16 %v1175
    %v1812 = vunpack.c.h.b16 %v1175
    %v1813 = vunpack.c.l.b16 %v1176
    %v1814 = vunpack.c.h.b16 %v1176
    %v1815 = vunpack.c.l.b16 %v1177
    %v1816 = vunpack.c.h.b16 %v1177
    %v1817 = vunpack.c.l.b16 %v1178
    %v1818 = vunpack.c.h.b16 %v1178
    %v1819 = vunpack.c.l.b16 %v1179
    %v1820 = vunpack.c.h.b16 %v1179
    %v1821 = vunpack.c.l.b16 %v1180
    %v1822 = vunpack.c.h.b16 %v1180
    %v1823 = vunpack.c.l.b16 %v1181
    %v1824 = vunpack.c.h.b16 %v1181
    %v1825 = vunpack.c.l.b16 %v1182
    %v1826 = vunpack.c.h.b16 %v1182
    %v1827 = vunpack.c.l.b16 %v1183
    %v1828 = vunpack.c.h.b16 %v1183
    %v1829 = vunpack.c.l.b16 %v1184
    %v1830 = vunpack.c.h.b16 %v1184
    %v1831 = vunpack.c.l.b16 %v1185
    %v1832 = vunpack.c.h.b16 %v1185
    %v1833 = vunpack.c.l.b16 %v1186
    %v1834 = vunpack.c.h.b16 %v1186
    %v1835 = vunpack.c.l.b16 %v1187
    %v1836 = vunpack.c.h.b16 %v1187
    %v1837 = vunpack.c.l.b16 %v1188
    %v1838 = vunpack.c.h.b16 %v1188
    %v1839 = vunpack.c.l.b16 %v1189
    %v1840 = vunpack.c.h.b16 %v1189
    %v1841 = vunpack.c.l.b16 %v1190
    %v1842 = vunpack.c.h.b16 %v1190
    %v1843 = vunpack.c.l.b16 %v1191
    %v1844 = vunpack.c.h.b16 %v1191
    %v1845 = vunpack.c.l.b16 %v1192
    %v1846 = vunpack.c.h.b16 %v1192
    %v1847 = vunpack.c.l.b16 %v1193
    %v1848 = vunpack.c.h.b16 %v1193
    %v1849 = vunpack.c.l.b16 %v1194
    %v1850 = vunpack.c.h.b16 %v1194
    %v1851 = vunpack.c.l.b16 %v1195
    %v1852 = vunpack.c.h.b16 %v1195
    %v1853 = vunpack.c.l.b16 %v1196
    %v1854 = vunpack.c.h.b16 %v1196
    %v1855 = vunpack.c.l.b16 %v1197
    %v1856 = vunpack.c.h.b16 %v1197
    %v1857 = vunpack.c.l.b16 %v1198
    %v1858 = vunpack.c.h.b16 %v1198
    %v1859 = vunpack.c.l.b16 %v1199
    %v1860 = vunpack.c.h.b16 %v1199
    %v1861 = vunpack.c.l.b16 %v1200
    %v1862 = vunpack.c.h.b16 %v1200
    %v1863 = vunpack.c.l.b16 %v1201
    %v1864 = vunpack.c.h.b16 %v1201
    %v1865 = vunpack.c.l.b16 %v1202
    %v1866 = vunpack.c.h.b16 %v1202
    %v1867 = vunpack.c.l.b16 %v1203
    %v1868 = vunpack.c.h.b16 %v1203
    %v1869 = vunpack.c.l.b16 %v1204
    %v1870 = vunpack.c.h.b16 %v1204
    %v1871 = vunpack.c.l.b16 %v1205
    %v1872 = vunpack.c.h.b16 %v1205
    %v1873 = vunpack.c.l.b16 %v1206
    %v1874 = vunpack.c.h.b16 %v1206
    %v1875 = vunpack.c.l.b16 %v1207
    %v1876 = vunpack.c.h.b16 %v1207
    %v1877 = vunpack.c.l.b16 %v1208
    %v1878 = vunpack.c.h.b16 %v1208
    %v1879 = vunpack.c.l.b16 %v1209
    %v1880 = vunpack.c.h.b16 %v1209
    %v1881 = vunpack.c.l.b16 %v1210
    %v1882 = vunpack.c.h.b16 %v1210
    %v1883 = vunpack.c.l.b16 %v1211
    %v1884 = vunpack.c.h.b16 %v1211
    %v1885 = vunpack.c.l.b16 %v1212
    %v1886 = vunpack.c.h.b16 %v1212
    %v1887 = vunpack.c.l.b16 %v1213
    %v1888 = vunpack.c.h.b16 %v1213
    %v1889 = vunpack.c.l.b16 %v1214
    %v1890 = vunpack.c.h.b16 %v1214
    %v1891 = vunpack.c.l.b16 %v1215
    %v1892 = vunpack.c.h.b16 %v1215
    %v1893 = vunpack.c.l.b16 %v1216
    %v1894 = vunpack.c.h.b16 %v1216
    %v1895 = vunpack.c.l.b16 %v1217
    %v1896 = vunpack.c.h.b16 %v1217
    %v1897 = vunpack.c.l.b16 %v1218
    %v1898 = vunpack.c.h.b16 %v1218
    %v1899 = vunpack.c.l.b16 %v1219
    %v1900 = vunpack.c.h.b16 %v1219
    %v1901 = vunpack.c.l.b16 %v1220
    %v1902 = vunpack.c.h.b16 %v1220
    %v1903 = vunpack.c.l.b16 %v1221
    %v1904 = vunpack.c.h.b16 %v1221
    %v1905 = vunpack.c.l.b16 %v1222
    %v1906 = vunpack.c.h.b16 %v1222
    %v1907 = vunpack.c.l.b16 %v1223
    %v1908 = vunpack.c.h.b16 %v1223
    %v1909 = vunpack.c.l.b16 %v1224
    %v1910 = vunpack.c.h.b16 %v1224
    %v1911 = vunpack.c.l.b16 %v1225
    %v1912 = vunpack.c.h.b16 %v1225
    %v1913 = vunpack.c.l.b16 %v1226
    %v1914 = vunpack.c.h.b16 %v1226
    %v1915 = vunpack.c.l.b16 %v1227
    %v1916 = vunpack.c.h.b16 %v1227
    %v1917 = vunpack.c.l.b16 %v1228
    %v1918 = vunpack.c.h.b16 %v1228
    %v1919 = vunpack.c.l.b16 %v1229
    %v1920 = vunpack.c.h.b16 %v1229
    %v1921 = vunpack.c.l.b16 %v1230
    %v1922 = vunpack.c.h.b16 %v1230
    %v1923 = vunpack.c.l.b16 %v1231
    %v1924 = vunpack.c.h.b16 %v1231
    %v1925 = vunpack.c.l.b16 %v1232
    %v1926 = vunpack.c.h.b16 %v1232
    %v1927 = vunpack.c.l.b16 %v1233
    %v1928 = vunpack.c.h.b16 %v1233
    %v1929 = vunpack.c.l.b16 %v1234
    %v1930 = vunpack.c.h.b16 %v1234
    %v1931 = vunpack.c.l.b16 %v1235
    %v1932 = vunpack.c.h.b16 %v1235
    %v1933 = vunpack.c.l.b16 %v1236
    %v1934 = vunpack.c.h.b16 %v1236
    %v1935 = vunpack.c.l.b16 %v1237
    %v1936 = vunpack.c.h.b16 %v1237
    %v1937 = vunpack.c.l.b16 %v1238
    %v1938 = vunpack.c.h.b16 %v1238
    %v1939 = vunpack.c.l.b16 %v1239
    %v1940 = vunpack.c.h.b16 %v1239
    %v1941 = vunpack.c.l.b16 %v1240
    %v1942 = vunpack.c.h.b16 %v1240
    %v1943 = vunpack.c.l.b16 %v1241
    %v1944 = vunpack.c.h.b16 %v1241
    %v1945 = vunpack.c.l.b16 %v1242
    %v1946 = vunpack.c.h.b16 %v1242
    %v1947 = vunpack.c.l.b16 %v1243
    %v1948 = vunpack.c.h.b16 %v1243
    %v1949 = vunpack.c.l.b16 %v1244
    %v1950 = vunpack.c.h.b16 %v1244
    %v1951 = vunpack.c.l.b16 %v1245
    %v1952 = vunpack.c.h.b16 %v1245
    %v1953 = vunpack.c.l.b16 %v1246
    %v1954 = vunpack.c.h.b16 %v1246
    %v1955 = vunpack.c.l.b16 %v1247
    %v1956 = vunpack.c.h.b16 %v1247
    %v1957 = vunpack.c.l.b16 %v1248
    %v1958 = vunpack.c.h.b16 %v1248
    %v1959 = vunpack.c.l.b16 %v1249
    %v1960 = vunpack.c.h.b16 %v1249
    %v1961 = vunpack.c.l.b16 %v1250
    %v1962 = vunpack.c.h.b16 %v1250
    %v1963 = vunpack.c.l.b16 %v1251
    %v1964 = vunpack.c.h.b16 %v1251
    %v1965 = vunpack.c.l.b16 %v1252
    %v1966 = vunpack.c.h.b16 %v1252
    %v1967 = vunpack.c.l.b16 %v1253
    %v1968 = vunpack.c.h.b16 %v1253
    %v1969 = vunpack.c.l.b16 %v1254
    %v1970 = vunpack.c.h.b16 %v1254
    %v1971 = vunpack.c.l.b16 %v1255
    %v1972 = vunpack.c.h.b16 %v1255
    %v1973 = vunpack.c.l.b16 %v1256
    %v1974 = vunpack.c.h.b16 %v1256
    %v1975 = vunpack.c.l.b16 %v1257
    %v1976 = vunpack.c.h.b16 %v1257
    %v1977 = vunpack.c.l.b16 %v1258
    %v1978 = vunpack.c.h.b16 %v1258
    %v1979 = vunpack.c.l.b16 %v1259
    %v1980 = vunpack.c.h.b16 %v1259
    %v1981 = vunpack.c.l.b16 %v1260
    %v1982 = vunpack.c.h.b16 %v1260
    %v1983 = vunpack.c.l.b16 %v1261
    %v1984 = vunpack.c.h.b16 %v1261
    %v1985 = vunpack.c.l.b16 %v1262
    %v1986 = vunpack.c.h.b16 %v1262
    %v1987 = vunpack.c.l.b16 %v1263
    %v1988 = vunpack.c.h.b16 %v1263
    %v1989 = vunpack.c.l.b16 %v1264
    %v1990 = vunpack.c.h.b16 %v1264
    %v1991 = vunpack.c.l.b16 %v1265
    %v1992 = vunpack.c.h.b16 %v1265
    %v1993 = vunpack.c.l.b16 %v1266
    %v1994 = vunpack.c.h.b16 %v1266
    %v1995 = vunpack.c.l.b16 %v1267
    %v1996 = vunpack.c.h.b16 %v1267
    %v1997 = vunpack.c.l.b16 %v1268
    %v1998 = vunpack.c.h.b16 %v1268
    %v1999 = vunpack.c.l.b16 %v1269
    %v2000 = vunpack.c.h.b16 %v1269
    %v2001 = vunpack.c.l.b16 %v1270
    %v2002 = vunpack.c.h.b16 %v1270
    %v2003 = vunpack.c.l.b16 %v1271
    %v2004 = vunpack.c.h.b16 %v1271
    %v2005 = vunpack.c.l.b16 %v1272
    %v2006 = vunpack.c.h.b16 %v1272
    %v2007 = vunpack.c.l.b16 %v1273
    %v2008 = vunpack.c.h.b16 %v1273
    %v2009 = vunpack.c.l.b16 %v1274
    %v2010 = vunpack.c.h.b16 %v1274
    %v2011 = vunpack.c.l.b16 %v1275
    %v2012 = vunpack.c.h.b16 %v1275
    %v2013 = vunpack.c.l.b16 %v1276
    %v2014 = vunpack.c.h.b16 %v1276
    %v2015 = vunpack.c.l.b16 %v1277
    %v2016 = vunpack.c.h.b16 %v1277
    %v2017 = vunpack.c.l.b16 %v1278
    %v2018 = vunpack.c.h.b16 %v1278
    %v2019 = vunpack.c.l.b16 %v1279
    %v2020 = vunpack.c.h.b16 %v1279
    %v2021 = vunpack.c.l.b16 %v1280
    %v2022 = vunpack.c.h.b16 %v1280
    %v2023 = vunpack.c.l.b16 %v1281
    %v2024 = vunpack.c.h.b16 %v1281
    %v2025 = vunpack.c.l.b16 %v1282
    %v2026 = vunpack.c.h.b16 %v1282
    %v2027 = vunpack.c.l.b16 %v1283
    %v2028 = vunpack.c.h.b16 %v1283
    %v2029 = vunpack.c.l.b16 %v1284
    %v2030 = vunpack.c.h.b16 %v1284
    %v2031 = vunpack.c.l.b16 %v1285
    %v2032 = vunpack.c.h.b16 %v1285
    %v2033 = vunpack.c.l.b16 %v1286
    %v2034 = vunpack.c.h.b16 %v1286
    %v2035 = vunpack.c.l.b16 %v1287
    %v2036 = vunpack.c.h.b16 %v1287
    %v2037 = vunpack.c.l.b16 %v1288
    %v2038 = vunpack.c.h.b16 %v1288
    %v2039 = vunpack.c.l.b16 %v1289
    %v2040 = vunpack.c.h.b16 %v1289
    %v2041 = vunpack.c.l.b16 %v1290
    %v2042 = vunpack.c.h.b16 %v1290
    %v2043 = vunpack.c.l.b16 %v1291
    %v2044 = vunpack.c.h.b16 %v1291
    %v2045 = vunpack.c.l.b16 %v1292
    %v2046 = vunpack.c.h.b16 %v1292
    %v2047 = vunpack.c.l.b16 %v1293
    %v2048 = vunpack.c.h.b16 %v1293
    %v2049 = vunpack.c.l.b16 %v1294
    %v2050 = vunpack.c.h.b16 %v1294
    %v2051 = vunpack.c.l.b16 %v1295
    %v2052 = vunpack.c.h.b16 %v1295
    %v2053 = vunpack.c.l.b16 %v1296
    %v2054 = vunpack.c.h.b16 %v1296
    %v2055 = vunpack.c.l.b16 %v1297
    %v2056 = vunpack.c.h.b16 %v1297
    %v2057 = vunpack.c.l.b16 %v1298
    %v2058 = vunpack.c.h.b16 %v1298
    %v2059 = vunpack.c.l.b16 %v1299
    %v2060 = vunpack.c.h.b16 %v1299
    %v2061 = vunpack.c.l.b16 %v1300
    %v2062 = vunpack.c.h.b16 %v1300
    %v2063 = vunpack.c.l.b16 %v1301
    %v2064 = vunpack.c.h.b16 %v1301
    %v2065 = vunpack.c.l.b16 %v1302
    %v2066 = vunpack.c.h.b16 %v1302
    %v2067 = vunpack.c.l.b16 %v1303
    %v2068 = vunpack.c.h.b16 %v1303
    %v2069 = vunpack.c.l.b16 %v1304
    %v2070 = vunpack.c.h.b16 %v1304
    %v2071 = vunpack.c.l.b16 %v1305
    %v2072 = vunpack.c.h.b16 %v1305
    %v2073 = vunpack.c.l.b16 %v1306
    %v2074 = vunpack.c.h.b16 %v1306
    %v2075 = vunpack.c.l.b16 %v1307
    %v2076 = vunpack.c.h.b16 %v1307
    %v2077 = vunpack.c.l.b16 %v1308
    %v2078 = vunpack.c.h.b16 %v1308
    %v2079 = vunpack.c.l.b16 %v1309
    %v2080 = vunpack.c.h.b16 %v1309
    %v2081 = vunpack.c.l.b16 %v1310
    %v2082 = vunpack.c.h.b16 %v1310
    %v2083 = vunpack.c.l.b16 %v1311
    %v2084 = vunpack.c.h.b16 %v1311
    %v2085 = vunpack.c.l.b16 %v1312
    %v2086 = vunpack.c.h.b16 %v1312
    %v2087 = vunpack.c.l.b16 %v1313
    %v2088 = vunpack.c.h.b16 %v1313
    %v2089 = vunpack.c.l.b16 %v1314
    %v2090 = vunpack.c.h.b16 %v1314
    %v2091 = vunpack.c.l.b16 %v1315
    %v2092 = vunpack.c.h.b16 %v1315
    %v2093 = vunpack.c.l.b16 %v1316
    %v2094 = vunpack.c.h.b16 %v1316
    %v2095 = vunpack.c.l.b16 %v1317
    %v2096 = vunpack.c.h.b16 %v1317
    %v2097 = vunpack.c.l.b16 %v1318
    %v2098 = vunpack.c.h.b16 %v1318
    %v2099 = vunpack.c.l.b16 %v1319
    %v2100 = vunpack.c.h.b16 %v1319
    %v2101 = vunpack.c.l.b16 %v1320
    %v2102 = vunpack.c.h.b16 %v1320
    %v2103 = vunpack.c.l.b16 %v1321
    %v2104 = vunpack.c.h.b16 %v1321
    %v2105 = vunpack.c.l.b16 %v1322
    %v2106 = vunpack.c.h.b16 %v1322
    %v2107 = vunpack.c.l.b16 %v1323
    %v2108 = vunpack.c.h.b16 %v1323
    %v2109 = vunpack.c.l.b16 %v1324
    %v2110 = vunpack.c.h.b16 %v1324
    %v2111 = vunpack.c.l.b16 %v1325
    %v2112 = vunpack.c.h.b16 %v1325
    %v2113 = vunpack.c.l.b16 %v1326
    %v2114 = vunpack.c.h.b16 %v1326
    %v2115 = vunpack.c.l.b16 %v1327
    %v2116 = vunpack.c.h.b16 %v1327
    %v2117 = vunpack.c.l.b16 %v1328
    %v2118 = vunpack.c.h.b16 %v1328
    %v2119 = vunpack.c.l.b16 %v1329
    %v2120 = vunpack.c.h.b16 %v1329
    %v2121 = vunpack.c.l.b16 %v1330
    %v2122 = vunpack.c.h.b16 %v1330
    %v2123 = vunpack.c.l.b16 %v1331
    %v2124 = vunpack.c.h.b16 %v1331
    %v2125 = vunpack.c.l.b16 %v1332
    %v2126 = vunpack.c.h.b16 %v1332
    %v2127 = vunpack.c.l.b16 %v1333
    %v2128 = vunpack.c.h.b16 %v1333
    %v2129 = vunpack.c.l.b16 %v1334
    %v2130 = vunpack.c.h.b16 %v1334
    %v2131 = vunpack.c.l.b16 %v1335
    %v2132 = vunpack.c.h.b16 %v1335
    %v2133 = vunpack.c.l.b16 %v1336
    %v2134 = vunpack.c.h.b16 %v1336
    %v2135 = vunpack.c.l.b16 %v1337
    %v2136 = vunpack.c.h.b16 %v1337
    %v2137 = vunpack.c.l.b16 %v1338
    %v2138 = vunpack.c.h.b16 %v1338
    %v2139 = vunpack.c.l.b16 %v1339
    %v2140 = vunpack.c.h.b16 %v1339
    %v2141 = vunpack.c.l.b16 %v1340
    %v2142 = vunpack.c.h.b16 %v1340
    %v2143 = vunpack.c.l.b16 %v1341
    %v2144 = vunpack.c.h.b16 %v1341
    %v2145 = vunpack.c.l.b16 %v1342
    %v2146 = vunpack.c.h.b16 %v1342
    %v2147 = vunpack.c.l.b16 %v1343
    %v2148 = vunpack.c.h.b16 %v1343
    %v2149 = vunpack.c.l.b16 %v1344
    %v2150 = vunpack.c.h.b16 %v1344
    %v2151 = vunpack.c.l.b16 %v1345
    %v2152 = vunpack.c.h.b16 %v1345
    %v2153 = vunpack.c.l.b16 %v1346
    %v2154 = vunpack.c.h.b16 %v1346
    %v2155 = vunpack.c.l.b16 %v1347
    %v2156 = vunpack.c.h.b16 %v1347
    %v2157 = vunpack.c.l.b16 %v1348
    %v2158 = vunpack.c.h.b16 %v1348
    %v2159 = vpack.c.b16 %v1655, %v1647
    %v2160 = vpack.c.b16 %v1656, %v1648
    %v2161 = vpack.c.b16 %v1657, %v1649
    %v2162 = vpack.c.b16 %v1658, %v1650
    %v2163 = vpack.c.b16 %v1659, %v1651
    %v2164 = vpack.c.b16 %v1660, %v1652
    %v2165 = vpack.c.b16 %v1661, %v1653
    %v2166 = vpack.c.b16 %v1662, %v1654
    %v2167 = vpack.c.b16 %v1671, %v1663
    %v2168 = vpack.c.b16 %v1672, %v1664
    %v2169 = vpack.c.b16 %v1673, %v1665
    %v2170 = vpack.c.b16 %v1674, %v1666
    %v2171 = vpack.c.b16 %v1675, %v1667
    %v2172 = vpack.c.b16 %v1676, %v1668
    %v2173 = vpack.c.b16 %v1677, %v1669
    %v2174 = vpack.c.b16 %v1678, %v1670
    %v2175 = vpack.c.b16 %v1687, %v1679
    %v2176 = vpack.c.b16 %v1688, %v1680
    %v2177 = vpack.c.b16 %v1689, %v1681
    %v2178 = vpack.c.b16 %v1690, %v1682
    %v2179 = vpack.c.b16 %v1691, %v1683
    %v2180 = vpack.c.b16 %v1692, %v1684
    %v2181 = vpack.c.b16 %v1693, %v1685
    %v2182 = vpack.c.b16 %v1694, %v1686
    %v2183 = vpack.c.b16 %v1703, %v1695
    %v2184 = vpack.c.b16 %v1704, %v1696
    %v2185 = vpack.c.b16 %v1705, %v1697
    %v2186 = vpack.c.b16 %v1706, %v1698
    %v2187 = vpack.c.b16 %v1707, %v1699
    %v2188 = vpack.c.b16 %v1708, %v1700
    %v2189 = vpack.c.b16 %v1709, %v1701
    %v2190 = vpack.c.b16 %v1710, %v1702
    %v2191 = vpack.c.b16 %v1719, %v1711
    %v2192 = vpack.c.b16 %v1720, %v1712
    %v2193 = vpack.c.b16 %v1721, %v1713
    %v2194 = vpack.c.b16 %v1722, %v1714
    %v2195 = vpack.c.b16 %v1723, %v1715
    %v2196 = vpack.c.b16 %v1724, %v1716
    %v2197 = vpack.c.b16 %v1725, %v1717
    %v2198 = vpack.c.b16 %v1726, %v1718
    %v2199 = vpack.c.b16 %v1735, %v1727
    %v2200 = vpack.c.b16 %v1736, %v1728
    %v2201 = vpack.c.b16 %v1737, %v1729
    %v2202 = vpack.c.b16 %v1738, %v1730
    %v2203 = vpack.c.b16 %v1739, %v1731
    %v2204 = vpack.c.b16 %v1740, %v1732
    %v2205 = vpack.c.b16 %v1741, %v1733
    %v2206 = vpack.c.b16 %v1742, %v1734
    %v2207 = vpack.c.b16 %v1751, %v1743
    %v2208 = vpack.c.b16 %v1752, %v1744
    %v2209 = vpack.c.b16 %v1753, %v1745
    %v2210 = vpack.c.b16 %v1754, %v1746
    %v2211 = vpack.c.b16 %v1755, %v1747
    %v2212 = vpack.c.b16 %v1756, %v1748
    %v2213 = vpack.c.b16 %v1757, %v1749
    %v2214 = vpack.c.b16 %v1758, %v1750
    %v2215 = vpack.c.b16 %v1767, %v1759
    %v2216 = vpack.c.b16 %v1768, %v1760
    %v2217 = vpack.c.b16 %v1769, %v1761
    %v2218 = vpack.c.b16 %v1770, %v1762
    %v2219 = vpack.c.b16 %v1771, %v1763
    %v2220 = vpack.c.b16 %v1772, %v1764
    %v2221 = vpack.c.b16 %v1773, %v1765
    %v2222 = vpack.c.b16 %v1774, %v1766
    %v2223 = vpack.c.b16 %v1783, %v1775
    %v2224 = vpack.c.b16 %v1784, %v1776
    %v2225 = vpack.c.b16 %v1785, %v1777
    %v2226 = vpack.c.b16 %v1786, %v1778
    %v2227 = vpack.c.b16 %v1787, %v1779
    %v2228 = vpack.c.b16 %v1788, %v1780
    %v2229 = vpack.c.b16 %v1789, %v1781
    %v2230 = vpack.c.b16 %v1790, %v1782
    %v2231 = vpack.c.b16 %v1799, %v1791
    %v2232 = vpack.c.b16 %v1800, %v1792
    %v2233 = vpack.c.b16 %v1801, %v1793
    %v2234 = vpack.c.b16 %v1802, %v1794
    %v2235 = vpack.c.b16 %v1803, %v1795
    %v2236 = vpack.c.b16 %v1804, %v1796
    %v2237 = vpack.c.b16 %v1805, %v1797
    %v2238 = vpack.c.b16 %v1806, %v1798
    %v2239 = vpack.c.b16 %v1815, %v1807
    %v2240 = vpack.c.b16 %v1816, %v1808
    %v2241 = vpack.c.b16 %v1817, %v1809
    %v2242 = vpack.c.b16 %v1818, %v1810
    %v2243 = vpack.c.b16 %v1819, %v1811
    %v2244 = vpack.c.b16 %v1820, %v1812
    %v2245 = vpack.c.b16 %v1821, %v1813
    %v2246 = vpack.c.b16 %v1822, %v1814
    %v2247 = vpack.c.b16 %v1831, %v1823
    %v2248 = vpack.c.b16 %v1832, %v1824
    %v2249 = vpack.c.b16 %v1833, %v1825
    %v2250 = vpack.c.b16 %v1834, %v1826
    %v2251 = vpack.c.b16 %v1835, %v1827
    %v2252 = vpack.c.b16 %v1836, %v1828
    %v2253 = vpack.c.b16 %v1837, %v1829
    %v2254 = vpack.c.b16 %v1838, %v1830
    %v2255 = vpack.c.b16 %v1847, %v1839
    %v2256 = vpack.c.b16 %v1848, %v1840
    %v2257 = vpack.c.b16 %v1849, %v1841
    %v2258 = vpack.c.b16 %v1850, %v1842
    %v2259 = vpack.c.b16 %v1851, %v1843
    %v2260 = vpack.c.b16 %v1852, %v1844
    %v2261 = vpack.c.b16 %v1853, %v1845
    %v2262 = vpack.c.b16 %v1854, %v1846
    %v2263 = vpack.c.b16 %v1863, %v1855
    %v2264 = vpack.c.b16 %v1864, %v1856
    %v2265 = vpack.c.b16 %v1865, %v1857
    %v2266 = vpack.c.b16 %v1866, %v1858
    %v2267 = vpack.c.b16 %v1867, %v1859
    %v2268 = vpack.c.b16 %v1868, %v1860
    %v2269 = vpack.c.b16 %v1869, %v1861
    %v2270 = vpack.c.b16 %v1870, %v1862
    %v2271 = vpack.c.b16 %v1879, %v1871
    %v2272 = vpack.c.b16 %v1880, %v1872
    %v2273 = vpack.c.b16 %v1881, %v1873
    %v2274 = vpack.c.b16 %v1882, %v1874
    %v2275 = vpack.c.b16 %v1883, %v1875
    %v2276 = vpack.c.b16 %v1884, %v1876
    %v2277 = vpack.c.b16 %v1885, %v1877
    %v2278 = vpack.c.b16 %v1886, %v1878
    %v2279 = vpack.c.b16 %v1895, %v1887
    %v2280 = vpack.c.b16 %v1896, %v1888
    %v2281 = vpack.c.b16 %v1897, %v1889
    %v2282 = vpack.c.b16 %v1898, %v1890
    %v2283 = vpack.c.b16 %v1899, %v1891
    %v2284 = vpack.c.b16 %v1900, %v1892
    %v2285 = vpack.c.b16 %v1901, %v1893
    %v2286 = vpack.c.b16 %v1902, %v1894
    %v2287 = vpack.c.b16 %v1911, %v1903
    %v2288 = vpack.c.b16 %v1912, %v1904
    %v2289 = vpack.c.b16 %v1913, %v1905
    %v2290 = vpack.c.b16 %v1914, %v1906
    %v2291 = vpack.c.b16 %v1915, %v1907
    %v2292 = vpack.c.b16 %v1916, %v1908
    %v2293 = vpack.c.b16 %v1917, %v1909
    %v2294 = vpack.c.b16 %v1918, %v1910
    %v2295 = vpack.c.b16 %v1927, %v1919
    %v2296 = vpack.c.b16 %v1928, %v1920
    %v2297 = vpack.c.b16 %v1929, %v1921
    %v2298 = vpack.c.b16 %v1930, %v1922
    %v2299 = vpack.c.b16 %v1931, %v1923
    %v2300 = vpack.c.b16 %v1932, %v1924
    %v2301 = vpack.c.b16 %v1933, %v1925
    %v2302 = vpack.c.b16 %v1934, %v1926
    %v2303 = vpack.c.b16 %v1943, %v1935
    %v2304 = vpack.c.b16 %v1944, %v1936
    %v2305 = vpack.c.b16 %v1945, %v1937
    %v2306 = vpack.c.b16 %v1946, %v1938
    %v2307 = vpack.c.b16 %v1947, %v1939
    %v2308 = vpack.c.b16 %v1948, %v1940
    %v2309 = vpack.c.b16 %v1949, %v1941
    %v2310 = vpack.c.b16 %v1950, %v1942
    %v2311 = vpack.c.b16 %v1959, %v1951
    %v2312 = vpack.c.b16 %v1960, %v1952
    %v2313 = vpack.c.b16 %v1961, %v1953
    %v2314 = vpack.c.b16 %v1962, %v1954
    %v2315 = vpack.c.b16 %v1963, %v1955
    %v2316 = vpack.c.b16 %v1964, %v1956
    %v2317 = vpack.c.b16 %v1965, %v1957
    %v2318 = vpack.c.b16 %v1966, %v1958
    %v2319 = vpack.c.b16 %v1975, %v1967
    %v2320 = vpack.c.b16 %v1976, %v1968
    %v2321 = vpack.c.b16 %v1977, %v1969
    %v2322 = vpack.c.b16 %v1978, %v1970
    %v2323 = vpack.c.b16 %v1979, %v1971
    %v2324 = vpack.c.b16 %v1980, %v1972
    %v2325 = vpack.c.b16 %v1981, %v1973
    %v2326 = vpack.c.b16 %v1982, %v1974
    %v2327 = vpack.c.b16 %v1991, %v1983
    %v2328 = vpack.c.b16 %v1992, %v1984
    %v2329 = vpack.c.b16 %v1993, %v1985
    %v2330 = vpack.c.b16 %v1994, %v1986
    %v2331 = vpack.c.b16 %v1995, %v1987
    %v2332 = vpack.c.b16 %v1996, %v1988
    %v2333 = vpack.c.b16 %v1997, %v1989
    %v2334 = vpack.c.b16 %v1998, %v1990
    %v2335 = vpack.c.b16 %v2007, %v1999
    %v2336 = vpack.c.b16 %v2008, %v2000
    %v2337 = vpack.c.b16 %v2009, %v2001
    %v2338 = vpack.c.b16 %v2010, %v2002
    %v2339 = vpack.c.b16 %v2011, %v2003
    %v2340 = vpack.c.b16 %v2012, %v2004
    %v2341 = vpack.c.b16 %v2013, %v2005
    %v2342 = vpack.c.b16 %v2014, %v2006
    %v2343 = vpack.c.b16 %v2023, %v2015
    %v2344 = vpack.c.b16 %v2024, %v2016
    %v2345 = vpack.c.b16 %v2025, %v2017
    %v2346 = vpack.c.b16 %v2026, %v2018
    %v2347 = vpack.c.b16 %v2027, %v2019
    %v2348 = vpack.c.b16 %v2028, %v2020
    %v2349 = vpack.c.b16 %v2029, %v2021
    %v2350 = vpack.c.b16 %v2030, %v2022
    %v2351 = vpack.c.b16 %v2039, %v2031
    %v2352 = vpack.c.b16 %v2040, %v2032
    %v2353 = vpack.c.b16 %v2041, %v2033
    %v2354 = vpack.c.b16 %v2042, %v2034
    %v2355 = vpack.c.b16 %v2043, %v2035
    %v2356 = vpack.c.b16 %v2044, %v2036
    %v2357 = vpack.c.b16 %v2045, %v2037
    %v2358 = vpack.c.b16 %v2046, %v2038
    %v2359 = vpack.c.b16 %v2055, %v2047
    %v2360 = vpack.c.b16 %v2056, %v2048
    %v2361 = vpack.c.b16 %v2057, %v2049
    %v2362 = vpack.c.b16 %v2058, %v2050
    %v2363 = vpack.c.b16 %v2059, %v2051
    %v2364 = vpack.c.b16 %v2060, %v2052
    %v2365 = vpack.c.b16 %v2061, %v2053
    %v2366 = vpack.c.b16 %v2062, %v2054
    %v2367 = vpack.c.b16 %v2071, %v2063
    %v2368 = vpack.c.b16 %v2072, %v2064
    %v2369 = vpack.c.b16 %v2073, %v2065
    %v2370 = vpack.c.b16 %v2074, %v2066
    %v2371 = vpack.c.b16 %v2075, %v2067
    %v2372 = vpack.c.b16 %v2076, %v2068
    %v2373 = vpack.c.b16 %v2077, %v2069
    %v2374 = vpack.c.b16 %v2078, %v2070
    %v2375 = vpack.c.b16 %v2087, %v2079
    %v2376 = vpack.c.b16 %v2088, %v2080
    %v2377 = vpack.c.b16 %v2089, %v2081
    %v2378 = vpack.c.b16 %v2090, %v2082
    %v2379 = vpack.c.b16 %v2091, %v2083
    %v2380 = vpack.c.b16 %v2092, %v2084
    %v2381 = vpack.c.b16 %v2093, %v2085
    %v2382 = vpack.c.b16 %v2094, %v2086
    %v2383 = vpack.c.b16 %v2103, %v2095
    %v2384 = vpack.c.b16 %v2104, %v2096
    %v2385 = vpack.c.b16 %v2105, %v2097
    %v2386 = vpack.c.b16 %v2106, %v2098
    %v2387 = vpack.c.b16 %v2107, %v2099
    %v2388 = vpack.c.b16 %v2108, %v2100
    %v2389 = vpack.c.b16 %v2109, %v2101
    %v2390 = vpack.c.b16 %v2110, %v2102
    %v2391 = vpack.c.b16 %v2119, %v2111
    %v2392 = vpack.c.b16 %v2120, %v2112
    %v2393 = vpack.c.b16 %v2121, %v2113
    %v2394 = vpack.c.b16 %v2122, %v2114
    %v2395 = vpack.c.b16 %v2123, %v2115
    %v2396 = vpack.c.b16 %v2124, %v2116
    %v2397 = vpack.c.b16 %v2125, %v2117
    %v2398 = vpack.c.b16 %v2126, %v2118
    %v2399 = vpack.c.b16 %v2135, %v2127
    %v2400 = vpack.c.b16 %v2136, %v2128
    %v2401 = vpack.c.b16 %v2137, %v2129
    %v2402 = vpack.c.b16 %v2138, %v2130
    %v2403 = vpack.c.b16 %v2139, %v2131
    %v2404 = vpack.c.b16 %v2140, %v2132
    %v2405 = vpack.c.b16 %v2141, %v2133
    %v2406 = vpack.c.b16 %v2142, %v2134
    %v2407 = vpack.c.b16 %v2151, %v2143
    %v2408 = vpack.c.b16 %v2152, %v2144
    %v2409 = vpack.c.b16 %v2153, %v2145
    %v2410 = vpack.c.b16 %v2154, %v2146
    %v2411 = vpack.c.b16 %v2155, %v2147
    %v2412 = vpack.c.b16 %v2156, %v2148
    %v2413 = vpack.c.b16 %v2157, %v2149
    %v2414 = vpack.c.b16 %v2158, %v2150
    %2671 = vmatprep.subr.bf16.mxu0 %v2160
    %2672 = vmatpush1.bf16.msra.mxu0 %v2159
    %2673 = vmatprep.subr.bf16.mxu0 %v2168
    %2674 = vmatpush1.bf16.msra.mxu0 %v2167
    %2675 = vmatprep.subr.bf16.mxu0 %v2176
    %2676 = vmatpush1.bf16.msra.mxu0 %v2175
    %2677 = vmatprep.subr.bf16.mxu0 %v2184
    %2678 = vmatpush1.bf16.msra.mxu0 %v2183
    %2679 = vmatprep.subr.bf16.mxu0 %v2192
    %2680 = vmatpush1.bf16.msra.mxu0 %v2191
    %2681 = vmatprep.subr.bf16.mxu0 %v2200
    %2682 = vmatpush1.bf16.msra.mxu0 %v2199
    %2683 = vmatprep.subr.bf16.mxu0 %v2208
    %2684 = vmatpush1.bf16.msra.mxu0 %v2207
    %2685 = vmatprep.subr.bf16.mxu0 %v2216
    %2686 = vmatpush1.bf16.msra.mxu0 %v2215
    %2687 = vmatprep.subr.bf16.mxu0 %v2224
    %2688 = vmatpush1.bf16.msra.mxu0 %v2223
    %2689 = vmatprep.subr.bf16.mxu0 %v2232
    %2690 = vmatpush1.bf16.msra.mxu0 %v2231
    %2691 = vmatprep.subr.bf16.mxu0 %v2240
    %2692 = vmatpush1.bf16.msra.mxu0 %v2239
    %2693 = vmatprep.subr.bf16.mxu0 %v2248
    %2694 = vmatpush1.bf16.msra.mxu0 %v2247
    %2695 = vmatprep.subr.bf16.mxu0 %v2256
    %2696 = vmatpush1.bf16.msra.mxu0 %v2255
    %2697 = vmatprep.subr.bf16.mxu0 %v2264
    %2698 = vmatpush1.bf16.msra.mxu0 %v2263
    %2699 = vmatprep.subr.bf16.mxu0 %v2272
    %2700 = vmatpush1.bf16.msra.mxu0 %v2271
    %2701 = vmatprep.subr.bf16.mxu0 %v2280
    %2702 = vmatpush1.bf16.msra.mxu0 %v2279
    %2703 = vmatprep.mubr.bf16.mxu0 %v1090
    %2704 = vmatmul.mubr.bf16.gmra.mrb[0].mxu0 %v1089
    %v2705 = vpop.f32.mrb[0].mxu0
    %v2706 = vadd.f32 %v1354, %v2705
    %v2707 = vpop.f32.mrb[0].mxu0
    %v2708 = vadd.f32 %v1358, %v2707
    %v2709 = vpop.f32.mrb[0].mxu0
    %v2710 = vpop.f32.mrb[0].mxu0
    %2711 = vdwg.mxu0
    %2712 = vmatprep.subr.bf16.mxu0 %v2288
    %2713 = vmatpush1.bf16.msra.mxu0 %v2287
    %2714 = vmatprep.subr.bf16.mxu0 %v2296
    %2715 = vmatpush1.bf16.msra.mxu0 %v2295
    %2716 = vmatprep.subr.bf16.mxu0 %v2304
    %2717 = vmatpush1.bf16.msra.mxu0 %v2303
    %2718 = vmatprep.subr.bf16.mxu0 %v2312
    %2719 = vmatpush1.bf16.msra.mxu0 %v2311
    %2720 = vmatprep.subr.bf16.mxu0 %v2320
    %2721 = vmatpush1.bf16.msra.mxu0 %v2319
    %2722 = vmatprep.subr.bf16.mxu0 %v2328
    %2723 = vmatpush1.bf16.msra.mxu0 %v2327
    %2724 = vmatprep.subr.bf16.mxu0 %v2336
    %2725 = vmatpush1.bf16.msra.mxu0 %v2335
    %2726 = vmatprep.subr.bf16.mxu0 %v2344
    %2727 = vmatpush1.bf16.msra.mxu0 %v2343
    %2728 = vmatprep.subr.bf16.mxu0 %v2352
    %2729 = vmatpush1.bf16.msra.mxu0 %v2351
    %2730 = vmatprep.subr.bf16.mxu0 %v2360
    %2731 = vmatpush1.bf16.msra.mxu0 %v2359
    %2732 = vmatprep.subr.bf16.mxu0 %v2368
    %2733 = vmatpush1.bf16.msra.mxu0 %v2367
    %2734 = vmatprep.subr.bf16.mxu0 %v2376
    %2735 = vmatpush1.bf16.msra.mxu0 %v2375
    %2736 = vmatprep.subr.bf16.mxu0 %v2384
    %2737 = vmatpush1.bf16.msra.mxu0 %v2383
    %2738 = vmatprep.subr.bf16.mxu0 %v2392
    %2739 = vmatpush1.bf16.msra.mxu0 %v2391
    %2740 = vmatprep.subr.bf16.mxu0 %v2400
    %2741 = vmatpush1.bf16.msra.mxu0 %v2399
    %2742 = vmatprep.subr.bf16.mxu0 %v2408
    %2743 = vmatpush1.bf16.msra.mxu0 %v2407
    %2744 = vmatprep.mubr.bf16.mxu0 %v1092
    %2745 = vmatmul.mubr.bf16.gmra.mrb[0].mxu0 %v1091
    %v2746 = vpop.f32.mrb[0].mxu0
    %v2747 = vadd.f32 %v2706, %v2746
    %v2748 = vpop.f32.mrb[0].mxu0
    %v2749 = vadd.f32 %v2708, %v2748
    %v2750 = vpop.f32.mrb[0].mxu0
    %v2751 = vpop.f32.mrb[0].mxu0
    %2752 = vdwg.mxu0
    %2753 = vmatprep.subr.bf16.mxu0 %v2162
    %2754 = vmatpush1.bf16.msra.mxu0 %v2161
    %2755 = vmatprep.subr.bf16.mxu0 %v2170
    %2756 = vmatpush1.bf16.msra.mxu0 %v2169
    %2757 = vmatprep.subr.bf16.mxu0 %v2178
    %2758 = vmatpush1.bf16.msra.mxu0 %v2177
    %2759 = vmatprep.subr.bf16.mxu0 %v2186
    %2760 = vmatpush1.bf16.msra.mxu0 %v2185
    %2761 = vmatprep.subr.bf16.mxu0 %v2194
    %2762 = vmatpush1.bf16.msra.mxu0 %v2193
    %2763 = vmatprep.subr.bf16.mxu0 %v2202
    %2764 = vmatpush1.bf16.msra.mxu0 %v2201
    %2765 = vmatprep.subr.bf16.mxu0 %v2210
    %2766 = vmatpush1.bf16.msra.mxu0 %v2209
    %2767 = vmatprep.subr.bf16.mxu0 %v2218
    %2768 = vmatpush1.bf16.msra.mxu0 %v2217
    %2769 = vmatprep.subr.bf16.mxu0 %v2226
    %2770 = vmatpush1.bf16.msra.mxu0 %v2225
    %2771 = vmatprep.subr.bf16.mxu0 %v2234
    %2772 = vmatpush1.bf16.msra.mxu0 %v2233
    %2773 = vmatprep.subr.bf16.mxu0 %v2242
    %2774 = vmatpush1.bf16.msra.mxu0 %v2241
    %2775 = vmatprep.subr.bf16.mxu0 %v2250
    %2776 = vmatpush1.bf16.msra.mxu0 %v2249
    %2777 = vmatprep.subr.bf16.mxu0 %v2258
    %2778 = vmatpush1.bf16.msra.mxu0 %v2257
    %2779 = vmatprep.subr.bf16.mxu0 %v2266
    %2780 = vmatpush1.bf16.msra.mxu0 %v2265
    %2781 = vmatprep.subr.bf16.mxu0 %v2274
    %2782 = vmatpush1.bf16.msra.mxu0 %v2273
    %2783 = vmatprep.subr.bf16.mxu0 %v2282
    %2784 = vmatpush1.bf16.msra.mxu0 %v2281
    %2785 = vmatprep.mubr.bf16.mxu0 %v1090
    %2786 = vmatmul.mubr.bf16.gmra.mrb[0].mxu0 %v1089
    %v2787 = vpop.f32.mrb[0].mxu0
    %v2788 = vadd.f32 %v1362, %v2787
    %v2789 = vpop.f32.mrb[0].mxu0
    %v2790 = vadd.f32 %v1366, %v2789
    %v2791 = vpop.f32.mrb[0].mxu0
    %v2792 = vpop.f32.mrb[0].mxu0
    %2793 = vdwg.mxu0
    %2794 = vmatprep.subr.bf16.mxu0 %v2290
    %2795 = vmatpush1.bf16.msra.mxu0 %v2289
    %2796 = vmatprep.subr.bf16.mxu0 %v2298
    %2797 = vmatpush1.bf16.msra.mxu0 %v2297
    %2798 = vmatprep.subr.bf16.mxu0 %v2306
    %2799 = vmatpush1.bf16.msra.mxu0 %v2305
    %2800 = vmatprep.subr.bf16.mxu0 %v2314
    %2801 = vmatpush1.bf16.msra.mxu0 %v2313
    %2802 = vmatprep.subr.bf16.mxu0 %v2322
    %2803 = vmatpush1.bf16.msra.mxu0 %v2321
    %2804 = vmatprep.subr.bf16.mxu0 %v2330
    %2805 = vmatpush1.bf16.msra.mxu0 %v2329
    %2806 = vmatprep.subr.bf16.mxu0 %v2338
    %2807 = vmatpush1.bf16.msra.mxu0 %v2337
    %2808 = vmatprep.subr.bf16.mxu0 %v2346
    %2809 = vmatpush1.bf16.msra.mxu0 %v2345
    %2810 = vmatprep.subr.bf16.mxu0 %v2354
    %2811 = vmatpush1.bf16.msra.mxu0 %v2353
    %2812 = vmatprep.subr.bf16.mxu0 %v2362
    %2813 = vmatpush1.bf16.msra.mxu0 %v2361
    %2814 = vmatprep.subr.bf16.mxu0 %v2370
    %2815 = vmatpush1.bf16.msra.mxu0 %v2369
    %2816 = vmatprep.subr.bf16.mxu0 %v2378
    %2817 = vmatpush1.bf16.msra.mxu0 %v2377
    %2818 = vmatprep.subr.bf16.mxu0 %v2386
    %2819 = vmatpush1.bf16.msra.mxu0 %v2385
    %2820 = vmatprep.subr.bf16.mxu0 %v2394
    %2821 = vmatpush1.bf16.msra.mxu0 %v2393
    %2822 = vmatprep.subr.bf16.mxu0 %v2402
    %2823 = vmatpush1.bf16.msra.mxu0 %v2401
    %2824 = vmatprep.subr.bf16.mxu0 %v2410
    %2825 = vmatpush1.bf16.msra.mxu0 %v2409
    %2826 = vmatprep.mubr.bf16.mxu0 %v1092
    %2827 = vmatmul.mubr.bf16.gmra.mrb[0].mxu0 %v1091
    %v2828 = vpop.f32.mrb[0].mxu0
    %v2829 = vadd.f32 %v2788, %v2828
    %v2830 = vpop.f32.mrb[0].mxu0
    %v2831 = vadd.f32 %v2790, %v2830
    %v2832 = vpop.f32.mrb[0].mxu0
    %v2833 = vpop.f32.mrb[0].mxu0
    %2834 = vdwg.mxu0
    %2835 = vmatprep.subr.bf16.mxu0 %v2164
    %2836 = vmatpush1.bf16.msra.mxu0 %v2163
    %2837 = vmatprep.subr.bf16.mxu0 %v2172
    %2838 = vmatpush1.bf16.msra.mxu0 %v2171
    %2839 = vmatprep.subr.bf16.mxu0 %v2180
    %2840 = vmatpush1.bf16.msra.mxu0 %v2179
    %2841 = vmatprep.subr.bf16.mxu0 %v2188
    %2842 = vmatpush1.bf16.msra.mxu0 %v2187
    %2843 = vmatprep.subr.bf16.mxu0 %v2196
    %2844 = vmatpush1.bf16.msra.mxu0 %v2195
    %2845 = vmatprep.subr.bf16.mxu0 %v2204
    %2846 = vmatpush1.bf16.msra.mxu0 %v2203
    %2847 = vmatprep.subr.bf16.mxu0 %v2212
    %2848 = vmatpush1.bf16.msra.mxu0 %v2211
    %2849 = vmatprep.subr.bf16.mxu0 %v2220
    %2850 = vmatpush1.bf16.msra.mxu0 %v2219
    %2851 = vmatprep.subr.bf16.mxu0 %v2228
    %2852 = vmatpush1.bf16.msra.mxu0 %v2227
    %2853 = vmatprep.subr.bf16.mxu0 %v2236
    %2854 = vmatpush1.bf16.msra.mxu0 %v2235
    %2855 = vmatprep.subr.bf16.mxu0 %v2244
    %2856 = vmatpush1.bf16.msra.mxu0 %v2243
    %2857 = vmatprep.subr.bf16.mxu0 %v2252
    %2858 = vmatpush1.bf16.msra.mxu0 %v2251
    %2859 = vmatprep.subr.bf16.mxu0 %v2260
    %2860 = vmatpush1.bf16.msra.mxu0 %v2259
    %2861 = vmatprep.subr.bf16.mxu0 %v2268
    %2862 = vmatpush1.bf16.msra.mxu0 %v2267
    %2863 = vmatprep.subr.bf16.mxu0 %v2276
    %2864 = vmatpush1.bf16.msra.mxu0 %v2275
    %2865 = vmatprep.subr.bf16.mxu0 %v2284
    %2866 = vmatpush1.bf16.msra.mxu0 %v2283
    %2867 = vmatprep.mubr.bf16.mxu0 %v1090
    %2868 = vmatmul.mubr.bf16.gmra.mrb[0].mxu0 %v1089
    %v2869 = vpop.f32.mrb[0].mxu0
    %v2870 = vadd.f32 %v1370, %v2869
    %v2871 = vpop.f32.mrb[0].mxu0
    %v2872 = vadd.f32 %v1374, %v2871
    %v2873 = vpop.f32.mrb[0].mxu0
    %v2874 = vpop.f32.mrb[0].mxu0
    %2875 = vdwg.mxu0
    %2876 = vmatprep.subr.bf16.mxu0 %v2292
    %2877 = vmatpush1.bf16.msra.mxu0 %v2291
    %2878 = vmatprep.subr.bf16.mxu0 %v2300
    %2879 = vmatpush1.bf16.msra.mxu0 %v2299
    %2880 = vmatprep.subr.bf16.mxu0 %v2308
    %2881 = vmatpush1.bf16.msra.mxu0 %v2307
    %2882 = vmatprep.subr.bf16.mxu0 %v2316
    %2883 = vmatpush1.bf16.msra.mxu0 %v2315
    %2884 = vmatprep.subr.bf16.mxu0 %v2324
    %2885 = vmatpush1.bf16.msra.mxu0 %v2323
    %2886 = vmatprep.subr.bf16.mxu0 %v2332
    %2887 = vmatpush1.bf16.msra.mxu0 %v2331
    %2888 = vmatprep.subr.bf16.mxu0 %v2340
    %2889 = vmatpush1.bf16.msra.mxu0 %v2339
    %2890 = vmatprep.subr.bf16.mxu0 %v2348
    %2891 = vmatpush1.bf16.msra.mxu0 %v2347
    %2892 = vmatprep.subr.bf16.mxu0 %v2356
    %2893 = vmatpush1.bf16.msra.mxu0 %v2355
    %2894 = vmatprep.subr.bf16.mxu0 %v2364
    %2895 = vmatpush1.bf16.msra.mxu0 %v2363
    %2896 = vmatprep.subr.bf16.mxu0 %v2372
    %2897 = vmatpush1.bf16.msra.mxu0 %v2371
    %2898 = vmatprep.subr.bf16.mxu0 %v2380
    %2899 = vmatpush1.bf16.msra.mxu0 %v2379
    %2900 = vmatprep.subr.bf16.mxu0 %v2388
    %2901 = vmatpush1.bf16.msra.mxu0 %v2387
    %2902 = vmatprep.subr.bf16.mxu0 %v2396
    %2903 = vmatpush1.bf16.msra.mxu0 %v2395
    %2904 = vmatprep.subr.bf16.mxu0 %v2404
    %2905 = vmatpush1.bf16.msra.mxu0 %v2403
    %2906 = vmatprep.subr.bf16.mxu0 %v2412
    %2907 = vmatpush1.bf16.msra.mxu0 %v2411
    %2908 = vmatprep.mubr.bf16.mxu0 %v1092
    %2909 = vmatmul.mubr.bf16.gmra.mrb[0].mxu0 %v1091
    %v2910 = vpop.f32.mrb[0].mxu0
    %v2911 = vadd.f32 %v2870, %v2910
    %v2912 = vpop.f32.mrb[0].mxu0
    %v2913 = vadd.f32 %v2872, %v2912
    %v2914 = vpop.f32.mrb[0].mxu0
    %v2915 = vpop.f32.mrb[0].mxu0
    %2916 = vdwg.mxu0
    %2917 = vmatprep.subr.bf16.mxu0 %v2166
    %2918 = vmatpush1.bf16.msra.mxu0 %v2165
    %2919 = vmatprep.subr.bf16.mxu0 %v2174
    %2920 = vmatpush1.bf16.msra.mxu0 %v2173
    %2921 = vmatprep.subr.bf16.mxu0 %v2182
    %2922 = vmatpush1.bf16.msra.mxu0 %v2181
    %2923 = vmatprep.subr.bf16.mxu0 %v2190
    %2924 = vmatpush1.bf16.msra.mxu0 %v2189
    %2925 = vmatprep.subr.bf16.mxu0 %v2198
    %2926 = vmatpush1.bf16.msra.mxu0 %v2197
    %2927 = vmatprep.subr.bf16.mxu0 %v2206
    %2928 = vmatpush1.bf16.msra.mxu0 %v2205
    %2929 = vmatprep.subr.bf16.mxu0 %v2214
    %2930 = vmatpush1.bf16.msra.mxu0 %v2213
    %2931 = vmatprep.subr.bf16.mxu0 %v2222
    %2932 = vmatpush1.bf16.msra.mxu0 %v2221
    %2933 = vmatprep.subr.bf16.mxu0 %v2230
    %2934 = vmatpush1.bf16.msra.mxu0 %v2229
    %2935 = vmatprep.subr.bf16.mxu0 %v2238
    %2936 = vmatpush1.bf16.msra.mxu0 %v2237
    %2937 = vmatprep.subr.bf16.mxu0 %v2246
    %2938 = vmatpush1.bf16.msra.mxu0 %v2245
    %2939 = vmatprep.subr.bf16.mxu0 %v2254
    %2940 = vmatpush1.bf16.msra.mxu0 %v2253
    %2941 = vmatprep.subr.bf16.mxu0 %v2262
    %2942 = vmatpush1.bf16.msra.mxu0 %v2261
    %2943 = vmatprep.subr.bf16.mxu0 %v2270
    %2944 = vmatpush1.bf16.msra.mxu0 %v2269
    %2945 = vmatprep.subr.bf16.mxu0 %v2278
    %2946 = vmatpush1.bf16.msra.mxu0 %v2277
    %2947 = vmatprep.subr.bf16.mxu0 %v2286
    %2948 = vmatpush1.bf16.msra.mxu0 %v2285
    %2949 = vmatprep.mubr.bf16.mxu0 %v1090
    %2950 = vmatmul.mubr.bf16.gmra.mrb[0].mxu0 %v1089
    %v2951 = vpop.f32.mrb[0].mxu0
    %v2952 = vadd.f32 %v1378, %v2951
    %v2953 = vpop.f32.mrb[0].mxu0
    %v2954 = vadd.f32 %v1382, %v2953
    %v2955 = vpop.f32.mrb[0].mxu0
    %v2956 = vpop.f32.mrb[0].mxu0
    %2957 = vdwg.mxu0
    %2958 = vmatprep.subr.bf16.mxu0 %v2294
    %2959 = vmatpush1.bf16.msra.mxu0 %v2293
    %2960 = vmatprep.subr.bf16.mxu0 %v2302
    %2961 = vmatpush1.bf16.msra.mxu0 %v2301
    %2962 = vmatprep.subr.bf16.mxu0 %v2310
    %2963 = vmatpush1.bf16.msra.mxu0 %v2309
    %2964 = vmatprep.subr.bf16.mxu0 %v2318
    %2965 = vmatpush1.bf16.msra.mxu0 %v2317
    %2966 = vmatprep.subr.bf16.mxu0 %v2326
    %2967 = vmatpush1.bf16.msra.mxu0 %v2325
    %2968 = vmatprep.subr.bf16.mxu0 %v2334
    %2969 = vmatpush1.bf16.msra.mxu0 %v2333
    %2970 = vmatprep.subr.bf16.mxu0 %v2342
    %2971 = vmatpush1.bf16.msra.mxu0 %v2341
    %2972 = vmatprep.subr.bf16.mxu0 %v2350
    %2973 = vmatpush1.bf16.msra.mxu0 %v2349
    %2974 = vmatprep.subr.bf16.mxu0 %v2358
    %2975 = vmatpush1.bf16.msra.mxu0 %v2357
    %2976 = vmatprep.subr.bf16.mxu0 %v2366
    %2977 = vmatpush1.bf16.msra.mxu0 %v2365
    %2978 = vmatprep.subr.bf16.mxu0 %v2374
    %2979 = vmatpush1.bf16.msra.mxu0 %v2373
    %2980 = vmatprep.subr.bf16.mxu0 %v2382
    %2981 = vmatpush1.bf16.msra.mxu0 %v2381
    %2982 = vmatprep.subr.bf16.mxu0 %v2390
    %2983 = vmatpush1.bf16.msra.mxu0 %v2389
    %2984 = vmatprep.subr.bf16.mxu0 %v2398
    %2985 = vmatpush1.bf16.msra.mxu0 %v2397
    %2986 = vmatprep.subr.bf16.mxu0 %v2406
    %2987 = vmatpush1.bf16.msra.mxu0 %v2405
    %2988 = vmatprep.subr.bf16.mxu0 %v2414
    %2989 = vmatpush1.bf16.msra.mxu0 %v2413
    %2990 = vmatprep.mubr.bf16.mxu0 %v1092
    %2991 = vmatmul.mubr.bf16.gmra.mrb[0].mxu0 %v1091
    %v2992 = vpop.f32.mrb[0].mxu0
    %v2993 = vadd.f32 %v2952, %v2992
    %v2994 = vpop.f32.mrb[0].mxu0
    %v2995 = vadd.f32 %v2954, %v2994
    %v2996 = vpop.f32.mrb[0].mxu0
    %v2997 = vpop.f32.mrb[0].mxu0
    %2998 = vdwg.mxu0
    %v2999 = vld [vmem:[#allocation19] sm:$0xff]
    %v3000 = vld [vmem:[#allocation21] sm:$0xff]
    %v3001 = vrot.slane %v2747, 4
    %v3002 = vadd.f32 %v2747, %v3001
    %v3003 = vrot.slane %v3002, 2
    %v3004 = vadd.f32 %v3002, %v3003
    %v3005 = vrot.slane %v3004, 1
    %v3006 = vadd.f32 %v3004, %v3005
    %v3007 = vrot.slane %v2749, 4
    %v3008 = vadd.f32 %v2749, %v3007
    %v3009 = vrot.slane %v3008, 2
    %v3010 = vadd.f32 %v3008, %v3009
    %v3011 = vrot.slane %v3010, 1
    %v3012 = vadd.f32 %v3010, %v3011
    %v3013 = vrot.slane %v2829, 4
    %v3014 = vadd.f32 %v2829, %v3013
    %v3015 = vrot.slane %v3014, 2
    %v3016 = vadd.f32 %v3014, %v3015
    %v3017 = vrot.slane %v3016, 1
    %v3018 = vadd.f32 %v3016, %v3017
    %v3019 = vrot.slane %v2831, 4
    %v3020 = vadd.f32 %v2831, %v3019
    %v3021 = vrot.slane %v3020, 2
    %v3022 = vadd.f32 %v3020, %v3021
    %v3023 = vrot.slane %v3022, 1
    %v3024 = vadd.f32 %v3022, %v3023
    %v3025 = vrot.slane %v2911, 4
    %v3026 = vadd.f32 %v2911, %v3025
    %v3027 = vrot.slane %v3026, 2
    %v3028 = vadd.f32 %v3026, %v3027
    %v3029 = vrot.slane %v3028, 1
    %v3030 = vadd.f32 %v3028, %v3029
    %v3031 = vrot.slane %v2913, 4
    %v3032 = vadd.f32 %v2913, %v3031
    %v3033 = vrot.slane %v3032, 2
    %v3034 = vadd.f32 %v3032, %v3033
    %v3035 = vrot.slane %v3034, 1
    %v3036 = vadd.f32 %v3034, %v3035
    %v3037 = vrot.slane %v2993, 4
    %v3038 = vadd.f32 %v2993, %v3037
    %v3039 = vrot.slane %v3038, 2
    %v3040 = vadd.f32 %v3038, %v3039
    %v3041 = vrot.slane %v3040, 1
    %v3042 = vadd.f32 %v3040, %v3041
    %v3043 = vrot.slane %v2995, 4
    %v3044 = vadd.f32 %v2995, %v3043
    %v3045 = vrot.slane %v3044, 2
    %v3046 = vadd.f32 %v3044, %v3045
    %v3047 = vrot.slane %v3046, 1
    %v3048 = vadd.f32 %v3046, %v3047
    %v3049 = vmul.f32 %v3006, %v966
    %v3050 = vmul.f32 %v3012, %v966
    %v3051 = vmul.f32 %v3018, %v966
    %v3052 = vmul.f32 %v3024, %v966
    %v3053 = vmul.f32 %v3030, %v966
    %v3054 = vmul.f32 %v3036, %v966
    %v3055 = vmul.f32 %v3042, %v966
    %v3056 = vmul.f32 %v3048, %v966
    %v3057 = vmul.f32 %v2747, %v2747
    %v3058 = vmul.f32 %v2749, %v2749
    %v3059 = vmul.f32 %v2829, %v2829
    %v3060 = vmul.f32 %v2831, %v2831
    %v3061 = vmul.f32 %v2911, %v2911
    %v3062 = vmul.f32 %v2913, %v2913
    %v3063 = vmul.f32 %v2993, %v2993
    %v3064 = vmul.f32 %v2995, %v2995
    %v3065 = vrot.slane %v3057, 4
    %v3066 = vadd.f32 %v3057, %v3065
    %v3067 = vrot.slane %v3066, 2
    %v3068 = vadd.f32 %v3066, %v3067
    %v3069 = vrot.slane %v3068, 1
    %v3070 = vadd.f32 %v3068, %v3069
    %v3071 = vrot.slane %v3058, 4
    %v3072 = vadd.f32 %v3058, %v3071
    %v3073 = vrot.slane %v3072, 2
    %v3074 = vadd.f32 %v3072, %v3073
    %v3075 = vrot.slane %v3074, 1
    %v3076 = vadd.f32 %v3074, %v3075
    %v3077 = vrot.slane %v3059, 4
    %v3078 = vadd.f32 %v3059, %v3077
    %v3079 = vrot.slane %v3078, 2
    %v3080 = vadd.f32 %v3078, %v3079
    %v3081 = vrot.slane %v3080, 1
    %v3082 = vadd.f32 %v3080, %v3081
    %v3083 = vrot.slane %v3060, 4
    %v3084 = vadd.f32 %v3060, %v3083
    %v3085 = vrot.slane %v3084, 2
    %v3086 = vadd.f32 %v3084, %v3085
    %v3087 = vrot.slane %v3086, 1
    %v3088 = vadd.f32 %v3086, %v3087
    %v3089 = vrot.slane %v3061, 4
    %v3090 = vadd.f32 %v3061, %v3089
    %v3091 = vrot.slane %v3090, 2
    %v3092 = vadd.f32 %v3090, %v3091
    %v3093 = vrot.slane %v3092, 1
    %v3094 = vadd.f32 %v3092, %v3093
    %v3095 = vrot.slane %v3062, 4
    %v3096 = vadd.f32 %v3062, %v3095
    %v3097 = vrot.slane %v3096, 2
    %v3098 = vadd.f32 %v3096, %v3097
    %v3099 = vrot.slane %v3098, 1
    %v3100 = vadd.f32 %v3098, %v3099
    %v3101 = vrot.slane %v3063, 4
    %v3102 = vadd.f32 %v3063, %v3101
    %v3103 = vrot.slane %v3102, 2
    %v3104 = vadd.f32 %v3102, %v3103
    %v3105 = vrot.slane %v3104, 1
    %v3106 = vadd.f32 %v3104, %v3105
    %v3107 = vrot.slane %v3064, 4
    %v3108 = vadd.f32 %v3064, %v3107
    %v3109 = vrot.slane %v3108, 2
    %v3110 = vadd.f32 %v3108, %v3109
    %v3111 = vrot.slane %v3110, 1
    %v3112 = vadd.f32 %v3110, %v3111
    %v3113 = vmul.f32 %v3070, %v966
    %v3114 = vmul.f32 %v3076, %v966
    %v3115 = vmul.f32 %v3082, %v966
    %v3116 = vmul.f32 %v3088, %v966
    %v3117 = vmul.f32 %v3094, %v966
    %v3118 = vmul.f32 %v3100, %v966
    %v3119 = vmul.f32 %v3106, %v966
    %v3120 = vmul.f32 %v3112, %v966
    %v3121 = vmul.f32 %v3049, %v3049
    %v3122 = vmul.f32 %v3050, %v3050
    %v3123 = vmul.f32 %v3051, %v3051
    %v3124 = vmul.f32 %v3052, %v3052
    %v3125 = vmul.f32 %v3053, %v3053
    %v3126 = vmul.f32 %v3054, %v3054
    %v3127 = vmul.f32 %v3055, %v3055
    %v3128 = vmul.f32 %v3056, %v3056
    %v3129 = vsub.f32 %v3113, %v3121
    %v3130 = vsub.f32 %v3114, %v3122
    %v3131 = vsub.f32 %v3115, %v3123
    %v3132 = vsub.f32 %v3116, %v3124
    %v3133 = vsub.f32 %v3117, %v3125
    %v3134 = vsub.f32 %v3118, %v3126
    %v3135 = vsub.f32 %v3119, %v3127
    %v3136 = vsub.f32 %v3120, %v3128
    %v3137 = vsub.f32 %v2747, %v3049
    %v3138 = vsub.f32 %v2749, %v3050
    %v3139 = vsub.f32 %v2829, %v3051
    %v3140 = vsub.f32 %v2831, %v3052
    %v3141 = vsub.f32 %v2911, %v3053
    %v3142 = vsub.f32 %v2913, %v3054
    %v3143 = vsub.f32 %v2993, %v3055
    %v3144 = vsub.f32 %v2995, %v3056
    %v3145 = vadd.f32 %v3129, 1e-05
    %v3146 = vadd.f32 %v3130, 1e-05
    %v3147 = vadd.f32 %v3131, 1e-05
    %v3148 = vadd.f32 %v3132, 1e-05
    %v3149 = vadd.f32 %v3133, 1e-05
    %v3150 = vadd.f32 %v3134, 1e-05
    %v3151 = vadd.f32 %v3135, 1e-05
    %v3152 = vadd.f32 %v3136, 1e-05
    %v3153 = vrsqrt.pop %v3145
    %v3154 = vrsqrt.pop %v3146
    %v3155 = vrsqrt.pop %v3147
    %v3156 = vrsqrt.pop %v3148
    %v3157 = vrsqrt.pop %v3149
    %v3158 = vrsqrt.pop %v3150
    %v3159 = vrsqrt.pop %v3151
    %v3160 = vrsqrt.pop %v3152
    %v3161 = vmul.f32 %v3137, %v3153
    %v3162 = vmul.f32 %v3138, %v3154
    %v3163 = vmul.f32 %v3139, %v3155
    %v3164 = vmul.f32 %v3140, %v3156
    %v3165 = vmul.f32 %v3141, %v3157
    %v3166 = vmul.f32 %v3142, %v3158
    %v3167 = vmul.f32 %v3143, %v3159
    %v3168 = vmul.f32 %v3144, %v3160
    %v3170 = vlaneseq
    %v3171 = vshrl.u32 %v3170, 7
    %v3172 = vsub.s32 0, %v3171
    %v3173 = vrot.slane %v2999, %v3172
    %v3174 = vlaneseq
    %v3175 = vshrl.u32 %v3174, 7
    %v3176 = vsub.s32 1, %v3175
    %v3177 = vrot.slane %v2999, %v3176
    %v3178 = vlaneseq
    %v3179 = vshrl.u32 %v3178, 7
    %v3180 = vsub.s32 2, %v3179
    %v3181 = vrot.slane %v2999, %v3180
    %v3182 = vlaneseq
    %v3183 = vshrl.u32 %v3182, 7
    %v3184 = vsub.s32 3, %v3183
    %v3185 = vrot.slane %v2999, %v3184
    %v3186 = vlaneseq
    %v3187 = vshrl.u32 %v3186, 7
    %v3188 = vsub.s32 4, %v3187
    %v3189 = vrot.slane %v2999, %v3188
    %v3190 = vlaneseq
    %v3191 = vshrl.u32 %v3190, 7
    %v3192 = vsub.s32 5, %v3191
    %v3193 = vrot.slane %v2999, %v3192
    %v3194 = vlaneseq
    %v3195 = vshrl.u32 %v3194, 7
    %v3196 = vsub.s32 6, %v3195
    %v3197 = vrot.slane %v2999, %v3196
    %v3198 = vlaneseq
    %v3199 = vshrl.u32 %v3198, 7
    %v3200 = vsub.s32 7, %v3199
    %v3201 = vrot.slane %v2999, %v3200
    %v3210 = vmul.f32 %v3161, %v3173
    %v3211 = vmul.f32 %v3162, %v3177
    %v3212 = vmul.f32 %v3163, %v3181
    %v3213 = vmul.f32 %v3164, %v3185
    %v3214 = vmul.f32 %v3165, %v3189
    %v3215 = vmul.f32 %v3166, %v3193
    %v3216 = vmul.f32 %v3167, %v3197
    %v3217 = vmul.f32 %v3168, %v3201
    %v3219 = vlaneseq
    %v3220 = vshrl.u32 %v3219, 7
    %v3221 = vsub.s32 0, %v3220
    %v3222 = vrot.slane %v3000, %v3221
    %v3223 = vlaneseq
    %v3224 = vshrl.u32 %v3223, 7
    %v3225 = vsub.s32 1, %v3224
    %v3226 = vrot.slane %v3000, %v3225
    %v3227 = vlaneseq
    %v3228 = vshrl.u32 %v3227, 7
    %v3229 = vsub.s32 2, %v3228
    %v3230 = vrot.slane %v3000, %v3229
    %v3231 = vlaneseq
    %v3232 = vshrl.u32 %v3231, 7
    %v3233 = vsub.s32 3, %v3232
    %v3234 = vrot.slane %v3000, %v3233
    %v3235 = vlaneseq
    %v3236 = vshrl.u32 %v3235, 7
    %v3237 = vsub.s32 4, %v3236
    %v3238 = vrot.slane %v3000, %v3237
    %v3239 = vlaneseq
    %v3240 = vshrl.u32 %v3239, 7
    %v3241 = vsub.s32 5, %v3240
    %v3242 = vrot.slane %v3000, %v3241
    %v3243 = vlaneseq
    %v3244 = vshrl.u32 %v3243, 7
    %v3245 = vsub.s32 6, %v3244
    %v3246 = vrot.slane %v3000, %v3245
    %v3247 = vlaneseq
    %v3248 = vshrl.u32 %v3247, 7
    %v3249 = vsub.s32 7, %v3248
    %v3250 = vrot.slane %v3000, %v3249
    %v3259 = vadd.f32 %v3210, %v3222
    %v3260 = vadd.f32 %v3211, %v3226
    %v3261 = vadd.f32 %v3212, %v3230
    %v3262 = vadd.f32 %v3213, %v3234
    %v3263 = vadd.f32 %v3214, %v3238
    %v3264 = vadd.f32 %v3215, %v3242
    %v3265 = vadd.f32 %v3216, %v3246
    %v3266 = vadd.f32 %v3217, %v3250
    %vm3267 = vcmp.gt.f32.partialorder %v3259, 0.0
    %vm3268 = vcmp.gt.f32.partialorder %v3260, 0.0
    %vm3269 = vcmp.gt.f32.partialorder %v3261, 0.0
    %vm3270 = vcmp.gt.f32.partialorder %v3262, 0.0
    %vm3271 = vcmp.gt.f32.partialorder %v3263, 0.0
    %vm3272 = vcmp.gt.f32.partialorder %v3264, 0.0
    %vm3273 = vcmp.gt.f32.partialorder %v3265, 0.0
    %vm3274 = vcmp.gt.f32.partialorder %v3266, 0.0
    %v3275 = vmul.f32 %v3259, 0.2
    %v3276 = vmul.f32 %v3260, 0.2
    %v3277 = vmul.f32 %v3261, 0.2
    %v3278 = vmul.f32 %v3262, 0.2
    %v3279 = vmul.f32 %v3263, 0.2
    %v3280 = vmul.f32 %v3264, 0.2
    %v3281 = vmul.f32 %v3265, 0.2
    %v3282 = vmul.f32 %v3266, 0.2
    %v3283 = vsel %vm3267, %v3259, %v3275
    %v3284 = vsel %vm3268, %v3260, %v3276
    %v3285 = vsel %vm3269, %v3261, %v3277
    %v3286 = vsel %vm3270, %v3262, %v3278
    %v3287 = vsel %vm3271, %v3263, %v3279
    %v3288 = vsel %vm3272, %v3264, %v3280
    %v3289 = vsel %vm3273, %v3265, %v3281
    %v3290 = vsel %vm3274, %v3266, %v3282
    %v3291 = vpack.c.bf16 %v3283, %v3283
    %v3292 = vpack.c.bf16 %v3284, %v3284
    %v3293 = vpack.c.bf16 %v3285, %v3285
    %v3294 = vpack.c.bf16 %v3286, %v3286
    %v3295 = vpack.c.bf16 %v3287, %v3287
    %v3296 = vpack.c.bf16 %v3288, %v3288
    %v3297 = vpack.c.bf16 %v3289, %v3289
    %v3298 = vpack.c.bf16 %v3290, %v3290
    %v3299 = vld [vmem:[#allocation22] sm:$0xff]
    %v3300 = vld [vmem:[#allocation22 + $0x8] sm:$0xff]
    %v3301 = vld [vmem:[#allocation22 + $0x10] sm:$0xff]
    %v3302 = vld [vmem:[#allocation22 + $0x18] sm:$0xf]
    %v3303 = vld [vmem:[#allocation22 + $0x1c] sm:$0xff]
    %v3304 = vld [vmem:[#allocation22 + $0x24] sm:$0xff]
    %v3305 = vld [vmem:[#allocation22 + $0x2c] sm:$0xff]
    %v3306 = vld [vmem:[#allocation22 + $0x34] sm:$0xf]
    %v3307 = vld [vmem:[#allocation22 + $0x38] sm:$0xff]
    %v3308 = vld [vmem:[#allocation22 + $0x40] sm:$0xff]
    %v3309 = vld [vmem:[#allocation22 + $0x48] sm:$0xff]
    %v3310 = vld [vmem:[#allocation22 + $0x50] sm:$0xf]
    %v3311 = vld [vmem:[#allocation22 + $0x54] sm:$0xff]
    %v3312 = vld [vmem:[#allocation22 + $0x5c] sm:$0xff]
    %v3313 = vld [vmem:[#allocation22 + $0x64] sm:$0xff]
    %v3314 = vld [vmem:[#allocation22 + $0x6c] sm:$0xf]
    %v3315 = vld [vmem:[#allocation22 + $0x70] sm:$0xff]
    %v3316 = vld [vmem:[#allocation22 + $0x78] sm:$0xff]
    %v3317 = vld [vmem:[#allocation22 + $0x80] sm:$0xff]
    %v3318 = vld [vmem:[#allocation22 + $0x88] sm:$0xf]
    %v3319 = vld [vmem:[#allocation22 + $0x8c] sm:$0xff]
    %v3320 = vld [vmem:[#allocation22 + $0x94] sm:$0xff]
    %v3321 = vld [vmem:[#allocation22 + $0x9c] sm:$0xff]
    %v3322 = vld [vmem:[#allocation22 + $0xa4] sm:$0xf]
    %v3323 = vld [vmem:[#allocation22 + $0xa8] sm:$0xff]
    %v3324 = vld [vmem:[#allocation22 + $0xb0] sm:$0xff]
    %v3325 = vld [vmem:[#allocation22 + $0xb8] sm:$0xff]
    %v3326 = vld [vmem:[#allocation22 + $0xc0] sm:$0xf]
    %v3327 = vld [vmem:[#allocation22 + $0xc4] sm:$0xff]
    %v3328 = vld [vmem:[#allocation22 + $0xcc] sm:$0xff]
    %v3329 = vld [vmem:[#allocation22 + $0xd4] sm:$0xff]
    %v3330 = vld [vmem:[#allocation22 + $0xdc] sm:$0xf]
    %v3331 = vld [vmem:[#allocation22 + $0xe0] sm:$0xff]
    %v3332 = vld [vmem:[#allocation22 + $0xe8] sm:$0xff]
    %v3333 = vld [vmem:[#allocation22 + $0xf0] sm:$0xff]
    %v3334 = vld [vmem:[#allocation22 + $0xf8] sm:$0xf]
    %v3335 = vld [vmem:[#allocation22 + $0xfc] sm:$0xff]
    %v3336 = vld [vmem:[#allocation22 + $0x104] sm:$0xff]
    %v3337 = vld [vmem:[#allocation22 + $0x10c] sm:$0xff]
    %v3338 = vld [vmem:[#allocation22 + $0x114] sm:$0xf]
    %v3339 = vld [vmem:[#allocation22 + $0x118] sm:$0xff]
    %v3340 = vld [vmem:[#allocation22 + $0x120] sm:$0xff]
    %v3341 = vld [vmem:[#allocation22 + $0x128] sm:$0xff]
    %v3342 = vld [vmem:[#allocation22 + $0x130] sm:$0xf]
    %v3343 = vld [vmem:[#allocation22 + $0x134] sm:$0xff]
    %v3344 = vld [vmem:[#allocation22 + $0x13c] sm:$0xff]
    %v3345 = vld [vmem:[#allocation22 + $0x144] sm:$0xff]
    %v3346 = vld [vmem:[#allocation22 + $0x14c] sm:$0xf]
    %v3347 = vld [vmem:[#allocation22 + $0x150] sm:$0xff]
    %v3348 = vld [vmem:[#allocation22 + $0x158] sm:$0xff]
    %v3349 = vld [vmem:[#allocation22 + $0x160] sm:$0xff]
    %v3350 = vld [vmem:[#allocation22 + $0x168] sm:$0xf]
    %v3351 = vld [vmem:[#allocation22 + $0x16c] sm:$0xff]
    %v3352 = vld [vmem:[#allocation22 + $0x174] sm:$0xff]
    %v3353 = vld [vmem:[#allocation22 + $0x17c] sm:$0xff]
    %v3354 = vld [vmem:[#allocation22 + $0x184] sm:$0xf]
    %v3355 = vld [vmem:[#allocation22 + $0x188] sm:$0xff]
    %v3356 = vld [vmem:[#allocation22 + $0x190] sm:$0xff]
    %v3357 = vld [vmem:[#allocation22 + $0x198] sm:$0xff]
    %v3358 = vld [vmem:[#allocation22 + $0x1a0] sm:$0xf]
    %v3359 = vld [vmem:[#allocation22 + $0x1a4] sm:$0xff]
    %v3360 = vld [vmem:[#allocation22 + $0x1ac] sm:$0xff]
    %v3361 = vld [vmem:[#allocation22 + $0x1b4] sm:$0xff]
    %v3362 = vld [vmem:[#allocation22 + $0x1bc] sm:$0xf]
    %v3363 = vld [vmem:[#allocation22 + $0x1c0] sm:$0xff]
    %v3364 = vld [vmem:[#allocation22 + $0x1c8] sm:$0xff]
    %v3365 = vld [vmem:[#allocation22 + $0x1d0] sm:$0xff]
    %v3366 = vld [vmem:[#allocation22 + $0x1d8] sm:$0xf]
    %v3367 = vld [vmem:[#allocation22 + $0x1dc] sm:$0xff]
    %v3368 = vld [vmem:[#allocation22 + $0x1e4] sm:$0xff]
    %v3369 = vld [vmem:[#allocation22 + $0x1ec] sm:$0xff]
    %v3370 = vld [vmem:[#allocation22 + $0x1f4] sm:$0xf]
    %v3371 = vld [vmem:[#allocation22 + $0x1f8] sm:$0xff]
    %v3372 = vld [vmem:[#allocation22 + $0x200] sm:$0xff]
    %v3373 = vld [vmem:[#allocation22 + $0x208] sm:$0xff]
    %v3374 = vld [vmem:[#allocation22 + $0x210] sm:$0xf]
    %v3375 = vld [vmem:[#allocation22 + $0x214] sm:$0xff]
    %v3376 = vld [vmem:[#allocation22 + $0x21c] sm:$0xff]
    %v3377 = vld [vmem:[#allocation22 + $0x224] sm:$0xff]
    %v3378 = vld [vmem:[#allocation22 + $0x22c] sm:$0xf]
    %v3379 = vld [vmem:[#allocation22 + $0x230] sm:$0xff]
    %v3380 = vld [vmem:[#allocation22 + $0x238] sm:$0xff]
    %v3381 = vld [vmem:[#allocation22 + $0x240] sm:$0xff]
    %v3382 = vld [vmem:[#allocation22 + $0x248] sm:$0xf]
    %v3383 = vld [vmem:[#allocation22 + $0x24c] sm:$0xff]
    %v3384 = vld [vmem:[#allocation22 + $0x254] sm:$0xff]
    %v3385 = vld [vmem:[#allocation22 + $0x25c] sm:$0xff]
    %v3386 = vld [vmem:[#allocation22 + $0x264] sm:$0xf]
    %v3387 = vld [vmem:[#allocation22 + $0x268] sm:$0xff]
    %v3388 = vld [vmem:[#allocation22 + $0x270] sm:$0xff]
    %v3389 = vld [vmem:[#allocation22 + $0x278] sm:$0xff]
    %v3390 = vld [vmem:[#allocation22 + $0x280] sm:$0xf]
    %v3391 = vld [vmem:[#allocation22 + $0x284] sm:$0xff]
    %v3392 = vld [vmem:[#allocation22 + $0x28c] sm:$0xff]
    %v3393 = vld [vmem:[#allocation22 + $0x294] sm:$0xff]
    %v3394 = vld [vmem:[#allocation22 + $0x29c] sm:$0xf]
    %v3395 = vld [vmem:[#allocation22 + $0x2a0] sm:$0xff]
    %v3396 = vld [vmem:[#allocation22 + $0x2a8] sm:$0xff]
    %v3397 = vld [vmem:[#allocation22 + $0x2b0] sm:$0xff]
    %v3398 = vld [vmem:[#allocation22 + $0x2b8] sm:$0xf]
    %v3399 = vld [vmem:[#allocation22 + $0x2bc] sm:$0xff]
    %v3400 = vld [vmem:[#allocation22 + $0x2c4] sm:$0xff]
    %v3401 = vld [vmem:[#allocation22 + $0x2cc] sm:$0xff]
    %v3402 = vld [vmem:[#allocation22 + $0x2d4] sm:$0xf]
    %v3403 = vld [vmem:[#allocation22 + $0x2d8] sm:$0xff]
    %v3404 = vld [vmem:[#allocation22 + $0x2e0] sm:$0xff]
    %v3405 = vld [vmem:[#allocation22 + $0x2e8] sm:$0xff]
    %v3406 = vld [vmem:[#allocation22 + $0x2f0] sm:$0xf]
    %v3407 = vld [vmem:[#allocation22 + $0x2f4] sm:$0xff]
    %v3408 = vld [vmem:[#allocation22 + $0x2fc] sm:$0xff]
    %v3409 = vld [vmem:[#allocation22 + $0x304] sm:$0xff]
    %v3410 = vld [vmem:[#allocation22 + $0x30c] sm:$0xf]
    %v3411 = vld [vmem:[#allocation22 + $0x310] sm:$0xff]
    %v3412 = vld [vmem:[#allocation22 + $0x318] sm:$0xff]
    %v3413 = vld [vmem:[#allocation22 + $0x320] sm:$0xff]
    %v3414 = vld [vmem:[#allocation22 + $0x328] sm:$0xf]
    %v3415 = vld [vmem:[#allocation22 + $0x32c] sm:$0xff]
    %v3416 = vld [vmem:[#allocation22 + $0x334] sm:$0xff]
    %v3417 = vld [vmem:[#allocation22 + $0x33c] sm:$0xff]
    %v3418 = vld [vmem:[#allocation22 + $0x344] sm:$0xf]
    %v3419 = vld [vmem:[#allocation22 + $0x348] sm:$0xff]
    %v3420 = vld [vmem:[#allocation22 + $0x350] sm:$0xff]
    %v3421 = vld [vmem:[#allocation22 + $0x358] sm:$0xff]
    %v3422 = vld [vmem:[#allocation22 + $0x360] sm:$0xf]
    %v3423 = vld [vmem:[#allocation22 + $0x364] sm:$0xff]
    %v3424 = vld [vmem:[#allocation22 + $0x36c] sm:$0xff]
    %v3425 = vld [vmem:[#allocation22 + $0x374] sm:$0xff]
    %v3426 = vld [vmem:[#allocation22 + $0x37c] sm:$0xf]
    %v3427 = vld [vmem:[#allocation22 + $0x380] sm:$0xff]
    %v3428 = vld [vmem:[#allocation22 + $0x388] sm:$0xff]
    %v3429 = vld [vmem:[#allocation22 + $0x390] sm:$0xff]
    %v3430 = vld [vmem:[#allocation22 + $0x398] sm:$0xf]
    %v3431 = vld [vmem:[#allocation22 + $0x39c] sm:$0xff]
    %v3432 = vld [vmem:[#allocation22 + $0x3a4] sm:$0xff]
    %v3433 = vld [vmem:[#allocation22 + $0x3ac] sm:$0xff]
    %v3434 = vld [vmem:[#allocation22 + $0x3b4] sm:$0xf]
    %v3435 = vld [vmem:[#allocation22 + $0x3b8] sm:$0xff]
    %v3436 = vld [vmem:[#allocation22 + $0x3c0] sm:$0xff]
    %v3437 = vld [vmem:[#allocation22 + $0x3c8] sm:$0xff]
    %v3438 = vld [vmem:[#allocation22 + $0x3d0] sm:$0xf]
    %v3439 = vld [vmem:[#allocation22 + $0x3d4] sm:$0xff]
    %v3440 = vld [vmem:[#allocation22 + $0x3dc] sm:$0xff]
    %v3441 = vld [vmem:[#allocation22 + $0x3e4] sm:$0xff]
    %v3442 = vld [vmem:[#allocation22 + $0x3ec] sm:$0xf]
    %v3443 = vld [vmem:[#allocation22 + $0x3f0] sm:$0xff]
    %v3444 = vld [vmem:[#allocation22 + $0x3f8] sm:$0xff]
    %v3445 = vld [vmem:[#allocation22 + $0x400] sm:$0xff]
    %v3446 = vld [vmem:[#allocation22 + $0x408] sm:$0xf]
    %v3447 = vld [vmem:[#allocation22 + $0x40c] sm:$0xff]
    %v3448 = vld [vmem:[#allocation22 + $0x414] sm:$0xff]
    %v3449 = vld [vmem:[#allocation22 + $0x41c] sm:$0xff]
    %v3450 = vld [vmem:[#allocation22 + $0x424] sm:$0xf]
    %v3451 = vld [vmem:[#allocation22 + $0x428] sm:$0xff]
    %v3452 = vld [vmem:[#allocation22 + $0x430] sm:$0xff]
    %v3453 = vld [vmem:[#allocation22 + $0x438] sm:$0xff]
    %v3454 = vld [vmem:[#allocation22 + $0x440] sm:$0xf]
    %v3455 = vld [vmem:[#allocation22 + $0x444] sm:$0xff]
    %v3456 = vld [vmem:[#allocation22 + $0x44c] sm:$0xff]
    %v3457 = vld [vmem:[#allocation22 + $0x454] sm:$0xff]
    %v3458 = vld [vmem:[#allocation22 + $0x45c] sm:$0xf]
    %v3459 = vld [vmem:[#allocation22 + $0x460] sm:$0xff]
    %v3460 = vld [vmem:[#allocation22 + $0x468] sm:$0xff]
    %v3461 = vld [vmem:[#allocation22 + $0x470] sm:$0xff]
    %v3462 = vld [vmem:[#allocation22 + $0x478] sm:$0xf]
    %v3463 = vld [vmem:[#allocation22 + $0x47c] sm:$0xff]
    %v3464 = vld [vmem:[#allocation22 + $0x484] sm:$0xff]
    %v3465 = vld [vmem:[#allocation22 + $0x48c] sm:$0xff]
    %v3466 = vld [vmem:[#allocation22 + $0x494] sm:$0xf]
    %v3467 = vld [vmem:[#allocation22 + $0x498] sm:$0xff]
    %v3468 = vld [vmem:[#allocation22 + $0x4a0] sm:$0xff]
    %v3469 = vld [vmem:[#allocation22 + $0x4a8] sm:$0xff]
    %v3470 = vld [vmem:[#allocation22 + $0x4b0] sm:$0xf]
    %v3471 = vld [vmem:[#allocation22 + $0x4b4] sm:$0xff]
    %v3472 = vld [vmem:[#allocation22 + $0x4bc] sm:$0xff]
    %v3473 = vld [vmem:[#allocation22 + $0x4c4] sm:$0xff]
    %v3474 = vld [vmem:[#allocation22 + $0x4cc] sm:$0xf]
    %v3475 = vld [vmem:[#allocation22 + $0x4d0] sm:$0xff]
    %v3476 = vld [vmem:[#allocation22 + $0x4d8] sm:$0xff]
    %v3477 = vld [vmem:[#allocation22 + $0x4e0] sm:$0xff]
    %v3478 = vld [vmem:[#allocation22 + $0x4e8] sm:$0xf]
    %v3479 = vld [vmem:[#allocation22 + $0x4ec] sm:$0xff]
    %v3480 = vld [vmem:[#allocation22 + $0x4f4] sm:$0xff]
    %v3481 = vld [vmem:[#allocation22 + $0x4fc] sm:$0xff]
    %v3482 = vld [vmem:[#allocation22 + $0x504] sm:$0xf]
    %v3483 = vld [vmem:[#allocation22 + $0x508] sm:$0xff]
    %v3484 = vld [vmem:[#allocation22 + $0x510] sm:$0xff]
    %v3485 = vld [vmem:[#allocation22 + $0x518] sm:$0xff]
    %v3486 = vld [vmem:[#allocation22 + $0x520] sm:$0xf]
    %v3487 = vld [vmem:[#allocation22 + $0x524] sm:$0xff]
    %v3488 = vld [vmem:[#allocation22 + $0x52c] sm:$0xff]
    %v3489 = vld [vmem:[#allocation22 + $0x534] sm:$0xff]
    %v3490 = vld [vmem:[#allocation22 + $0x53c] sm:$0xf]
    %v3491 = vld [vmem:[#allocation22 + $0x540] sm:$0xff]
    %v3492 = vld [vmem:[#allocation22 + $0x548] sm:$0xff]
    %v3493 = vld [vmem:[#allocation22 + $0x550] sm:$0xff]
    %v3494 = vld [vmem:[#allocation22 + $0x558] sm:$0xf]
    %v3495 = vld [vmem:[#allocation22 + $0x55c] sm:$0xff]
    %v3496 = vld [vmem:[#allocation22 + $0x564] sm:$0xff]
    %v3497 = vld [vmem:[#allocation22 + $0x56c] sm:$0xff]
    %v3498 = vld [vmem:[#allocation22 + $0x574] sm:$0xf]
    %v3499 = vld [vmem:[#allocation22 + $0x578] sm:$0xff]
    %v3500 = vld [vmem:[#allocation22 + $0x580] sm:$0xff]
    %v3501 = vld [vmem:[#allocation22 + $0x588] sm:$0xff]
    %v3502 = vld [vmem:[#allocation22 + $0x590] sm:$0xf]
    %v3503 = vld [vmem:[#allocation22 + $0x594] sm:$0xff]
    %v3504 = vld [vmem:[#allocation22 + $0x59c] sm:$0xff]
    %v3505 = vld [vmem:[#allocation22 + $0x5a4] sm:$0xff]
    %v3506 = vld [vmem:[#allocation22 + $0x5ac] sm:$0xf]
    %v3507 = vld [vmem:[#allocation22 + $0x5b0] sm:$0xff]
    %v3508 = vld [vmem:[#allocation22 + $0x5b8] sm:$0xff]
    %v3509 = vld [vmem:[#allocation22 + $0x5c0] sm:$0xff]
    %v3510 = vld [vmem:[#allocation22 + $0x5c8] sm:$0xf]
    %v3511 = vld [vmem:[#allocation22 + $0x5cc] sm:$0xff]
    %v3512 = vld [vmem:[#allocation22 + $0x5d4] sm:$0xff]
    %v3513 = vld [vmem:[#allocation22 + $0x5dc] sm:$0xff]
    %v3514 = vld [vmem:[#allocation22 + $0x5e4] sm:$0xf]
    %v3515 = vld [vmem:[#allocation22 + $0x5e8] sm:$0xff]
    %v3516 = vld [vmem:[#allocation22 + $0x5f0] sm:$0xff]
    %v3517 = vld [vmem:[#allocation22 + $0x5f8] sm:$0xff]
    %v3518 = vld [vmem:[#allocation22 + $0x600] sm:$0xf]
    %v3519 = vld [vmem:[#allocation22 + $0x604] sm:$0xff]
    %v3520 = vld [vmem:[#allocation22 + $0x60c] sm:$0xff]
    %v3521 = vld [vmem:[#allocation22 + $0x614] sm:$0xff]
    %v3522 = vld [vmem:[#allocation22 + $0x61c] sm:$0xf]
    %v3523 = vld [vmem:[#allocation22 + $0x620] sm:$0xff]
    %v3524 = vld [vmem:[#allocation22 + $0x628] sm:$0xff]
    %v3525 = vld [vmem:[#allocation22 + $0x630] sm:$0xff]
    %v3526 = vld [vmem:[#allocation22 + $0x638] sm:$0xf]
    %v3527 = vld [vmem:[#allocation22 + $0x63c] sm:$0xff]
    %v3528 = vld [vmem:[#allocation22 + $0x644] sm:$0xff]
    %v3529 = vld [vmem:[#allocation22 + $0x64c] sm:$0xff]
    %v3530 = vld [vmem:[#allocation22 + $0x654] sm:$0xf]
    %v3531 = vld [vmem:[#allocation22 + $0x658] sm:$0xff]
    %v3532 = vld [vmem:[#allocation22 + $0x660] sm:$0xff]
    %v3533 = vld [vmem:[#allocation22 + $0x668] sm:$0xff]
    %v3534 = vld [vmem:[#allocation22 + $0x670] sm:$0xf]
    %v3535 = vld [vmem:[#allocation22 + $0x674] sm:$0xff]
    %v3536 = vld [vmem:[#allocation22 + $0x67c] sm:$0xff]
    %v3537 = vld [vmem:[#allocation22 + $0x684] sm:$0xff]
    %v3538 = vld [vmem:[#allocation22 + $0x68c] sm:$0xf]
    %v3539 = vld [vmem:[#allocation22 + $0x690] sm:$0xff]
    %v3540 = vld [vmem:[#allocation22 + $0x698] sm:$0xff]
    %v3541 = vld [vmem:[#allocation22 + $0x6a0] sm:$0xff]
    %v3542 = vld [vmem:[#allocation22 + $0x6a8] sm:$0xf]
    %v3543 = vld [vmem:[#allocation22 + $0x6ac] sm:$0xff]
    %v3544 = vld [vmem:[#allocation22 + $0x6b4] sm:$0xff]
    %v3545 = vld [vmem:[#allocation22 + $0x6bc] sm:$0xff]
    %v3546 = vld [vmem:[#allocation22 + $0x6c4] sm:$0xf]
    %v3547 = vld [vmem:[#allocation22 + $0x6c8] sm:$0xff]
    %v3548 = vld [vmem:[#allocation22 + $0x6d0] sm:$0xff]
    %v3549 = vld [vmem:[#allocation22 + $0x6d8] sm:$0xff]
    %v3550 = vld [vmem:[#allocation22 + $0x6e0] sm:$0xf]
    %v3551 = vld [vmem:[#allocation22 + $0x6e4] sm:$0xff]
    %v3552 = vld [vmem:[#allocation22 + $0x6ec] sm:$0xff]
    %v3553 = vld [vmem:[#allocation22 + $0x6f4] sm:$0xff]
    %v3554 = vld [vmem:[#allocation22 + $0x6fc] sm:$0xf]
    %v3555 = vld [vmem:[#allocation22 + $0x700] sm:$0xff]
    %v3556 = vld [vmem:[#allocation22 + $0x708] sm:$0xff]
    %v3557 = vld [vmem:[#allocation22 + $0x710] sm:$0xff]
    %v3558 = vld [vmem:[#allocation22 + $0x718] sm:$0xf]
    %v3559 = vld [vmem:[#allocation22 + $0x71c] sm:$0xff]
    %v3560 = vld [vmem:[#allocation22 + $0x724] sm:$0xff]
    %v3561 = vld [vmem:[#allocation22 + $0x72c] sm:$0xff]
    %v3562 = vld [vmem:[#allocation22 + $0x734] sm:$0xf]
    %v3563 = vld [vmem:[#allocation22 + $0x738] sm:$0xff]
    %v3564 = vld [vmem:[#allocation22 + $0x740] sm:$0xff]
    %v3565 = vld [vmem:[#allocation22 + $0x748] sm:$0xff]
    %v3566 = vld [vmem:[#allocation22 + $0x750] sm:$0xf]
    %v3567 = vld [vmem:[#allocation22 + $0x754] sm:$0xff]
    %v3568 = vld [vmem:[#allocation22 + $0x75c] sm:$0xff]
    %v3569 = vld [vmem:[#allocation22 + $0x764] sm:$0xff]
    %v3570 = vld [vmem:[#allocation22 + $0x76c] sm:$0xf]
    %v3571 = vld [vmem:[#allocation22 + $0x770] sm:$0xff]
    %v3572 = vld [vmem:[#allocation22 + $0x778] sm:$0xff]
    %v3573 = vld [vmem:[#allocation22 + $0x780] sm:$0xff]
    %v3574 = vld [vmem:[#allocation22 + $0x788] sm:$0xf]
    %v3575 = vld [vmem:[#allocation22 + $0x78c] sm:$0xff]
    %v3576 = vld [vmem:[#allocation22 + $0x794] sm:$0xff]
    %v3577 = vld [vmem:[#allocation22 + $0x79c] sm:$0xff]
    %v3578 = vld [vmem:[#allocation22 + $0x7a4] sm:$0xf]
    %v3579 = vld [vmem:[#allocation22 + $0x7a8] sm:$0xff]
    %v3580 = vld [vmem:[#allocation22 + $0x7b0] sm:$0xff]
    %v3581 = vld [vmem:[#allocation22 + $0x7b8] sm:$0xff]
    %v3582 = vld [vmem:[#allocation22 + $0x7c0] sm:$0xf]
    %v3583 = vld [vmem:[#allocation22 + $0x7c4] sm:$0xff]
    %v3584 = vld [vmem:[#allocation22 + $0x7cc] sm:$0xff]
    %v3585 = vld [vmem:[#allocation22 + $0x7d4] sm:$0xff]
    %v3586 = vld [vmem:[#allocation22 + $0x7dc] sm:$0xf]
    %v3587 = vld [vmem:[#allocation22 + $0x7e0] sm:$0xff]
    %v3588 = vld [vmem:[#allocation22 + $0x7e8] sm:$0xff]
    %v3589 = vld [vmem:[#allocation22 + $0x7f0] sm:$0xff]
    %v3590 = vld [vmem:[#allocation22 + $0x7f8] sm:$0xf]
    %v3591 = vld [vmem:[#allocation22 + $0x7fc] sm:$0xff]
    %v3592 = vld [vmem:[#allocation22 + $0x804] sm:$0xff]
    %v3593 = vld [vmem:[#allocation22 + $0x80c] sm:$0xff]
    %v3594 = vld [vmem:[#allocation22 + $0x814] sm:$0xf]
    %v3595 = vld [vmem:[#allocation22 + $0x818] sm:$0xff]
    %v3596 = vld [vmem:[#allocation22 + $0x820] sm:$0xff]
    %v3597 = vld [vmem:[#allocation22 + $0x828] sm:$0xff]
    %v3598 = vld [vmem:[#allocation22 + $0x830] sm:$0xf]
    %v3599 = vld [vmem:[#allocation22 + $0x834] sm:$0xff]
    %v3600 = vld [vmem:[#allocation22 + $0x83c] sm:$0xff]
    %v3601 = vld [vmem:[#allocation22 + $0x844] sm:$0xff]
    %v3602 = vld [vmem:[#allocation22 + $0x84c] sm:$0xf]
    %v3603 = vld [vmem:[#allocation22 + $0x850] sm:$0xff]
    %v3604 = vld [vmem:[#allocation22 + $0x858] sm:$0xff]
    %v3605 = vld [vmem:[#allocation22 + $0x860] sm:$0xff]
    %v3606 = vld [vmem:[#allocation22 + $0x868] sm:$0xf]
    %v3607 = vld [vmem:[#allocation22 + $0x86c] sm:$0xff]
    %v3608 = vld [vmem:[#allocation22 + $0x874] sm:$0xff]
    %v3609 = vld [vmem:[#allocation22 + $0x87c] sm:$0xff]
    %v3610 = vld [vmem:[#allocation22 + $0x884] sm:$0xf]
    %v3611 = vld [vmem:[#allocation22 + $0x888] sm:$0xff]
    %v3612 = vld [vmem:[#allocation22 + $0x890] sm:$0xff]
    %v3613 = vld [vmem:[#allocation22 + $0x898] sm:$0xff]
    %v3614 = vld [vmem:[#allocation22 + $0x8a0] sm:$0xf]
    %v3615 = vld [vmem:[#allocation22 + $0x8a4] sm:$0xff]
    %v3616 = vld [vmem:[#allocation22 + $0x8ac] sm:$0xff]
    %v3617 = vld [vmem:[#allocation22 + $0x8b4] sm:$0xff]
    %v3618 = vld [vmem:[#allocation22 + $0x8bc] sm:$0xf]
    %v3619 = vld [vmem:[#allocation22 + $0x8c0] sm:$0xff]
    %v3620 = vld [vmem:[#allocation22 + $0x8c8] sm:$0xff]
    %v3621 = vld [vmem:[#allocation22 + $0x8d0] sm:$0xff]
    %v3622 = vld [vmem:[#allocation22 + $0x8d8] sm:$0xf]
    %v3623 = vld [vmem:[#allocation22 + $0x8dc] sm:$0xff]
    %v3624 = vld [vmem:[#allocation22 + $0x8e4] sm:$0xff]
    %v3625 = vld [vmem:[#allocation22 + $0x8ec] sm:$0xff]
    %v3626 = vld [vmem:[#allocation22 + $0x8f4] sm:$0xf]
    %v3627 = vld [vmem:[#allocation22 + $0x8f8] sm:$0xff]
    %v3628 = vld [vmem:[#allocation22 + $0x900] sm:$0xff]
    %v3629 = vld [vmem:[#allocation22 + $0x908] sm:$0xff]
    %v3630 = vld [vmem:[#allocation22 + $0x910] sm:$0xf]
    %v3631 = vld [vmem:[#allocation22 + $0x914] sm:$0xff]
    %v3632 = vld [vmem:[#allocation22 + $0x91c] sm:$0xff]
    %v3633 = vld [vmem:[#allocation22 + $0x924] sm:$0xff]
    %v3634 = vld [vmem:[#allocation22 + $0x92c] sm:$0xf]
    %v3635 = vld [vmem:[#allocation22 + $0x930] sm:$0xff]
    %v3636 = vld [vmem:[#allocation22 + $0x938] sm:$0xff]
    %v3637 = vld [vmem:[#allocation22 + $0x940] sm:$0xff]
    %v3638 = vld [vmem:[#allocation22 + $0x948] sm:$0xf]
    %v3639 = vld [vmem:[#allocation22 + $0x94c] sm:$0xff]
    %v3640 = vld [vmem:[#allocation22 + $0x954] sm:$0xff]
    %v3641 = vld [vmem:[#allocation22 + $0x95c] sm:$0xff]
    %v3642 = vld [vmem:[#allocation22 + $0x964] sm:$0xf]
    %v3643 = vld [vmem:[#allocation22 + $0x968] sm:$0xff]
    %v3644 = vld [vmem:[#allocation22 + $0x970] sm:$0xff]
    %v3645 = vld [vmem:[#allocation22 + $0x978] sm:$0xff]
    %v3646 = vld [vmem:[#allocation22 + $0x980] sm:$0xf]
    %v3647 = vld [vmem:[#allocation22 + $0x984] sm:$0xff]
    %v3648 = vld [vmem:[#allocation22 + $0x98c] sm:$0xff]
    %v3649 = vld [vmem:[#allocation22 + $0x994] sm:$0xff]
    %v3650 = vld [vmem:[#allocation22 + $0x99c] sm:$0xf]
    %v3651 = vld [vmem:[#allocation22 + $0x9a0] sm:$0xff]
    %v3652 = vld [vmem:[#allocation22 + $0x9a8] sm:$0xff]
    %v3653 = vld [vmem:[#allocation22 + $0x9b0] sm:$0xff]
    %v3654 = vld [vmem:[#allocation22 + $0x9b8] sm:$0xf]
    %v3655 = vld [vmem:[#allocation22 + $0x9bc] sm:$0xff]
    %v3656 = vld [vmem:[#allocation22 + $0x9c4] sm:$0xff]
    %v3657 = vld [vmem:[#allocation22 + $0x9cc] sm:$0xff]
    %v3658 = vld [vmem:[#allocation22 + $0x9d4] sm:$0xf]
    %v3659 = vld [vmem:[#allocation22 + $0x9d8] sm:$0xff]
    %v3660 = vld [vmem:[#allocation22 + $0x9e0] sm:$0xff]
    %v3661 = vld [vmem:[#allocation22 + $0x9e8] sm:$0xff]
    %v3662 = vld [vmem:[#allocation22 + $0x9f0] sm:$0xf]
    %v3663 = vld [vmem:[#allocation22 + $0x9f4] sm:$0xff]
    %v3664 = vld [vmem:[#allocation22 + $0x9fc] sm:$0xff]
    %v3665 = vld [vmem:[#allocation22 + $0xa04] sm:$0xff]
    %v3666 = vld [vmem:[#allocation22 + $0xa0c] sm:$0xf]
    %v3667 = vld [vmem:[#allocation22 + $0xa10] sm:$0xff]
    %v3668 = vld [vmem:[#allocation22 + $0xa18] sm:$0xff]
    %v3669 = vld [vmem:[#allocation22 + $0xa20] sm:$0xff]
    %v3670 = vld [vmem:[#allocation22 + $0xa28] sm:$0xf]
    %v3671 = vld [vmem:[#allocation22 + $0xa2c] sm:$0xff]
    %v3672 = vld [vmem:[#allocation22 + $0xa34] sm:$0xff]
    %v3673 = vld [vmem:[#allocation22 + $0xa3c] sm:$0xff]
    %v3674 = vld [vmem:[#allocation22 + $0xa44] sm:$0xf]
    %v3675 = vld [vmem:[#allocation22 + $0xa48] sm:$0xff]
    %v3676 = vld [vmem:[#allocation22 + $0xa50] sm:$0xff]
    %v3677 = vld [vmem:[#allocation22 + $0xa58] sm:$0xff]
    %v3678 = vld [vmem:[#allocation22 + $0xa60] sm:$0xf]
    %v3679 = vld [vmem:[#allocation22 + $0xa64] sm:$0xff]
    %v3680 = vld [vmem:[#allocation22 + $0xa6c] sm:$0xff]
    %v3681 = vld [vmem:[#allocation22 + $0xa74] sm:$0xff]
    %v3682 = vld [vmem:[#allocation22 + $0xa7c] sm:$0xf]
    %v3683 = vld [vmem:[#allocation22 + $0xa80] sm:$0xff]
    %v3684 = vld [vmem:[#allocation22 + $0xa88] sm:$0xff]
    %v3685 = vld [vmem:[#allocation22 + $0xa90] sm:$0xff]
    %v3686 = vld [vmem:[#allocation22 + $0xa98] sm:$0xf]
    %v3687 = vld [vmem:[#allocation22 + $0xa9c] sm:$0xff]
    %v3688 = vld [vmem:[#allocation22 + $0xaa4] sm:$0xff]
    %v3689 = vld [vmem:[#allocation22 + $0xaac] sm:$0xff]
    %v3690 = vld [vmem:[#allocation22 + $0xab4] sm:$0xf]
    %v3691 = vld [vmem:[#allocation22 + $0xab8] sm:$0xff]
    %v3692 = vld [vmem:[#allocation22 + $0xac0] sm:$0xff]
    %v3693 = vld [vmem:[#allocation22 + $0xac8] sm:$0xff]
    %v3694 = vld [vmem:[#allocation22 + $0xad0] sm:$0xf]
    %v3695 = vld [vmem:[#allocation22 + $0xad4] sm:$0xff]
    %v3696 = vld [vmem:[#allocation22 + $0xadc] sm:$0xff]
    %v3697 = vld [vmem:[#allocation22 + $0xae4] sm:$0xff]
    %v3698 = vld [vmem:[#allocation22 + $0xaec] sm:$0xf]
    %v3699 = vld [vmem:[#allocation22 + $0xaf0] sm:$0xff]
    %v3700 = vld [vmem:[#allocation22 + $0xaf8] sm:$0xff]
    %v3701 = vld [vmem:[#allocation22 + $0xb00] sm:$0xff]
    %v3702 = vld [vmem:[#allocation22 + $0xb08] sm:$0xf]
    %v3703 = vld [vmem:[#allocation22 + $0xb0c] sm:$0xff]
    %v3704 = vld [vmem:[#allocation22 + $0xb14] sm:$0xff]
    %v3705 = vld [vmem:[#allocation22 + $0xb1c] sm:$0xff]
    %v3706 = vld [vmem:[#allocation22 + $0xb24] sm:$0xf]
    %v3707 = vld [vmem:[#allocation22 + $0xb28] sm:$0xff]
    %v3708 = vld [vmem:[#allocation22 + $0xb30] sm:$0xff]
    %v3709 = vld [vmem:[#allocation22 + $0xb38] sm:$0xff]
    %v3710 = vld [vmem:[#allocation22 + $0xb40] sm:$0xf]
    %v3711 = vld [vmem:[#allocation22 + $0xb44] sm:$0xff]
    %v3712 = vld [vmem:[#allocation22 + $0xb4c] sm:$0xff]
    %v3713 = vld [vmem:[#allocation22 + $0xb54] sm:$0xff]
    %v3714 = vld [vmem:[#allocation22 + $0xb5c] sm:$0xf]
    %v3715 = vld [vmem:[#allocation22 + $0xb60] sm:$0xff]
    %v3716 = vld [vmem:[#allocation22 + $0xb68] sm:$0xff]
    %v3717 = vld [vmem:[#allocation22 + $0xb70] sm:$0xff]
    %v3718 = vld [vmem:[#allocation22 + $0xb78] sm:$0xf]
    %v3719 = vld [vmem:[#allocation22 + $0xb7c] sm:$0xff]
    %v3720 = vld [vmem:[#allocation22 + $0xb84] sm:$0xff]
    %v3721 = vld [vmem:[#allocation22 + $0xb8c] sm:$0xff]
    %v3722 = vld [vmem:[#allocation22 + $0xb94] sm:$0xf]
    %v3723 = vld [vmem:[#allocation22 + $0xb98] sm:$0xff]
    %v3724 = vld [vmem:[#allocation22 + $0xba0] sm:$0xff]
    %v3725 = vld [vmem:[#allocation22 + $0xba8] sm:$0xff]
    %v3726 = vld [vmem:[#allocation22 + $0xbb0] sm:$0xf]
    %v3727 = vld [vmem:[#allocation22 + $0xbb4] sm:$0xff]
    %v3728 = vld [vmem:[#allocation22 + $0xbbc] sm:$0xff]
    %v3729 = vld [vmem:[#allocation22 + $0xbc4] sm:$0xff]
    %v3730 = vld [vmem:[#allocation22 + $0xbcc] sm:$0xf]
    %v3731 = vld [vmem:[#allocation22 + $0xbd0] sm:$0xff]
    %v3732 = vld [vmem:[#allocation22 + $0xbd8] sm:$0xff]
    %v3733 = vld [vmem:[#allocation22 + $0xbe0] sm:$0xff]
    %v3734 = vld [vmem:[#allocation22 + $0xbe8] sm:$0xf]
    %v3735 = vld [vmem:[#allocation22 + $0xbec] sm:$0xff]
    %v3736 = vld [vmem:[#allocation22 + $0xbf4] sm:$0xff]
    %v3737 = vld [vmem:[#allocation22 + $0xbfc] sm:$0xff]
    %v3738 = vld [vmem:[#allocation22 + $0xc04] sm:$0xf]
    %v3739 = vld [vmem:[#allocation22 + $0xc08] sm:$0xff]
    %v3740 = vld [vmem:[#allocation22 + $0xc10] sm:$0xff]
    %v3741 = vld [vmem:[#allocation22 + $0xc18] sm:$0xff]
    %v3742 = vld [vmem:[#allocation22 + $0xc20] sm:$0xf]
    %v3743 = vld [vmem:[#allocation22 + $0xc24] sm:$0xff]
    %v3744 = vld [vmem:[#allocation22 + $0xc2c] sm:$0xff]
    %v3745 = vld [vmem:[#allocation22 + $0xc34] sm:$0xff]
    %v3746 = vld [vmem:[#allocation22 + $0xc3c] sm:$0xf]
    %v3747 = vld [vmem:[#allocation22 + $0xc40] sm:$0xff]
    %v3748 = vld [vmem:[#allocation22 + $0xc48] sm:$0xff]
    %v3749 = vld [vmem:[#allocation22 + $0xc50] sm:$0xff]
    %v3750 = vld [vmem:[#allocation22 + $0xc58] sm:$0xf]
    %v3751 = vld [vmem:[#allocation22 + $0xc5c] sm:$0xff]
    %v3752 = vld [vmem:[#allocation22 + $0xc64] sm:$0xff]
    %v3753 = vld [vmem:[#allocation22 + $0xc6c] sm:$0xff]
    %v3754 = vld [vmem:[#allocation22 + $0xc74] sm:$0xf]
    %v3755 = vld [vmem:[#allocation22 + $0xc78] sm:$0xff]
    %v3756 = vld [vmem:[#allocation22 + $0xc80] sm:$0xff]
    %v3757 = vld [vmem:[#allocation22 + $0xc88] sm:$0xff]
    %v3758 = vld [vmem:[#allocation22 + $0xc90] sm:$0xf]
    %v3759 = vld [vmem:[#allocation22 + $0xc94] sm:$0xff]
    %v3760 = vld [vmem:[#allocation22 + $0xc9c] sm:$0xff]
    %v3761 = vld [vmem:[#allocation22 + $0xca4] sm:$0xff]
    %v3762 = vld [vmem:[#allocation22 + $0xcac] sm:$0xf]
    %v3763 = vld [vmem:[#allocation22 + $0xcb0] sm:$0xff]
    %v3764 = vld [vmem:[#allocation22 + $0xcb8] sm:$0xff]
    %v3765 = vld [vmem:[#allocation22 + $0xcc0] sm:$0xff]
    %v3766 = vld [vmem:[#allocation22 + $0xcc8] sm:$0xf]
    %v3767 = vld [vmem:[#allocation22 + $0xccc] sm:$0xff]
    %v3768 = vld [vmem:[#allocation22 + $0xcd4] sm:$0xff]
    %v3769 = vld [vmem:[#allocation22 + $0xcdc] sm:$0xff]
    %v3770 = vld [vmem:[#allocation22 + $0xce4] sm:$0xf]
    %v3771 = vld [vmem:[#allocation22 + $0xce8] sm:$0xff]
    %v3772 = vld [vmem:[#allocation22 + $0xcf0] sm:$0xff]
    %v3773 = vld [vmem:[#allocation22 + $0xcf8] sm:$0xff]
    %v3774 = vld [vmem:[#allocation22 + $0xd00] sm:$0xf]
    %v3775 = vld [vmem:[#allocation22 + $0xd04] sm:$0xff]
    %v3776 = vld [vmem:[#allocation22 + $0xd0c] sm:$0xff]
    %v3777 = vld [vmem:[#allocation22 + $0xd14] sm:$0xff]
    %v3778 = vld [vmem:[#allocation22 + $0xd1c] sm:$0xf]
    %v3779 = vld [vmem:[#allocation22 + $0xd20] sm:$0xff]
    %v3780 = vld [vmem:[#allocation22 + $0xd28] sm:$0xff]
    %v3781 = vld [vmem:[#allocation22 + $0xd30] sm:$0xff]
    %v3782 = vld [vmem:[#allocation22 + $0xd38] sm:$0xf]
    %v3783 = vld [vmem:[#allocation22 + $0xd3c] sm:$0xff]
    %v3784 = vld [vmem:[#allocation22 + $0xd44] sm:$0xff]
    %v3785 = vld [vmem:[#allocation22 + $0xd4c] sm:$0xff]
    %v3786 = vld [vmem:[#allocation22 + $0xd54] sm:$0xf]
    %v3787 = vld [vmem:[#allocation22 + $0xd58] sm:$0xff]
    %v3788 = vld [vmem:[#allocation22 + $0xd60] sm:$0xff]
    %v3789 = vld [vmem:[#allocation22 + $0xd68] sm:$0xff]
    %v3790 = vld [vmem:[#allocation22 + $0xd70] sm:$0xf]
    %v3791 = vld [vmem:[#allocation22 + $0xd74] sm:$0xff]
    %v3792 = vld [vmem:[#allocation22 + $0xd7c] sm:$0xff]
    %v3793 = vld [vmem:[#allocation22 + $0xd84] sm:$0xff]
    %v3794 = vld [vmem:[#allocation22 + $0xd8c] sm:$0xf]
    %v3795 = vld [vmem:[#allocation22 + $0xd90] sm:$0xff]
    %v3796 = vld [vmem:[#allocation22 + $0xd98] sm:$0xff]
    %v3797 = vld [vmem:[#allocation22 + $0xda0] sm:$0xff]
    %v3798 = vld [vmem:[#allocation22 + $0xda8] sm:$0xf]
    %v3799 = vld [vmem:[#allocation22 + $0xdac] sm:$0xff]
    %v3800 = vld [vmem:[#allocation22 + $0xdb4] sm:$0xff]
    %v3801 = vld [vmem:[#allocation22 + $0xdbc] sm:$0xff]
    %v3802 = vld [vmem:[#allocation22 + $0xdc4] sm:$0xf]
    %v3803 = vld [vmem:[#allocation22 + $0xdc8] sm:$0xff]
    %v3804 = vld [vmem:[#allocation22 + $0xdd0] sm:$0xff]
    %v3805 = vld [vmem:[#allocation22 + $0xdd8] sm:$0xff]
    %v3806 = vld [vmem:[#allocation22 + $0xde0] sm:$0xf]
    %v3807 = vld [vmem:[#allocation22 + $0xde4] sm:$0xff]
    %v3808 = vld [vmem:[#allocation22 + $0xdec] sm:$0xff]
    %v3809 = vld [vmem:[#allocation22 + $0xdf4] sm:$0xff]
    %v3810 = vld [vmem:[#allocation22 + $0xdfc] sm:$0xf]
    %v3811 = vld [vmem:[#allocation24] sm:$0xff]
    %v3813 = vlaneseq
    %v3814 = vshrl.u32 %v3813, 7
    %v3815 = vsub.s32 0, %v3814
    %v3816 = vrot.slane %v3811, %v3815
    %v3817 = vlaneseq
    %v3818 = vshrl.u32 %v3817, 7
    %v3819 = vsub.s32 1, %v3818
    %v3820 = vrot.slane %v3811, %v3819
    %v3821 = vlaneseq
    %v3822 = vshrl.u32 %v3821, 7
    %v3823 = vsub.s32 2, %v3822
    %v3824 = vrot.slane %v3811, %v3823
    %v3825 = vlaneseq
    %v3826 = vshrl.u32 %v3825, 7
    %v3827 = vsub.s32 3, %v3826
    %v3828 = vrot.slane %v3811, %v3827
    %v3829 = vlaneseq
    %v3830 = vshrl.u32 %v3829, 7
    %v3831 = vsub.s32 4, %v3830
    %v3832 = vrot.slane %v3811, %v3831
    %v3833 = vlaneseq
    %v3834 = vshrl.u32 %v3833, 7
    %v3835 = vsub.s32 5, %v3834
    %v3836 = vrot.slane %v3811, %v3835
    %v3837 = vlaneseq
    %v3838 = vshrl.u32 %v3837, 7
    %v3839 = vsub.s32 6, %v3838
    %v3840 = vrot.slane %v3811, %v3839
    %v4360 = vunpack.c.l.b16 %v3299
    %v4361 = vunpack.c.h.b16 %v3299
    %v4362 = vunpack.c.l.b16 %v3300
    %v4363 = vunpack.c.h.b16 %v3300
    %v4364 = vunpack.c.l.b16 %v3301
    %v4365 = vunpack.c.h.b16 %v3301
    %v4366 = vunpack.c.l.b16 %v3302
    %v4367 = vunpack.c.l.b16 %v3303
    %v4368 = vunpack.c.h.b16 %v3303
    %v4369 = vunpack.c.l.b16 %v3304
    %v4370 = vunpack.c.h.b16 %v3304
    %v4371 = vunpack.c.l.b16 %v3305
    %v4372 = vunpack.c.h.b16 %v3305
    %v4373 = vunpack.c.l.b16 %v3306
    %v4374 = vunpack.c.l.b16 %v3307
    %v4375 = vunpack.c.h.b16 %v3307
    %v4376 = vunpack.c.l.b16 %v3308
    %v4377 = vunpack.c.h.b16 %v3308
    %v4378 = vunpack.c.l.b16 %v3309
    %v4379 = vunpack.c.h.b16 %v3309
    %v4380 = vunpack.c.l.b16 %v3310
    %v4381 = vunpack.c.l.b16 %v3311
    %v4382 = vunpack.c.h.b16 %v3311
    %v4383 = vunpack.c.l.b16 %v3312
    %v4384 = vunpack.c.h.b16 %v3312
    %v4385 = vunpack.c.l.b16 %v3313
    %v4386 = vunpack.c.h.b16 %v3313
    %v4387 = vunpack.c.l.b16 %v3314
    %v4388 = vunpack.c.l.b16 %v3315
    %v4389 = vunpack.c.h.b16 %v3315
    %v4390 = vunpack.c.l.b16 %v3316
    %v4391 = vunpack.c.h.b16 %v3316
    %v4392 = vunpack.c.l.b16 %v3317
    %v4393 = vunpack.c.h.b16 %v3317
    %v4394 = vunpack.c.l.b16 %v3318
    %v4395 = vunpack.c.l.b16 %v3319
    %v4396 = vunpack.c.h.b16 %v3319
    %v4397 = vunpack.c.l.b16 %v3320
    %v4398 = vunpack.c.h.b16 %v3320
    %v4399 = vunpack.c.l.b16 %v3321
    %v4400 = vunpack.c.h.b16 %v3321
    %v4401 = vunpack.c.l.b16 %v3322
    %v4402 = vunpack.c.l.b16 %v3323
    %v4403 = vunpack.c.h.b16 %v3323
    %v4404 = vunpack.c.l.b16 %v3324
    %v4405 = vunpack.c.h.b16 %v3324
    %v4406 = vunpack.c.l.b16 %v3325
    %v4407 = vunpack.c.h.b16 %v3325
    %v4408 = vunpack.c.l.b16 %v3326
    %v4409 = vunpack.c.l.b16 %v3327
    %v4410 = vunpack.c.h.b16 %v3327
    %v4411 = vunpack.c.l.b16 %v3328
    %v4412 = vunpack.c.h.b16 %v3328
    %v4413 = vunpack.c.l.b16 %v3329
    %v4414 = vunpack.c.h.b16 %v3329
    %v4415 = vunpack.c.l.b16 %v3330
    %v4416 = vunpack.c.l.b16 %v3331
    %v4417 = vunpack.c.h.b16 %v3331
    %v4418 = vunpack.c.l.b16 %v3332
    %v4419 = vunpack.c.h.b16 %v3332
    %v4420 = vunpack.c.l.b16 %v3333
    %v4421 = vunpack.c.h.b16 %v3333
    %v4422 = vunpack.c.l.b16 %v3334
    %v4423 = vunpack.c.l.b16 %v3335
    %v4424 = vunpack.c.h.b16 %v3335
    %v4425 = vunpack.c.l.b16 %v3336
    %v4426 = vunpack.c.h.b16 %v3336
    %v4427 = vunpack.c.l.b16 %v3337
    %v4428 = vunpack.c.h.b16 %v3337
    %v4429 = vunpack.c.l.b16 %v3338
    %v4430 = vunpack.c.l.b16 %v3339
    %v4431 = vunpack.c.h.b16 %v3339
    %v4432 = vunpack.c.l.b16 %v3340
    %v4433 = vunpack.c.h.b16 %v3340
    %v4434 = vunpack.c.l.b16 %v3341
    %v4435 = vunpack.c.h.b16 %v3341
    %v4436 = vunpack.c.l.b16 %v3342
    %v4437 = vunpack.c.l.b16 %v3343
    %v4438 = vunpack.c.h.b16 %v3343
    %v4439 = vunpack.c.l.b16 %v3344
    %v4440 = vunpack.c.h.b16 %v3344
    %v4441 = vunpack.c.l.b16 %v3345
    %v4442 = vunpack.c.h.b16 %v3345
    %v4443 = vunpack.c.l.b16 %v3346
    %v4444 = vunpack.c.l.b16 %v3347
    %v4445 = vunpack.c.h.b16 %v3347
    %v4446 = vunpack.c.l.b16 %v3348
    %v4447 = vunpack.c.h.b16 %v3348
    %v4448 = vunpack.c.l.b16 %v3349
    %v4449 = vunpack.c.h.b16 %v3349
    %v4450 = vunpack.c.l.b16 %v3350
    %v4451 = vunpack.c.l.b16 %v3351
    %v4452 = vunpack.c.h.b16 %v3351
    %v4453 = vunpack.c.l.b16 %v3352
    %v4454 = vunpack.c.h.b16 %v3352
    %v4455 = vunpack.c.l.b16 %v3353
    %v4456 = vunpack.c.h.b16 %v3353
    %v4457 = vunpack.c.l.b16 %v3354
    %v4458 = vunpack.c.l.b16 %v3355
    %v4459 = vunpack.c.h.b16 %v3355
    %v4460 = vunpack.c.l.b16 %v3356
    %v4461 = vunpack.c.h.b16 %v3356
    %v4462 = vunpack.c.l.b16 %v3357
    %v4463 = vunpack.c.h.b16 %v3357
    %v4464 = vunpack.c.l.b16 %v3358
    %v4465 = vunpack.c.l.b16 %v3359
    %v4466 = vunpack.c.h.b16 %v3359
    %v4467 = vunpack.c.l.b16 %v3360
    %v4468 = vunpack.c.h.b16 %v3360
    %v4469 = vunpack.c.l.b16 %v3361
    %v4470 = vunpack.c.h.b16 %v3361
    %v4471 = vunpack.c.l.b16 %v3362
    %v4472 = vunpack.c.l.b16 %v3363
    %v4473 = vunpack.c.h.b16 %v3363
    %v4474 = vunpack.c.l.b16 %v3364
    %v4475 = vunpack.c.h.b16 %v3364
    %v4476 = vunpack.c.l.b16 %v3365
    %v4477 = vunpack.c.h.b16 %v3365
    %v4478 = vunpack.c.l.b16 %v3366
    %v4479 = vunpack.c.l.b16 %v3367
    %v4480 = vunpack.c.h.b16 %v3367
    %v4481 = vunpack.c.l.b16 %v3368
    %v4482 = vunpack.c.h.b16 %v3368
    %v4483 = vunpack.c.l.b16 %v3369
    %v4484 = vunpack.c.h.b16 %v3369
    %v4485 = vunpack.c.l.b16 %v3370
    %v4486 = vunpack.c.l.b16 %v3371
    %v4487 = vunpack.c.h.b16 %v3371
    %v4488 = vunpack.c.l.b16 %v3372
    %v4489 = vunpack.c.h.b16 %v3372
    %v4490 = vunpack.c.l.b16 %v3373
    %v4491 = vunpack.c.h.b16 %v3373
    %v4492 = vunpack.c.l.b16 %v3374
    %v4493 = vunpack.c.l.b16 %v3375
    %v4494 = vunpack.c.h.b16 %v3375
    %v4495 = vunpack.c.l.b16 %v3376
    %v4496 = vunpack.c.h.b16 %v3376
    %v4497 = vunpack.c.l.b16 %v3377
    %v4498 = vunpack.c.h.b16 %v3377
    %v4499 = vunpack.c.l.b16 %v3378
    %v4500 = vunpack.c.l.b16 %v3379
    %v4501 = vunpack.c.h.b16 %v3379
    %v4502 = vunpack.c.l.b16 %v3380
    %v4503 = vunpack.c.h.b16 %v3380
    %v4504 = vunpack.c.l.b16 %v3381
    %v4505 = vunpack.c.h.b16 %v3381
    %v4506 = vunpack.c.l.b16 %v3382
    %v4507 = vunpack.c.l.b16 %v3383
    %v4508 = vunpack.c.h.b16 %v3383
    %v4509 = vunpack.c.l.b16 %v3384
    %v4510 = vunpack.c.h.b16 %v3384
    %v4511 = vunpack.c.l.b16 %v3385
    %v4512 = vunpack.c.h.b16 %v3385
    %v4513 = vunpack.c.l.b16 %v3386
    %v4514 = vunpack.c.l.b16 %v3387
    %v4515 = vunpack.c.h.b16 %v3387
    %v4516 = vunpack.c.l.b16 %v3388
    %v4517 = vunpack.c.h.b16 %v3388
    %v4518 = vunpack.c.l.b16 %v3389
    %v4519 = vunpack.c.h.b16 %v3389
    %v4520 = vunpack.c.l.b16 %v3390
    %v4521 = vunpack.c.l.b16 %v3391
    %v4522 = vunpack.c.h.b16 %v3391
    %v4523 = vunpack.c.l.b16 %v3392
    %v4524 = vunpack.c.h.b16 %v3392
    %v4525 = vunpack.c.l.b16 %v3393
    %v4526 = vunpack.c.h.b16 %v3393
    %v4527 = vunpack.c.l.b16 %v3394
    %v4528 = vunpack.c.l.b16 %v3395
    %v4529 = vunpack.c.h.b16 %v3395
    %v4530 = vunpack.c.l.b16 %v3396
    %v4531 = vunpack.c.h.b16 %v3396
    %v4532 = vunpack.c.l.b16 %v3397
    %v4533 = vunpack.c.h.b16 %v3397
    %v4534 = vunpack.c.l.b16 %v3398
    %v4535 = vunpack.c.l.b16 %v3399
    %v4536 = vunpack.c.h.b16 %v3399
    %v4537 = vunpack.c.l.b16 %v3400
    %v4538 = vunpack.c.h.b16 %v3400
    %v4539 = vunpack.c.l.b16 %v3401
    %v4540 = vunpack.c.h.b16 %v3401
    %v4541 = vunpack.c.l.b16 %v3402
    %v4542 = vunpack.c.l.b16 %v3403
    %v4543 = vunpack.c.h.b16 %v3403
    %v4544 = vunpack.c.l.b16 %v3404
    %v4545 = vunpack.c.h.b16 %v3404
    %v4546 = vunpack.c.l.b16 %v3405
    %v4547 = vunpack.c.h.b16 %v3405
    %v4548 = vunpack.c.l.b16 %v3406
    %v4549 = vunpack.c.l.b16 %v3407
    %v4550 = vunpack.c.h.b16 %v3407
    %v4551 = vunpack.c.l.b16 %v3408
    %v4552 = vunpack.c.h.b16 %v3408
    %v4553 = vunpack.c.l.b16 %v3409
    %v4554 = vunpack.c.h.b16 %v3409
    %v4555 = vunpack.c.l.b16 %v3410
    %v4556 = vunpack.c.l.b16 %v3411
    %v4557 = vunpack.c.h.b16 %v3411
    %v4558 = vunpack.c.l.b16 %v3412
    %v4559 = vunpack.c.h.b16 %v3412
    %v4560 = vunpack.c.l.b16 %v3413
    %v4561 = vunpack.c.h.b16 %v3413
    %v4562 = vunpack.c.l.b16 %v3414
    %v4563 = vunpack.c.l.b16 %v3415
    %v4564 = vunpack.c.h.b16 %v3415
    %v4565 = vunpack.c.l.b16 %v3416
    %v4566 = vunpack.c.h.b16 %v3416
    %v4567 = vunpack.c.l.b16 %v3417
    %v4568 = vunpack.c.h.b16 %v3417
    %v4569 = vunpack.c.l.b16 %v3418
    %v4570 = vunpack.c.l.b16 %v3419
    %v4571 = vunpack.c.h.b16 %v3419
    %v4572 = vunpack.c.l.b16 %v3420
    %v4573 = vunpack.c.h.b16 %v3420
    %v4574 = vunpack.c.l.b16 %v3421
    %v4575 = vunpack.c.h.b16 %v3421
    %v4576 = vunpack.c.l.b16 %v3422
    %v4577 = vunpack.c.l.b16 %v3423
    %v4578 = vunpack.c.h.b16 %v3423
    %v4579 = vunpack.c.l.b16 %v3424
    %v4580 = vunpack.c.h.b16 %v3424
    %v4581 = vunpack.c.l.b16 %v3425
    %v4582 = vunpack.c.h.b16 %v3425
    %v4583 = vunpack.c.l.b16 %v3426
    %v4584 = vunpack.c.l.b16 %v3427
    %v4585 = vunpack.c.h.b16 %v3427
    %v4586 = vunpack.c.l.b16 %v3428
    %v4587 = vunpack.c.h.b16 %v3428
    %v4588 = vunpack.c.l.b16 %v3429
    %v4589 = vunpack.c.h.b16 %v3429
    %v4590 = vunpack.c.l.b16 %v3430
    %v4591 = vunpack.c.l.b16 %v3431
    %v4592 = vunpack.c.h.b16 %v3431
    %v4593 = vunpack.c.l.b16 %v3432
    %v4594 = vunpack.c.h.b16 %v3432
    %v4595 = vunpack.c.l.b16 %v3433
    %v4596 = vunpack.c.h.b16 %v3433
    %v4597 = vunpack.c.l.b16 %v3434
    %v4598 = vunpack.c.l.b16 %v3435
    %v4599 = vunpack.c.h.b16 %v3435
    %v4600 = vunpack.c.l.b16 %v3436
    %v4601 = vunpack.c.h.b16 %v3436
    %v4602 = vunpack.c.l.b16 %v3437
    %v4603 = vunpack.c.h.b16 %v3437
    %v4604 = vunpack.c.l.b16 %v3438
    %v4605 = vunpack.c.l.b16 %v3439
    %v4606 = vunpack.c.h.b16 %v3439
    %v4607 = vunpack.c.l.b16 %v3440
    %v4608 = vunpack.c.h.b16 %v3440
    %v4609 = vunpack.c.l.b16 %v3441
    %v4610 = vunpack.c.h.b16 %v3441
    %v4611 = vunpack.c.l.b16 %v3442
    %v4612 = vunpack.c.l.b16 %v3443
    %v4613 = vunpack.c.h.b16 %v3443
    %v4614 = vunpack.c.l.b16 %v3444
    %v4615 = vunpack.c.h.b16 %v3444
    %v4616 = vunpack.c.l.b16 %v3445
    %v4617 = vunpack.c.h.b16 %v3445
    %v4618 = vunpack.c.l.b16 %v3446
    %v4619 = vunpack.c.l.b16 %v3447
    %v4620 = vunpack.c.h.b16 %v3447
    %v4621 = vunpack.c.l.b16 %v3448
    %v4622 = vunpack.c.h.b16 %v3448
    %v4623 = vunpack.c.l.b16 %v3449
    %v4624 = vunpack.c.h.b16 %v3449
    %v4625 = vunpack.c.l.b16 %v3450
    %v4626 = vunpack.c.l.b16 %v3451
    %v4627 = vunpack.c.h.b16 %v3451
    %v4628 = vunpack.c.l.b16 %v3452
    %v4629 = vunpack.c.h.b16 %v3452
    %v4630 = vunpack.c.l.b16 %v3453
    %v4631 = vunpack.c.h.b16 %v3453
    %v4632 = vunpack.c.l.b16 %v3454
    %v4633 = vunpack.c.l.b16 %v3455
    %v4634 = vunpack.c.h.b16 %v3455
    %v4635 = vunpack.c.l.b16 %v3456
    %v4636 = vunpack.c.h.b16 %v3456
    %v4637 = vunpack.c.l.b16 %v3457
    %v4638 = vunpack.c.h.b16 %v3457
    %v4639 = vunpack.c.l.b16 %v3458
    %v4640 = vunpack.c.l.b16 %v3459
    %v4641 = vunpack.c.h.b16 %v3459
    %v4642 = vunpack.c.l.b16 %v3460
    %v4643 = vunpack.c.h.b16 %v3460
    %v4644 = vunpack.c.l.b16 %v3461
    %v4645 = vunpack.c.h.b16 %v3461
    %v4646 = vunpack.c.l.b16 %v3462
    %v4647 = vunpack.c.l.b16 %v3463
    %v4648 = vunpack.c.h.b16 %v3463
    %v4649 = vunpack.c.l.b16 %v3464
    %v4650 = vunpack.c.h.b16 %v3464
    %v4651 = vunpack.c.l.b16 %v3465
    %v4652 = vunpack.c.h.b16 %v3465
    %v4653 = vunpack.c.l.b16 %v3466
    %v4654 = vunpack.c.l.b16 %v3467
    %v4655 = vunpack.c.h.b16 %v3467
    %v4656 = vunpack.c.l.b16 %v3468
    %v4657 = vunpack.c.h.b16 %v3468
    %v4658 = vunpack.c.l.b16 %v3469
    %v4659 = vunpack.c.h.b16 %v3469
    %v4660 = vunpack.c.l.b16 %v3470
    %v4661 = vunpack.c.l.b16 %v3471
    %v4662 = vunpack.c.h.b16 %v3471
    %v4663 = vunpack.c.l.b16 %v3472
    %v4664 = vunpack.c.h.b16 %v3472
    %v4665 = vunpack.c.l.b16 %v3473
    %v4666 = vunpack.c.h.b16 %v3473
    %v4667 = vunpack.c.l.b16 %v3474
    %v4668 = vunpack.c.l.b16 %v3475
    %v4669 = vunpack.c.h.b16 %v3475
    %v4670 = vunpack.c.l.b16 %v3476
    %v4671 = vunpack.c.h.b16 %v3476
    %v4672 = vunpack.c.l.b16 %v3477
    %v4673 = vunpack.c.h.b16 %v3477
    %v4674 = vunpack.c.l.b16 %v3478
    %v4675 = vunpack.c.l.b16 %v3479
    %v4676 = vunpack.c.h.b16 %v3479
    %v4677 = vunpack.c.l.b16 %v3480
    %v4678 = vunpack.c.h.b16 %v3480
    %v4679 = vunpack.c.l.b16 %v3481
    %v4680 = vunpack.c.h.b16 %v3481
    %v4681 = vunpack.c.l.b16 %v3482
    %v4682 = vunpack.c.l.b16 %v3483
    %v4683 = vunpack.c.h.b16 %v3483
    %v4684 = vunpack.c.l.b16 %v3484
    %v4685 = vunpack.c.h.b16 %v3484
    %v4686 = vunpack.c.l.b16 %v3485
    %v4687 = vunpack.c.h.b16 %v3485
    %v4688 = vunpack.c.l.b16 %v3486
    %v4689 = vunpack.c.l.b16 %v3487
    %v4690 = vunpack.c.h.b16 %v3487
    %v4691 = vunpack.c.l.b16 %v3488
    %v4692 = vunpack.c.h.b16 %v3488
    %v4693 = vunpack.c.l.b16 %v3489
    %v4694 = vunpack.c.h.b16 %v3489
    %v4695 = vunpack.c.l.b16 %v3490
    %v4696 = vunpack.c.l.b16 %v3491
    %v4697 = vunpack.c.h.b16 %v3491
    %v4698 = vunpack.c.l.b16 %v3492
    %v4699 = vunpack.c.h.b16 %v3492
    %v4700 = vunpack.c.l.b16 %v3493
    %v4701 = vunpack.c.h.b16 %v3493
    %v4702 = vunpack.c.l.b16 %v3494
    %v4703 = vunpack.c.l.b16 %v3495
    %v4704 = vunpack.c.h.b16 %v3495
    %v4705 = vunpack.c.l.b16 %v3496
    %v4706 = vunpack.c.h.b16 %v3496
    %v4707 = vunpack.c.l.b16 %v3497
    %v4708 = vunpack.c.h.b16 %v3497
    %v4709 = vunpack.c.l.b16 %v3498
    %v4710 = vunpack.c.l.b16 %v3499
    %v4711 = vunpack.c.h.b16 %v3499
    %v4712 = vunpack.c.l.b16 %v3500
    %v4713 = vunpack.c.h.b16 %v3500
    %v4714 = vunpack.c.l.b16 %v3501
    %v4715 = vunpack.c.h.b16 %v3501
    %v4716 = vunpack.c.l.b16 %v3502
    %v4717 = vunpack.c.l.b16 %v3503
    %v4718 = vunpack.c.h.b16 %v3503
    %v4719 = vunpack.c.l.b16 %v3504
    %v4720 = vunpack.c.h.b16 %v3504
    %v4721 = vunpack.c.l.b16 %v3505
    %v4722 = vunpack.c.h.b16 %v3505
    %v4723 = vunpack.c.l.b16 %v3506
    %v4724 = vunpack.c.l.b16 %v3507
    %v4725 = vunpack.c.h.b16 %v3507
    %v4726 = vunpack.c.l.b16 %v3508
    %v4727 = vunpack.c.h.b16 %v3508
    %v4728 = vunpack.c.l.b16 %v3509
    %v4729 = vunpack.c.h.b16 %v3509
    %v4730 = vunpack.c.l.b16 %v3510
    %v4731 = vunpack.c.l.b16 %v3511
    %v4732 = vunpack.c.h.b16 %v3511
    %v4733 = vunpack.c.l.b16 %v3512
    %v4734 = vunpack.c.h.b16 %v3512
    %v4735 = vunpack.c.l.b16 %v3513
    %v4736 = vunpack.c.h.b16 %v3513
    %v4737 = vunpack.c.l.b16 %v3514
    %v4738 = vunpack.c.l.b16 %v3515
    %v4739 = vunpack.c.h.b16 %v3515
    %v4740 = vunpack.c.l.b16 %v3516
    %v4741 = vunpack.c.h.b16 %v3516
    %v4742 = vunpack.c.l.b16 %v3517
    %v4743 = vunpack.c.h.b16 %v3517
    %v4744 = vunpack.c.l.b16 %v3518
    %v4745 = vunpack.c.l.b16 %v3519
    %v4746 = vunpack.c.h.b16 %v3519
    %v4747 = vunpack.c.l.b16 %v3520
    %v4748 = vunpack.c.h.b16 %v3520
    %v4749 = vunpack.c.l.b16 %v3521
    %v4750 = vunpack.c.h.b16 %v3521
    %v4751 = vunpack.c.l.b16 %v3522
    %v4752 = vunpack.c.l.b16 %v3523
    %v4753 = vunpack.c.h.b16 %v3523
    %v4754 = vunpack.c.l.b16 %v3524
    %v4755 = vunpack.c.h.b16 %v3524
    %v4756 = vunpack.c.l.b16 %v3525
    %v4757 = vunpack.c.h.b16 %v3525
    %v4758 = vunpack.c.l.b16 %v3526
    %v4759 = vunpack.c.l.b16 %v3527
    %v4760 = vunpack.c.h.b16 %v3527
    %v4761 = vunpack.c.l.b16 %v3528
    %v4762 = vunpack.c.h.b16 %v3528
    %v4763 = vunpack.c.l.b16 %v3529
    %v4764 = vunpack.c.h.b16 %v3529
    %v4765 = vunpack.c.l.b16 %v3530
    %v4766 = vunpack.c.l.b16 %v3531
    %v4767 = vunpack.c.h.b16 %v3531
    %v4768 = vunpack.c.l.b16 %v3532
    %v4769 = vunpack.c.h.b16 %v3532
    %v4770 = vunpack.c.l.b16 %v3533
    %v4771 = vunpack.c.h.b16 %v3533
    %v4772 = vunpack.c.l.b16 %v3534
    %v4773 = vunpack.c.l.b16 %v3535
    %v4774 = vunpack.c.h.b16 %v3535
    %v4775 = vunpack.c.l.b16 %v3536
    %v4776 = vunpack.c.h.b16 %v3536
    %v4777 = vunpack.c.l.b16 %v3537
    %v4778 = vunpack.c.h.b16 %v3537
    %v4779 = vunpack.c.l.b16 %v3538
    %v4780 = vunpack.c.l.b16 %v3539
    %v4781 = vunpack.c.h.b16 %v3539
    %v4782 = vunpack.c.l.b16 %v3540
    %v4783 = vunpack.c.h.b16 %v3540
    %v4784 = vunpack.c.l.b16 %v3541
    %v4785 = vunpack.c.h.b16 %v3541
    %v4786 = vunpack.c.l.b16 %v3542
    %v4787 = vunpack.c.l.b16 %v3543
    %v4788 = vunpack.c.h.b16 %v3543
    %v4789 = vunpack.c.l.b16 %v3544
    %v4790 = vunpack.c.h.b16 %v3544
    %v4791 = vunpack.c.l.b16 %v3545
    %v4792 = vunpack.c.h.b16 %v3545
    %v4793 = vunpack.c.l.b16 %v3546
    %v4794 = vunpack.c.l.b16 %v3547
    %v4795 = vunpack.c.h.b16 %v3547
    %v4796 = vunpack.c.l.b16 %v3548
    %v4797 = vunpack.c.h.b16 %v3548
    %v4798 = vunpack.c.l.b16 %v3549
    %v4799 = vunpack.c.h.b16 %v3549
    %v4800 = vunpack.c.l.b16 %v3550
    %v4801 = vunpack.c.l.b16 %v3551
    %v4802 = vunpack.c.h.b16 %v3551
    %v4803 = vunpack.c.l.b16 %v3552
    %v4804 = vunpack.c.h.b16 %v3552
    %v4805 = vunpack.c.l.b16 %v3553
    %v4806 = vunpack.c.h.b16 %v3553
    %v4807 = vunpack.c.l.b16 %v3554
    %v4808 = vunpack.c.l.b16 %v3555
    %v4809 = vunpack.c.h.b16 %v3555
    %v4810 = vunpack.c.l.b16 %v3556
    %v4811 = vunpack.c.h.b16 %v3556
    %v4812 = vunpack.c.l.b16 %v3557
    %v4813 = vunpack.c.h.b16 %v3557
    %v4814 = vunpack.c.l.b16 %v3558
    %v4815 = vunpack.c.l.b16 %v3559
    %v4816 = vunpack.c.h.b16 %v3559
    %v4817 = vunpack.c.l.b16 %v3560
    %v4818 = vunpack.c.h.b16 %v3560
    %v4819 = vunpack.c.l.b16 %v3561
    %v4820 = vunpack.c.h.b16 %v3561
    %v4821 = vunpack.c.l.b16 %v3562
    %v4822 = vunpack.c.l.b16 %v3563
    %v4823 = vunpack.c.h.b16 %v3563
    %v4824 = vunpack.c.l.b16 %v3564
    %v4825 = vunpack.c.h.b16 %v3564
    %v4826 = vunpack.c.l.b16 %v3565
    %v4827 = vunpack.c.h.b16 %v3565
    %v4828 = vunpack.c.l.b16 %v3566
    %v4829 = vunpack.c.l.b16 %v3567
    %v4830 = vunpack.c.h.b16 %v3567
    %v4831 = vunpack.c.l.b16 %v3568
    %v4832 = vunpack.c.h.b16 %v3568
    %v4833 = vunpack.c.l.b16 %v3569
    %v4834 = vunpack.c.h.b16 %v3569
    %v4835 = vunpack.c.l.b16 %v3570
    %v4836 = vunpack.c.l.b16 %v3571
    %v4837 = vunpack.c.h.b16 %v3571
    %v4838 = vunpack.c.l.b16 %v3572
    %v4839 = vunpack.c.h.b16 %v3572
    %v4840 = vunpack.c.l.b16 %v3573
    %v4841 = vunpack.c.h.b16 %v3573
    %v4842 = vunpack.c.l.b16 %v3574
    %v4843 = vunpack.c.l.b16 %v3575
    %v4844 = vunpack.c.h.b16 %v3575
    %v4845 = vunpack.c.l.b16 %v3576
    %v4846 = vunpack.c.h.b16 %v3576
    %v4847 = vunpack.c.l.b16 %v3577
    %v4848 = vunpack.c.h.b16 %v3577
    %v4849 = vunpack.c.l.b16 %v3578
    %v4850 = vunpack.c.l.b16 %v3579
    %v4851 = vunpack.c.h.b16 %v3579
    %v4852 = vunpack.c.l.b16 %v3580
    %v4853 = vunpack.c.h.b16 %v3580
    %v4854 = vunpack.c.l.b16 %v3581
    %v4855 = vunpack.c.h.b16 %v3581
    %v4856 = vunpack.c.l.b16 %v3582
    %v4857 = vunpack.c.l.b16 %v3583
    %v4858 = vunpack.c.h.b16 %v3583
    %v4859 = vunpack.c.l.b16 %v3584
    %v4860 = vunpack.c.h.b16 %v3584
    %v4861 = vunpack.c.l.b16 %v3585
    %v4862 = vunpack.c.h.b16 %v3585
    %v4863 = vunpack.c.l.b16 %v3586
    %v4864 = vunpack.c.l.b16 %v3587
    %v4865 = vunpack.c.h.b16 %v3587
    %v4866 = vunpack.c.l.b16 %v3588
    %v4867 = vunpack.c.h.b16 %v3588
    %v4868 = vunpack.c.l.b16 %v3589
    %v4869 = vunpack.c.h.b16 %v3589
    %v4870 = vunpack.c.l.b16 %v3590
    %v4871 = vunpack.c.l.b16 %v3591
    %v4872 = vunpack.c.h.b16 %v3591
    %v4873 = vunpack.c.l.b16 %v3592
    %v4874 = vunpack.c.h.b16 %v3592
    %v4875 = vunpack.c.l.b16 %v3593
    %v4876 = vunpack.c.h.b16 %v3593
    %v4877 = vunpack.c.l.b16 %v3594
    %v4878 = vunpack.c.l.b16 %v3595
    %v4879 = vunpack.c.h.b16 %v3595
    %v4880 = vunpack.c.l.b16 %v3596
    %v4881 = vunpack.c.h.b16 %v3596
    %v4882 = vunpack.c.l.b16 %v3597
    %v4883 = vunpack.c.h.b16 %v3597
    %v4884 = vunpack.c.l.b16 %v3598
    %v4885 = vunpack.c.l.b16 %v3599
    %v4886 = vunpack.c.h.b16 %v3599
    %v4887 = vunpack.c.l.b16 %v3600
    %v4888 = vunpack.c.h.b16 %v3600
    %v4889 = vunpack.c.l.b16 %v3601
    %v4890 = vunpack.c.h.b16 %v3601
    %v4891 = vunpack.c.l.b16 %v3602
    %v4892 = vunpack.c.l.b16 %v3603
    %v4893 = vunpack.c.h.b16 %v3603
    %v4894 = vunpack.c.l.b16 %v3604
    %v4895 = vunpack.c.h.b16 %v3604
    %v4896 = vunpack.c.l.b16 %v3605
    %v4897 = vunpack.c.h.b16 %v3605
    %v4898 = vunpack.c.l.b16 %v3606
    %v4899 = vunpack.c.l.b16 %v3607
    %v4900 = vunpack.c.h.b16 %v3607
    %v4901 = vunpack.c.l.b16 %v3608
    %v4902 = vunpack.c.h.b16 %v3608
    %v4903 = vunpack.c.l.b16 %v3609
    %v4904 = vunpack.c.h.b16 %v3609
    %v4905 = vunpack.c.l.b16 %v3610
    %v4906 = vunpack.c.l.b16 %v3611
    %v4907 = vunpack.c.h.b16 %v3611
    %v4908 = vunpack.c.l.b16 %v3612
    %v4909 = vunpack.c.h.b16 %v3612
    %v4910 = vunpack.c.l.b16 %v3613
    %v4911 = vunpack.c.h.b16 %v3613
    %v4912 = vunpack.c.l.b16 %v3614
    %v4913 = vunpack.c.l.b16 %v3615
    %v4914 = vunpack.c.h.b16 %v3615
    %v4915 = vunpack.c.l.b16 %v3616
    %v4916 = vunpack.c.h.b16 %v3616
    %v4917 = vunpack.c.l.b16 %v3617
    %v4918 = vunpack.c.h.b16 %v3617
    %v4919 = vunpack.c.l.b16 %v3618
    %v4920 = vunpack.c.l.b16 %v3619
    %v4921 = vunpack.c.h.b16 %v3619
    %v4922 = vunpack.c.l.b16 %v3620
    %v4923 = vunpack.c.h.b16 %v3620
    %v4924 = vunpack.c.l.b16 %v3621
    %v4925 = vunpack.c.h.b16 %v3621
    %v4926 = vunpack.c.l.b16 %v3622
    %v4927 = vunpack.c.l.b16 %v3623
    %v4928 = vunpack.c.h.b16 %v3623
    %v4929 = vunpack.c.l.b16 %v3624
    %v4930 = vunpack.c.h.b16 %v3624
    %v4931 = vunpack.c.l.b16 %v3625
    %v4932 = vunpack.c.h.b16 %v3625
    %v4933 = vunpack.c.l.b16 %v3626
    %v4934 = vunpack.c.l.b16 %v3627
    %v4935 = vunpack.c.h.b16 %v3627
    %v4936 = vunpack.c.l.b16 %v3628
    %v4937 = vunpack.c.h.b16 %v3628
    %v4938 = vunpack.c.l.b16 %v3629
    %v4939 = vunpack.c.h.b16 %v3629
    %v4940 = vunpack.c.l.b16 %v3630
    %v4941 = vunpack.c.l.b16 %v3631
    %v4942 = vunpack.c.h.b16 %v3631
    %v4943 = vunpack.c.l.b16 %v3632
    %v4944 = vunpack.c.h.b16 %v3632
    %v4945 = vunpack.c.l.b16 %v3633
    %v4946 = vunpack.c.h.b16 %v3633
    %v4947 = vunpack.c.l.b16 %v3634
    %v4948 = vunpack.c.l.b16 %v3635
    %v4949 = vunpack.c.h.b16 %v3635
    %v4950 = vunpack.c.l.b16 %v3636
    %v4951 = vunpack.c.h.b16 %v3636
    %v4952 = vunpack.c.l.b16 %v3637
    %v4953 = vunpack.c.h.b16 %v3637
    %v4954 = vunpack.c.l.b16 %v3638
    %v4955 = vunpack.c.l.b16 %v3639
    %v4956 = vunpack.c.h.b16 %v3639
    %v4957 = vunpack.c.l.b16 %v3640
    %v4958 = vunpack.c.h.b16 %v3640
    %v4959 = vunpack.c.l.b16 %v3641
    %v4960 = vunpack.c.h.b16 %v3641
    %v4961 = vunpack.c.l.b16 %v3642
    %v4962 = vunpack.c.l.b16 %v3643
    %v4963 = vunpack.c.h.b16 %v3643
    %v4964 = vunpack.c.l.b16 %v3644
    %v4965 = vunpack.c.h.b16 %v3644
    %v4966 = vunpack.c.l.b16 %v3645
    %v4967 = vunpack.c.h.b16 %v3645
    %v4968 = vunpack.c.l.b16 %v3646
    %v4969 = vunpack.c.l.b16 %v3647
    %v4970 = vunpack.c.h.b16 %v3647
    %v4971 = vunpack.c.l.b16 %v3648
    %v4972 = vunpack.c.h.b16 %v3648
    %v4973 = vunpack.c.l.b16 %v3649
    %v4974 = vunpack.c.h.b16 %v3649
    %v4975 = vunpack.c.l.b16 %v3650
    %v4976 = vunpack.c.l.b16 %v3651
    %v4977 = vunpack.c.h.b16 %v3651
    %v4978 = vunpack.c.l.b16 %v3652
    %v4979 = vunpack.c.h.b16 %v3652
    %v4980 = vunpack.c.l.b16 %v3653
    %v4981 = vunpack.c.h.b16 %v3653
    %v4982 = vunpack.c.l.b16 %v3654
    %v4983 = vunpack.c.l.b16 %v3655
    %v4984 = vunpack.c.h.b16 %v3655
    %v4985 = vunpack.c.l.b16 %v3656
    %v4986 = vunpack.c.h.b16 %v3656
    %v4987 = vunpack.c.l.b16 %v3657
    %v4988 = vunpack.c.h.b16 %v3657
    %v4989 = vunpack.c.l.b16 %v3658
    %v4990 = vunpack.c.l.b16 %v3659
    %v4991 = vunpack.c.h.b16 %v3659
    %v4992 = vunpack.c.l.b16 %v3660
    %v4993 = vunpack.c.h.b16 %v3660
    %v4994 = vunpack.c.l.b16 %v3661
    %v4995 = vunpack.c.h.b16 %v3661
    %v4996 = vunpack.c.l.b16 %v3662
    %v4997 = vunpack.c.l.b16 %v3663
    %v4998 = vunpack.c.h.b16 %v3663
    %v4999 = vunpack.c.l.b16 %v3664
    %v5000 = vunpack.c.h.b16 %v3664
    %v5001 = vunpack.c.l.b16 %v3665
    %v5002 = vunpack.c.h.b16 %v3665
    %v5003 = vunpack.c.l.b16 %v3666
    %v5004 = vunpack.c.l.b16 %v3667
    %v5005 = vunpack.c.h.b16 %v3667
    %v5006 = vunpack.c.l.b16 %v3668
    %v5007 = vunpack.c.h.b16 %v3668
    %v5008 = vunpack.c.l.b16 %v3669
    %v5009 = vunpack.c.h.b16 %v3669
    %v5010 = vunpack.c.l.b16 %v3670
    %v5011 = vunpack.c.l.b16 %v3671
    %v5012 = vunpack.c.h.b16 %v3671
    %v5013 = vunpack.c.l.b16 %v3672
    %v5014 = vunpack.c.h.b16 %v3672
    %v5015 = vunpack.c.l.b16 %v3673
    %v5016 = vunpack.c.h.b16 %v3673
    %v5017 = vunpack.c.l.b16 %v3674
    %v5018 = vunpack.c.l.b16 %v3675
    %v5019 = vunpack.c.h.b16 %v3675
    %v5020 = vunpack.c.l.b16 %v3676
    %v5021 = vunpack.c.h.b16 %v3676
    %v5022 = vunpack.c.l.b16 %v3677
    %v5023 = vunpack.c.h.b16 %v3677
    %v5024 = vunpack.c.l.b16 %v3678
    %v5025 = vunpack.c.l.b16 %v3679
    %v5026 = vunpack.c.h.b16 %v3679
    %v5027 = vunpack.c.l.b16 %v3680
    %v5028 = vunpack.c.h.b16 %v3680
    %v5029 = vunpack.c.l.b16 %v3681
    %v5030 = vunpack.c.h.b16 %v3681
    %v5031 = vunpack.c.l.b16 %v3682
    %v5032 = vunpack.c.l.b16 %v3683
    %v5033 = vunpack.c.h.b16 %v3683
    %v5034 = vunpack.c.l.b16 %v3684
    %v5035 = vunpack.c.h.b16 %v3684
    %v5036 = vunpack.c.l.b16 %v3685
    %v5037 = vunpack.c.h.b16 %v3685
    %v5038 = vunpack.c.l.b16 %v3686
    %v5039 = vunpack.c.l.b16 %v3687
    %v5040 = vunpack.c.h.b16 %v3687
    %v5041 = vunpack.c.l.b16 %v3688
    %v5042 = vunpack.c.h.b16 %v3688
    %v5043 = vunpack.c.l.b16 %v3689
    %v5044 = vunpack.c.h.b16 %v3689
    %v5045 = vunpack.c.l.b16 %v3690
    %v5046 = vunpack.c.l.b16 %v3691
    %v5047 = vunpack.c.h.b16 %v3691
    %v5048 = vunpack.c.l.b16 %v3692
    %v5049 = vunpack.c.h.b16 %v3692
    %v5050 = vunpack.c.l.b16 %v3693
    %v5051 = vunpack.c.h.b16 %v3693
    %v5052 = vunpack.c.l.b16 %v3694
    %v5053 = vunpack.c.l.b16 %v3695
    %v5054 = vunpack.c.h.b16 %v3695
    %v5055 = vunpack.c.l.b16 %v3696
    %v5056 = vunpack.c.h.b16 %v3696
    %v5057 = vunpack.c.l.b16 %v3697
    %v5058 = vunpack.c.h.b16 %v3697
    %v5059 = vunpack.c.l.b16 %v3698
    %v5060 = vunpack.c.l.b16 %v3699
    %v5061 = vunpack.c.h.b16 %v3699
    %v5062 = vunpack.c.l.b16 %v3700
    %v5063 = vunpack.c.h.b16 %v3700
    %v5064 = vunpack.c.l.b16 %v3701
    %v5065 = vunpack.c.h.b16 %v3701
    %v5066 = vunpack.c.l.b16 %v3702
    %v5067 = vunpack.c.l.b16 %v3703
    %v5068 = vunpack.c.h.b16 %v3703
    %v5069 = vunpack.c.l.b16 %v3704
    %v5070 = vunpack.c.h.b16 %v3704
    %v5071 = vunpack.c.l.b16 %v3705
    %v5072 = vunpack.c.h.b16 %v3705
    %v5073 = vunpack.c.l.b16 %v3706
    %v5074 = vunpack.c.l.b16 %v3707
    %v5075 = vunpack.c.h.b16 %v3707
    %v5076 = vunpack.c.l.b16 %v3708
    %v5077 = vunpack.c.h.b16 %v3708
    %v5078 = vunpack.c.l.b16 %v3709
    %v5079 = vunpack.c.h.b16 %v3709
    %v5080 = vunpack.c.l.b16 %v3710
    %v5081 = vunpack.c.l.b16 %v3711
    %v5082 = vunpack.c.h.b16 %v3711
    %v5083 = vunpack.c.l.b16 %v3712
    %v5084 = vunpack.c.h.b16 %v3712
    %v5085 = vunpack.c.l.b16 %v3713
    %v5086 = vunpack.c.h.b16 %v3713
    %v5087 = vunpack.c.l.b16 %v3714
    %v5088 = vunpack.c.l.b16 %v3715
    %v5089 = vunpack.c.h.b16 %v3715
    %v5090 = vunpack.c.l.b16 %v3716
    %v5091 = vunpack.c.h.b16 %v3716
    %v5092 = vunpack.c.l.b16 %v3717
    %v5093 = vunpack.c.h.b16 %v3717
    %v5094 = vunpack.c.l.b16 %v3718
    %v5095 = vunpack.c.l.b16 %v3719
    %v5096 = vunpack.c.h.b16 %v3719
    %v5097 = vunpack.c.l.b16 %v3720
    %v5098 = vunpack.c.h.b16 %v3720
    %v5099 = vunpack.c.l.b16 %v3721
    %v5100 = vunpack.c.h.b16 %v3721
    %v5101 = vunpack.c.l.b16 %v3722
    %v5102 = vunpack.c.l.b16 %v3723
    %v5103 = vunpack.c.h.b16 %v3723
    %v5104 = vunpack.c.l.b16 %v3724
    %v5105 = vunpack.c.h.b16 %v3724
    %v5106 = vunpack.c.l.b16 %v3725
    %v5107 = vunpack.c.h.b16 %v3725
    %v5108 = vunpack.c.l.b16 %v3726
    %v5109 = vunpack.c.l.b16 %v3727
    %v5110 = vunpack.c.h.b16 %v3727
    %v5111 = vunpack.c.l.b16 %v3728
    %v5112 = vunpack.c.h.b16 %v3728
    %v5113 = vunpack.c.l.b16 %v3729
    %v5114 = vunpack.c.h.b16 %v3729
    %v5115 = vunpack.c.l.b16 %v3730
    %v5116 = vunpack.c.l.b16 %v3731
    %v5117 = vunpack.c.h.b16 %v3731
    %v5118 = vunpack.c.l.b16 %v3732
    %v5119 = vunpack.c.h.b16 %v3732
    %v5120 = vunpack.c.l.b16 %v3733
    %v5121 = vunpack.c.h.b16 %v3733
    %v5122 = vunpack.c.l.b16 %v3734
    %v5123 = vunpack.c.l.b16 %v3735
    %v5124 = vunpack.c.h.b16 %v3735
    %v5125 = vunpack.c.l.b16 %v3736
    %v5126 = vunpack.c.h.b16 %v3736
    %v5127 = vunpack.c.l.b16 %v3737
    %v5128 = vunpack.c.h.b16 %v3737
    %v5129 = vunpack.c.l.b16 %v3738
    %v5130 = vunpack.c.l.b16 %v3739
    %v5131 = vunpack.c.h.b16 %v3739
    %v5132 = vunpack.c.l.b16 %v3740
    %v5133 = vunpack.c.h.b16 %v3740
    %v5134 = vunpack.c.l.b16 %v3741
    %v5135 = vunpack.c.h.b16 %v3741
    %v5136 = vunpack.c.l.b16 %v3742
    %v5137 = vunpack.c.l.b16 %v3743
    %v5138 = vunpack.c.h.b16 %v3743
    %v5139 = vunpack.c.l.b16 %v3744
    %v5140 = vunpack.c.h.b16 %v3744
    %v5141 = vunpack.c.l.b16 %v3745
    %v5142 = vunpack.c.h.b16 %v3745
    %v5143 = vunpack.c.l.b16 %v3746
    %v5144 = vunpack.c.l.b16 %v3747
    %v5145 = vunpack.c.h.b16 %v3747
    %v5146 = vunpack.c.l.b16 %v3748
    %v5147 = vunpack.c.h.b16 %v3748
    %v5148 = vunpack.c.l.b16 %v3749
    %v5149 = vunpack.c.h.b16 %v3749
    %v5150 = vunpack.c.l.b16 %v3750
    %v5151 = vunpack.c.l.b16 %v3751
    %v5152 = vunpack.c.h.b16 %v3751
    %v5153 = vunpack.c.l.b16 %v3752
    %v5154 = vunpack.c.h.b16 %v3752
    %v5155 = vunpack.c.l.b16 %v3753
    %v5156 = vunpack.c.h.b16 %v3753
    %v5157 = vunpack.c.l.b16 %v3754
    %v5158 = vunpack.c.l.b16 %v3755
    %v5159 = vunpack.c.h.b16 %v3755
    %v5160 = vunpack.c.l.b16 %v3756
    %v5161 = vunpack.c.h.b16 %v3756
    %v5162 = vunpack.c.l.b16 %v3757
    %v5163 = vunpack.c.h.b16 %v3757
    %v5164 = vunpack.c.l.b16 %v3758
    %v5165 = vunpack.c.l.b16 %v3759
    %v5166 = vunpack.c.h.b16 %v3759
    %v5167 = vunpack.c.l.b16 %v3760
    %v5168 = vunpack.c.h.b16 %v3760
    %v5169 = vunpack.c.l.b16 %v3761
    %v5170 = vunpack.c.h.b16 %v3761
    %v5171 = vunpack.c.l.b16 %v3762
    %v5172 = vunpack.c.l.b16 %v3763
    %v5173 = vunpack.c.h.b16 %v3763
    %v5174 = vunpack.c.l.b16 %v3764
    %v5175 = vunpack.c.h.b16 %v3764
    %v5176 = vunpack.c.l.b16 %v3765
    %v5177 = vunpack.c.h.b16 %v3765
    %v5178 = vunpack.c.l.b16 %v3766
    %v5179 = vunpack.c.l.b16 %v3767
    %v5180 = vunpack.c.h.b16 %v3767
    %v5181 = vunpack.c.l.b16 %v3768
    %v5182 = vunpack.c.h.b16 %v3768
    %v5183 = vunpack.c.l.b16 %v3769
    %v5184 = vunpack.c.h.b16 %v3769
    %v5185 = vunpack.c.l.b16 %v3770
    %v5186 = vunpack.c.l.b16 %v3771
    %v5187 = vunpack.c.h.b16 %v3771
    %v5188 = vunpack.c.l.b16 %v3772
    %v5189 = vunpack.c.h.b16 %v3772
    %v5190 = vunpack.c.l.b16 %v3773
    %v5191 = vunpack.c.h.b16 %v3773
    %v5192 = vunpack.c.l.b16 %v3774
    %v5193 = vunpack.c.l.b16 %v3775
    %v5194 = vunpack.c.h.b16 %v3775
    %v5195 = vunpack.c.l.b16 %v3776
    %v5196 = vunpack.c.h.b16 %v3776
    %v5197 = vunpack.c.l.b16 %v3777
    %v5198 = vunpack.c.h.b16 %v3777
    %v5199 = vunpack.c.l.b16 %v3778
    %v5200 = vunpack.c.l.b16 %v3779
    %v5201 = vunpack.c.h.b16 %v3779
    %v5202 = vunpack.c.l.b16 %v3780
    %v5203 = vunpack.c.h.b16 %v3780
    %v5204 = vunpack.c.l.b16 %v3781
    %v5205 = vunpack.c.h.b16 %v3781
    %v5206 = vunpack.c.l.b16 %v3782
    %v5207 = vunpack.c.l.b16 %v3783
    %v5208 = vunpack.c.h.b16 %v3783
    %v5209 = vunpack.c.l.b16 %v3784
    %v5210 = vunpack.c.h.b16 %v3784
    %v5211 = vunpack.c.l.b16 %v3785
    %v5212 = vunpack.c.h.b16 %v3785
    %v5213 = vunpack.c.l.b16 %v3786
    %v5214 = vunpack.c.l.b16 %v3787
    %v5215 = vunpack.c.h.b16 %v3787
    %v5216 = vunpack.c.l.b16 %v3788
    %v5217 = vunpack.c.h.b16 %v3788
    %v5218 = vunpack.c.l.b16 %v3789
    %v5219 = vunpack.c.h.b16 %v3789
    %v5220 = vunpack.c.l.b16 %v3790
    %v5221 = vunpack.c.l.b16 %v3791
    %v5222 = vunpack.c.h.b16 %v3791
    %v5223 = vunpack.c.l.b16 %v3792
    %v5224 = vunpack.c.h.b16 %v3792
    %v5225 = vunpack.c.l.b16 %v3793
    %v5226 = vunpack.c.h.b16 %v3793
    %v5227 = vunpack.c.l.b16 %v3794
    %v5228 = vunpack.c.l.b16 %v3795
    %v5229 = vunpack.c.h.b16 %v3795
    %v5230 = vunpack.c.l.b16 %v3796
    %v5231 = vunpack.c.h.b16 %v3796
    %v5232 = vunpack.c.l.b16 %v3797
    %v5233 = vunpack.c.h.b16 %v3797
    %v5234 = vunpack.c.l.b16 %v3798
    %v5235 = vunpack.c.l.b16 %v3799
    %v5236 = vunpack.c.h.b16 %v3799
    %v5237 = vunpack.c.l.b16 %v3800
    %v5238 = vunpack.c.h.b16 %v3800
    %v5239 = vunpack.c.l.b16 %v3801
    %v5240 = vunpack.c.h.b16 %v3801
    %v5241 = vunpack.c.l.b16 %v3802
    %v5242 = vunpack.c.l.b16 %v3803
    %v5243 = vunpack.c.h.b16 %v3803
    %v5244 = vunpack.c.l.b16 %v3804
    %v5245 = vunpack.c.h.b16 %v3804
    %v5246 = vunpack.c.l.b16 %v3805
    %v5247 = vunpack.c.h.b16 %v3805
    %v5248 = vunpack.c.l.b16 %v3806
    %v5249 = vunpack.c.l.b16 %v3807
    %v5250 = vunpack.c.h.b16 %v3807
    %v5251 = vunpack.c.l.b16 %v3808
    %v5252 = vunpack.c.h.b16 %v3808
    %v5253 = vunpack.c.l.b16 %v3809
    %v5254 = vunpack.c.h.b16 %v3809
    %v5255 = vunpack.c.l.b16 %v3810
    %v5256 = vpack.c.b16 %v4367, %v4360
    %v5257 = vpack.c.b16 %v4368, %v4361
    %v5258 = vpack.c.b16 %v4369, %v4362
    %v5259 = vpack.c.b16 %v4370, %v4363
    %v5260 = vpack.c.b16 %v4371, %v4364
    %v5261 = vpack.c.b16 %v4372, %v4365
    %v5262 = vpack.c.b16 %v4373, %v4366
    %v5263 = vpack.c.b16 %v4381, %v4374
    %v5264 = vpack.c.b16 %v4382, %v4375
    %v5265 = vpack.c.b16 %v4383, %v4376
    %v5266 = vpack.c.b16 %v4384, %v4377
    %v5267 = vpack.c.b16 %v4385, %v4378
    %v5268 = vpack.c.b16 %v4386, %v4379
    %v5269 = vpack.c.b16 %v4387, %v4380
    %v5270 = vpack.c.b16 %v4395, %v4388
    %v5271 = vpack.c.b16 %v4396, %v4389
    %v5272 = vpack.c.b16 %v4397, %v4390
    %v5273 = vpack.c.b16 %v4398, %v4391
    %v5274 = vpack.c.b16 %v4399, %v4392
    %v5275 = vpack.c.b16 %v4400, %v4393
    %v5276 = vpack.c.b16 %v4401, %v4394
    %v5277 = vpack.c.b16 %v4409, %v4402
    %v5278 = vpack.c.b16 %v4410, %v4403
    %v5279 = vpack.c.b16 %v4411, %v4404
    %v5280 = vpack.c.b16 %v4412, %v4405
    %v5281 = vpack.c.b16 %v4413, %v4406
    %v5282 = vpack.c.b16 %v4414, %v4407
    %v5283 = vpack.c.b16 %v4415, %v4408
    %v5284 = vpack.c.b16 %v4423, %v4416
    %v5285 = vpack.c.b16 %v4424, %v4417
    %v5286 = vpack.c.b16 %v4425, %v4418
    %v5287 = vpack.c.b16 %v4426, %v4419
    %v5288 = vpack.c.b16 %v4427, %v4420
    %v5289 = vpack.c.b16 %v4428, %v4421
    %v5290 = vpack.c.b16 %v4429, %v4422
    %v5291 = vpack.c.b16 %v4437, %v4430
    %v5292 = vpack.c.b16 %v4438, %v4431
    %v5293 = vpack.c.b16 %v4439, %v4432
    %v5294 = vpack.c.b16 %v4440, %v4433
    %v5295 = vpack.c.b16 %v4441, %v4434
    %v5296 = vpack.c.b16 %v4442, %v4435
    %v5297 = vpack.c.b16 %v4443, %v4436
    %v5298 = vpack.c.b16 %v4451, %v4444
    %v5299 = vpack.c.b16 %v4452, %v4445
    %v5300 = vpack.c.b16 %v4453, %v4446
    %v5301 = vpack.c.b16 %v4454, %v4447
    %v5302 = vpack.c.b16 %v4455, %v4448
    %v5303 = vpack.c.b16 %v4456, %v4449
    %v5304 = vpack.c.b16 %v4457, %v4450
    %v5305 = vpack.c.b16 %v4465, %v4458
    %v5306 = vpack.c.b16 %v4466, %v4459
    %v5307 = vpack.c.b16 %v4467, %v4460
    %v5308 = vpack.c.b16 %v4468, %v4461
    %v5309 = vpack.c.b16 %v4469, %v4462
    %v5310 = vpack.c.b16 %v4470, %v4463
    %v5311 = vpack.c.b16 %v4471, %v4464
    %v5312 = vpack.c.b16 %v4479, %v4472
    %v5313 = vpack.c.b16 %v4480, %v4473
    %v5314 = vpack.c.b16 %v4481, %v4474
    %v5315 = vpack.c.b16 %v4482, %v4475
    %v5316 = vpack.c.b16 %v4483, %v4476
    %v5317 = vpack.c.b16 %v4484, %v4477
    %v5318 = vpack.c.b16 %v4485, %v4478
    %v5319 = vpack.c.b16 %v4493, %v4486
    %v5320 = vpack.c.b16 %v4494, %v4487
    %v5321 = vpack.c.b16 %v4495, %v4488
    %v5322 = vpack.c.b16 %v4496, %v4489
    %v5323 = vpack.c.b16 %v4497, %v4490
    %v5324 = vpack.c.b16 %v4498, %v4491
    %v5325 = vpack.c.b16 %v4499, %v4492
    %v5326 = vpack.c.b16 %v4507, %v4500
    %v5327 = vpack.c.b16 %v4508, %v4501
    %v5328 = vpack.c.b16 %v4509, %v4502
    %v5329 = vpack.c.b16 %v4510, %v4503
    %v5330 = vpack.c.b16 %v4511, %v4504
    %v5331 = vpack.c.b16 %v4512, %v4505
    %v5332 = vpack.c.b16 %v4513, %v4506
    %v5333 = vpack.c.b16 %v4521, %v4514
    %v5334 = vpack.c.b16 %v4522, %v4515
    %v5335 = vpack.c.b16 %v4523, %v4516
    %v5336 = vpack.c.b16 %v4524, %v4517
    %v5337 = vpack.c.b16 %v4525, %v4518
    %v5338 = vpack.c.b16 %v4526, %v4519
    %v5339 = vpack.c.b16 %v4527, %v4520
    %v5340 = vpack.c.b16 %v4535, %v4528
    %v5341 = vpack.c.b16 %v4536, %v4529
    %v5342 = vpack.c.b16 %v4537, %v4530
    %v5343 = vpack.c.b16 %v4538, %v4531
    %v5344 = vpack.c.b16 %v4539, %v4532
    %v5345 = vpack.c.b16 %v4540, %v4533
    %v5346 = vpack.c.b16 %v4541, %v4534
    %v5347 = vpack.c.b16 %v4549, %v4542
    %v5348 = vpack.c.b16 %v4550, %v4543
    %v5349 = vpack.c.b16 %v4551, %v4544
    %v5350 = vpack.c.b16 %v4552, %v4545
    %v5351 = vpack.c.b16 %v4553, %v4546
    %v5352 = vpack.c.b16 %v4554, %v4547
    %v5353 = vpack.c.b16 %v4555, %v4548
    %v5354 = vpack.c.b16 %v4563, %v4556
    %v5355 = vpack.c.b16 %v4564, %v4557
    %v5356 = vpack.c.b16 %v4565, %v4558
    %v5357 = vpack.c.b16 %v4566, %v4559
    %v5358 = vpack.c.b16 %v4567, %v4560
    %v5359 = vpack.c.b16 %v4568, %v4561
    %v5360 = vpack.c.b16 %v4569, %v4562
    %v5361 = vpack.c.b16 %v4577, %v4570
    %v5362 = vpack.c.b16 %v4578, %v4571
    %v5363 = vpack.c.b16 %v4579, %v4572
    %v5364 = vpack.c.b16 %v4580, %v4573
    %v5365 = vpack.c.b16 %v4581, %v4574
    %v5366 = vpack.c.b16 %v4582, %v4575
    %v5367 = vpack.c.b16 %v4583, %v4576
    %v5368 = vpack.c.b16 %v4591, %v4584
    %v5369 = vpack.c.b16 %v4592, %v4585
    %v5370 = vpack.c.b16 %v4593, %v4586
    %v5371 = vpack.c.b16 %v4594, %v4587
    %v5372 = vpack.c.b16 %v4595, %v4588
    %v5373 = vpack.c.b16 %v4596, %v4589
    %v5374 = vpack.c.b16 %v4597, %v4590
    %v5375 = vpack.c.b16 %v4605, %v4598
    %v5376 = vpack.c.b16 %v4606, %v4599
    %v5377 = vpack.c.b16 %v4607, %v4600
    %v5378 = vpack.c.b16 %v4608, %v4601
    %v5379 = vpack.c.b16 %v4609, %v4602
    %v5380 = vpack.c.b16 %v4610, %v4603
    %v5381 = vpack.c.b16 %v4611, %v4604
    %v5382 = vpack.c.b16 %v4619, %v4612
    %v5383 = vpack.c.b16 %v4620, %v4613
    %v5384 = vpack.c.b16 %v4621, %v4614
    %v5385 = vpack.c.b16 %v4622, %v4615
    %v5386 = vpack.c.b16 %v4623, %v4616
    %v5387 = vpack.c.b16 %v4624, %v4617
    %v5388 = vpack.c.b16 %v4625, %v4618
    %v5389 = vpack.c.b16 %v4633, %v4626
    %v5390 = vpack.c.b16 %v4634, %v4627
    %v5391 = vpack.c.b16 %v4635, %v4628
    %v5392 = vpack.c.b16 %v4636, %v4629
    %v5393 = vpack.c.b16 %v4637, %v4630
    %v5394 = vpack.c.b16 %v4638, %v4631
    %v5395 = vpack.c.b16 %v4639, %v4632
    %v5396 = vpack.c.b16 %v4647, %v4640
    %v5397 = vpack.c.b16 %v4648, %v4641
    %v5398 = vpack.c.b16 %v4649, %v4642
    %v5399 = vpack.c.b16 %v4650, %v4643
    %v5400 = vpack.c.b16 %v4651, %v4644
    %v5401 = vpack.c.b16 %v4652, %v4645
    %v5402 = vpack.c.b16 %v4653, %v4646
    %v5403 = vpack.c.b16 %v4661, %v4654
    %v5404 = vpack.c.b16 %v4662, %v4655
    %v5405 = vpack.c.b16 %v4663, %v4656
    %v5406 = vpack.c.b16 %v4664, %v4657
    %v5407 = vpack.c.b16 %v4665, %v4658
    %v5408 = vpack.c.b16 %v4666, %v4659
    %v5409 = vpack.c.b16 %v4667, %v4660
    %v5410 = vpack.c.b16 %v4675, %v4668
    %v5411 = vpack.c.b16 %v4676, %v4669
    %v5412 = vpack.c.b16 %v4677, %v4670
    %v5413 = vpack.c.b16 %v4678, %v4671
    %v5414 = vpack.c.b16 %v4679, %v4672
    %v5415 = vpack.c.b16 %v4680, %v4673
    %v5416 = vpack.c.b16 %v4681, %v4674
    %v5417 = vpack.c.b16 %v4689, %v4682
    %v5418 = vpack.c.b16 %v4690, %v4683
    %v5419 = vpack.c.b16 %v4691, %v4684
    %v5420 = vpack.c.b16 %v4692, %v4685
    %v5421 = vpack.c.b16 %v4693, %v4686
    %v5422 = vpack.c.b16 %v4694, %v4687
    %v5423 = vpack.c.b16 %v4695, %v4688
    %v5424 = vpack.c.b16 %v4703, %v4696
    %v5425 = vpack.c.b16 %v4704, %v4697
    %v5426 = vpack.c.b16 %v4705, %v4698
    %v5427 = vpack.c.b16 %v4706, %v4699
    %v5428 = vpack.c.b16 %v4707, %v4700
    %v5429 = vpack.c.b16 %v4708, %v4701
    %v5430 = vpack.c.b16 %v4709, %v4702
    %v5431 = vpack.c.b16 %v4717, %v4710
    %v5432 = vpack.c.b16 %v4718, %v4711
    %v5433 = vpack.c.b16 %v4719, %v4712
    %v5434 = vpack.c.b16 %v4720, %v4713
    %v5435 = vpack.c.b16 %v4721, %v4714
    %v5436 = vpack.c.b16 %v4722, %v4715
    %v5437 = vpack.c.b16 %v4723, %v4716
    %v5438 = vpack.c.b16 %v4731, %v4724
    %v5439 = vpack.c.b16 %v4732, %v4725
    %v5440 = vpack.c.b16 %v4733, %v4726
    %v5441 = vpack.c.b16 %v4734, %v4727
    %v5442 = vpack.c.b16 %v4735, %v4728
    %v5443 = vpack.c.b16 %v4736, %v4729
    %v5444 = vpack.c.b16 %v4737, %v4730
    %v5445 = vpack.c.b16 %v4745, %v4738
    %v5446 = vpack.c.b16 %v4746, %v4739
    %v5447 = vpack.c.b16 %v4747, %v4740
    %v5448 = vpack.c.b16 %v4748, %v4741
    %v5449 = vpack.c.b16 %v4749, %v4742
    %v5450 = vpack.c.b16 %v4750, %v4743
    %v5451 = vpack.c.b16 %v4751, %v4744
    %v5452 = vpack.c.b16 %v4759, %v4752
    %v5453 = vpack.c.b16 %v4760, %v4753
    %v5454 = vpack.c.b16 %v4761, %v4754
    %v5455 = vpack.c.b16 %v4762, %v4755
    %v5456 = vpack.c.b16 %v4763, %v4756
    %v5457 = vpack.c.b16 %v4764, %v4757
    %v5458 = vpack.c.b16 %v4765, %v4758
    %v5459 = vpack.c.b16 %v4773, %v4766
    %v5460 = vpack.c.b16 %v4774, %v4767
    %v5461 = vpack.c.b16 %v4775, %v4768
    %v5462 = vpack.c.b16 %v4776, %v4769
    %v5463 = vpack.c.b16 %v4777, %v4770
    %v5464 = vpack.c.b16 %v4778, %v4771
    %v5465 = vpack.c.b16 %v4779, %v4772
    %v5466 = vpack.c.b16 %v4787, %v4780
    %v5467 = vpack.c.b16 %v4788, %v4781
    %v5468 = vpack.c.b16 %v4789, %v4782
    %v5469 = vpack.c.b16 %v4790, %v4783
    %v5470 = vpack.c.b16 %v4791, %v4784
    %v5471 = vpack.c.b16 %v4792, %v4785
    %v5472 = vpack.c.b16 %v4793, %v4786
    %v5473 = vpack.c.b16 %v4801, %v4794
    %v5474 = vpack.c.b16 %v4802, %v4795
    %v5475 = vpack.c.b16 %v4803, %v4796
    %v5476 = vpack.c.b16 %v4804, %v4797
    %v5477 = vpack.c.b16 %v4805, %v4798
    %v5478 = vpack.c.b16 %v4806, %v4799
    %v5479 = vpack.c.b16 %v4807, %v4800
    %v5480 = vpack.c.b16 %v4815, %v4808
    %v5481 = vpack.c.b16 %v4816, %v4809
    %v5482 = vpack.c.b16 %v4817, %v4810
    %v5483 = vpack.c.b16 %v4818, %v4811
    %v5484 = vpack.c.b16 %v4819, %v4812
    %v5485 = vpack.c.b16 %v4820, %v4813
    %v5486 = vpack.c.b16 %v4821, %v4814
    %v5487 = vpack.c.b16 %v4829, %v4822
    %v5488 = vpack.c.b16 %v4830, %v4823
    %v5489 = vpack.c.b16 %v4831, %v4824
    %v5490 = vpack.c.b16 %v4832, %v4825
    %v5491 = vpack.c.b16 %v4833, %v4826
    %v5492 = vpack.c.b16 %v4834, %v4827
    %v5493 = vpack.c.b16 %v4835, %v4828
    %v5494 = vpack.c.b16 %v4843, %v4836
    %v5495 = vpack.c.b16 %v4844, %v4837
    %v5496 = vpack.c.b16 %v4845, %v4838
    %v5497 = vpack.c.b16 %v4846, %v4839
    %v5498 = vpack.c.b16 %v4847, %v4840
    %v5499 = vpack.c.b16 %v4848, %v4841
    %v5500 = vpack.c.b16 %v4849, %v4842
    %v5501 = vpack.c.b16 %v4857, %v4850
    %v5502 = vpack.c.b16 %v4858, %v4851
    %v5503 = vpack.c.b16 %v4859, %v4852
    %v5504 = vpack.c.b16 %v4860, %v4853
    %v5505 = vpack.c.b16 %v4861, %v4854
    %v5506 = vpack.c.b16 %v4862, %v4855
    %v5507 = vpack.c.b16 %v4863, %v4856
    %v5508 = vpack.c.b16 %v4871, %v4864
    %v5509 = vpack.c.b16 %v4872, %v4865
    %v5510 = vpack.c.b16 %v4873, %v4866
    %v5511 = vpack.c.b16 %v4874, %v4867
    %v5512 = vpack.c.b16 %v4875, %v4868
    %v5513 = vpack.c.b16 %v4876, %v4869
    %v5514 = vpack.c.b16 %v4877, %v4870
    %v5515 = vpack.c.b16 %v4885, %v4878
    %v5516 = vpack.c.b16 %v4886, %v4879
    %v5517 = vpack.c.b16 %v4887, %v4880
    %v5518 = vpack.c.b16 %v4888, %v4881
    %v5519 = vpack.c.b16 %v4889, %v4882
    %v5520 = vpack.c.b16 %v4890, %v4883
    %v5521 = vpack.c.b16 %v4891, %v4884
    %v5522 = vpack.c.b16 %v4899, %v4892
    %v5523 = vpack.c.b16 %v4900, %v4893
    %v5524 = vpack.c.b16 %v4901, %v4894
    %v5525 = vpack.c.b16 %v4902, %v4895
    %v5526 = vpack.c.b16 %v4903, %v4896
    %v5527 = vpack.c.b16 %v4904, %v4897
    %v5528 = vpack.c.b16 %v4905, %v4898
    %v5529 = vpack.c.b16 %v4913, %v4906
    %v5530 = vpack.c.b16 %v4914, %v4907
    %v5531 = vpack.c.b16 %v4915, %v4908
    %v5532 = vpack.c.b16 %v4916, %v4909
    %v5533 = vpack.c.b16 %v4917, %v4910
    %v5534 = vpack.c.b16 %v4918, %v4911
    %v5535 = vpack.c.b16 %v4919, %v4912
    %v5536 = vpack.c.b16 %v4927, %v4920
    %v5537 = vpack.c.b16 %v4928, %v4921
    %v5538 = vpack.c.b16 %v4929, %v4922
    %v5539 = vpack.c.b16 %v4930, %v4923
    %v5540 = vpack.c.b16 %v4931, %v4924
    %v5541 = vpack.c.b16 %v4932, %v4925
    %v5542 = vpack.c.b16 %v4933, %v4926
    %v5543 = vpack.c.b16 %v4941, %v4934
    %v5544 = vpack.c.b16 %v4942, %v4935
    %v5545 = vpack.c.b16 %v4943, %v4936
    %v5546 = vpack.c.b16 %v4944, %v4937
    %v5547 = vpack.c.b16 %v4945, %v4938
    %v5548 = vpack.c.b16 %v4946, %v4939
    %v5549 = vpack.c.b16 %v4947, %v4940
    %v5550 = vpack.c.b16 %v4955, %v4948
    %v5551 = vpack.c.b16 %v4956, %v4949
    %v5552 = vpack.c.b16 %v4957, %v4950
    %v5553 = vpack.c.b16 %v4958, %v4951
    %v5554 = vpack.c.b16 %v4959, %v4952
    %v5555 = vpack.c.b16 %v4960, %v4953
    %v5556 = vpack.c.b16 %v4961, %v4954
    %v5557 = vpack.c.b16 %v4969, %v4962
    %v5558 = vpack.c.b16 %v4970, %v4963
    %v5559 = vpack.c.b16 %v4971, %v4964
    %v5560 = vpack.c.b16 %v4972, %v4965
    %v5561 = vpack.c.b16 %v4973, %v4966
    %v5562 = vpack.c.b16 %v4974, %v4967
    %v5563 = vpack.c.b16 %v4975, %v4968
    %v5564 = vpack.c.b16 %v4983, %v4976
    %v5565 = vpack.c.b16 %v4984, %v4977
    %v5566 = vpack.c.b16 %v4985, %v4978
    %v5567 = vpack.c.b16 %v4986, %v4979
    %v5568 = vpack.c.b16 %v4987, %v4980
    %v5569 = vpack.c.b16 %v4988, %v4981
    %v5570 = vpack.c.b16 %v4989, %v4982
    %v5571 = vpack.c.b16 %v4997, %v4990
    %v5572 = vpack.c.b16 %v4998, %v4991
    %v5573 = vpack.c.b16 %v4999, %v4992
    %v5574 = vpack.c.b16 %v5000, %v4993
    %v5575 = vpack.c.b16 %v5001, %v4994
    %v5576 = vpack.c.b16 %v5002, %v4995
    %v5577 = vpack.c.b16 %v5003, %v4996
    %v5578 = vpack.c.b16 %v5011, %v5004
    %v5579 = vpack.c.b16 %v5012, %v5005
    %v5580 = vpack.c.b16 %v5013, %v5006
    %v5581 = vpack.c.b16 %v5014, %v5007
    %v5582 = vpack.c.b16 %v5015, %v5008
    %v5583 = vpack.c.b16 %v5016, %v5009
    %v5584 = vpack.c.b16 %v5017, %v5010
    %v5585 = vpack.c.b16 %v5025, %v5018
    %v5586 = vpack.c.b16 %v5026, %v5019
    %v5587 = vpack.c.b16 %v5027, %v5020
    %v5588 = vpack.c.b16 %v5028, %v5021
    %v5589 = vpack.c.b16 %v5029, %v5022
    %v5590 = vpack.c.b16 %v5030, %v5023
    %v5591 = vpack.c.b16 %v5031, %v5024
    %v5592 = vpack.c.b16 %v5039, %v5032
    %v5593 = vpack.c.b16 %v5040, %v5033
    %v5594 = vpack.c.b16 %v5041, %v5034
    %v5595 = vpack.c.b16 %v5042, %v5035
    %v5596 = vpack.c.b16 %v5043, %v5036
    %v5597 = vpack.c.b16 %v5044, %v5037
    %v5598 = vpack.c.b16 %v5045, %v5038
    %v5599 = vpack.c.b16 %v5053, %v5046
    %v5600 = vpack.c.b16 %v5054, %v5047
    %v5601 = vpack.c.b16 %v5055, %v5048
    %v5602 = vpack.c.b16 %v5056, %v5049
    %v5603 = vpack.c.b16 %v5057, %v5050
    %v5604 = vpack.c.b16 %v5058, %v5051
    %v5605 = vpack.c.b16 %v5059, %v5052
    %v5606 = vpack.c.b16 %v5067, %v5060
    %v5607 = vpack.c.b16 %v5068, %v5061
    %v5608 = vpack.c.b16 %v5069, %v5062
    %v5609 = vpack.c.b16 %v5070, %v5063
    %v5610 = vpack.c.b16 %v5071, %v5064
    %v5611 = vpack.c.b16 %v5072, %v5065
    %v5612 = vpack.c.b16 %v5073, %v5066
    %v5613 = vpack.c.b16 %v5081, %v5074
    %v5614 = vpack.c.b16 %v5082, %v5075
    %v5615 = vpack.c.b16 %v5083, %v5076
    %v5616 = vpack.c.b16 %v5084, %v5077
    %v5617 = vpack.c.b16 %v5085, %v5078
    %v5618 = vpack.c.b16 %v5086, %v5079
    %v5619 = vpack.c.b16 %v5087, %v5080
    %v5620 = vpack.c.b16 %v5095, %v5088
    %v5621 = vpack.c.b16 %v5096, %v5089
    %v5622 = vpack.c.b16 %v5097, %v5090
    %v5623 = vpack.c.b16 %v5098, %v5091
    %v5624 = vpack.c.b16 %v5099, %v5092
    %v5625 = vpack.c.b16 %v5100, %v5093
    %v5626 = vpack.c.b16 %v5101, %v5094
    %v5627 = vpack.c.b16 %v5109, %v5102
    %v5628 = vpack.c.b16 %v5110, %v5103
    %v5629 = vpack.c.b16 %v5111, %v5104
    %v5630 = vpack.c.b16 %v5112, %v5105
    %v5631 = vpack.c.b16 %v5113, %v5106
    %v5632 = vpack.c.b16 %v5114, %v5107
    %v5633 = vpack.c.b16 %v5115, %v5108
    %v5634 = vpack.c.b16 %v5123, %v5116
    %v5635 = vpack.c.b16 %v5124, %v5117
    %v5636 = vpack.c.b16 %v5125, %v5118
    %v5637 = vpack.c.b16 %v5126, %v5119
    %v5638 = vpack.c.b16 %v5127, %v5120
    %v5639 = vpack.c.b16 %v5128, %v5121
    %v5640 = vpack.c.b16 %v5129, %v5122
    %v5641 = vpack.c.b16 %v5137, %v5130
    %v5642 = vpack.c.b16 %v5138, %v5131
    %v5643 = vpack.c.b16 %v5139, %v5132
    %v5644 = vpack.c.b16 %v5140, %v5133
    %v5645 = vpack.c.b16 %v5141, %v5134
    %v5646 = vpack.c.b16 %v5142, %v5135
    %v5647 = vpack.c.b16 %v5143, %v5136
    %v5648 = vpack.c.b16 %v5151, %v5144
    %v5649 = vpack.c.b16 %v5152, %v5145
    %v5650 = vpack.c.b16 %v5153, %v5146
    %v5651 = vpack.c.b16 %v5154, %v5147
    %v5652 = vpack.c.b16 %v5155, %v5148
    %v5653 = vpack.c.b16 %v5156, %v5149
    %v5654 = vpack.c.b16 %v5157, %v5150
    %v5655 = vpack.c.b16 %v5165, %v5158
    %v5656 = vpack.c.b16 %v5166, %v5159
    %v5657 = vpack.c.b16 %v5167, %v5160
    %v5658 = vpack.c.b16 %v5168, %v5161
    %v5659 = vpack.c.b16 %v5169, %v5162
    %v5660 = vpack.c.b16 %v5170, %v5163
    %v5661 = vpack.c.b16 %v5171, %v5164
    %v5662 = vpack.c.b16 %v5179, %v5172
    %v5663 = vpack.c.b16 %v5180, %v5173
    %v5664 = vpack.c.b16 %v5181, %v5174
    %v5665 = vpack.c.b16 %v5182, %v5175
    %v5666 = vpack.c.b16 %v5183, %v5176
    %v5667 = vpack.c.b16 %v5184, %v5177
    %v5668 = vpack.c.b16 %v5185, %v5178
    %v5669 = vpack.c.b16 %v5193, %v5186
    %v5670 = vpack.c.b16 %v5194, %v5187
    %v5671 = vpack.c.b16 %v5195, %v5188
    %v5672 = vpack.c.b16 %v5196, %v5189
    %v5673 = vpack.c.b16 %v5197, %v5190
    %v5674 = vpack.c.b16 %v5198, %v5191
    %v5675 = vpack.c.b16 %v5199, %v5192
    %v5676 = vpack.c.b16 %v5207, %v5200
    %v5677 = vpack.c.b16 %v5208, %v5201
    %v5678 = vpack.c.b16 %v5209, %v5202
    %v5679 = vpack.c.b16 %v5210, %v5203
    %v5680 = vpack.c.b16 %v5211, %v5204
    %v5681 = vpack.c.b16 %v5212, %v5205
    %v5682 = vpack.c.b16 %v5213, %v5206
    %v5683 = vpack.c.b16 %v5221, %v5214
    %v5684 = vpack.c.b16 %v5222, %v5215
    %v5685 = vpack.c.b16 %v5223, %v5216
    %v5686 = vpack.c.b16 %v5224, %v5217
    %v5687 = vpack.c.b16 %v5225, %v5218
    %v5688 = vpack.c.b16 %v5226, %v5219
    %v5689 = vpack.c.b16 %v5227, %v5220
    %v5690 = vpack.c.b16 %v5235, %v5228
    %v5691 = vpack.c.b16 %v5236, %v5229
    %v5692 = vpack.c.b16 %v5237, %v5230
    %v5693 = vpack.c.b16 %v5238, %v5231
    %v5694 = vpack.c.b16 %v5239, %v5232
    %v5695 = vpack.c.b16 %v5240, %v5233
    %v5696 = vpack.c.b16 %v5241, %v5234
    %v5697 = vpack.c.b16 %v5249, %v5242
    %v5698 = vpack.c.b16 %v5250, %v5243
    %v5699 = vpack.c.b16 %v5251, %v5244
    %v5700 = vpack.c.b16 %v5252, %v5245
    %v5701 = vpack.c.b16 %v5253, %v5246
    %v5702 = vpack.c.b16 %v5254, %v5247
    %v5703 = vpack.c.b16 %v5255, %v5248
    %6152 = vmatprep.subr.bf16.mxu0 %v5257
    %6153 = vmatpush1.bf16.msra.mxu0 %v5256
    %6154 = vmatprep.subr.bf16.mxu0 %v5264
    %6155 = vmatpush1.bf16.msra.mxu0 %v5263
    %6156 = vmatprep.subr.bf16.mxu0 %v5271
    %6157 = vmatpush1.bf16.msra.mxu0 %v5270
    %6158 = vmatprep.subr.bf16.mxu0 %v5278
    %6159 = vmatpush1.bf16.msra.mxu0 %v5277
    %6160 = vmatprep.subr.bf16.mxu0 %v5285
    %6161 = vmatpush1.bf16.msra.mxu0 %v5284
    %6162 = vmatprep.subr.bf16.mxu0 %v5292
    %6163 = vmatpush1.bf16.msra.mxu0 %v5291
    %6164 = vmatprep.subr.bf16.mxu0 %v5299
    %6165 = vmatpush1.bf16.msra.mxu0 %v5298
    %6166 = vmatprep.subr.bf16.mxu0 %v5306
    %6167 = vmatpush1.bf16.msra.mxu0 %v5305
    %6168 = vmatprep.subr.bf16.mxu0 %v5313
    %6169 = vmatpush1.bf16.msra.mxu0 %v5312
    %6170 = vmatprep.subr.bf16.mxu0 %v5320
    %6171 = vmatpush1.bf16.msra.mxu0 %v5319
    %6172 = vmatprep.subr.bf16.mxu0 %v5327
    %6173 = vmatpush1.bf16.msra.mxu0 %v5326
    %6174 = vmatprep.subr.bf16.mxu0 %v5334
    %6175 = vmatpush1.bf16.msra.mxu0 %v5333
    %6176 = vmatprep.subr.bf16.mxu0 %v5341
    %6177 = vmatpush1.bf16.msra.mxu0 %v5340
    %6178 = vmatprep.subr.bf16.mxu0 %v5348
    %6179 = vmatpush1.bf16.msra.mxu0 %v5347
    %6180 = vmatprep.subr.bf16.mxu0 %v5355
    %6181 = vmatpush1.bf16.msra.mxu0 %v5354
    %6182 = vmatprep.subr.bf16.mxu0 %v5362
    %6183 = vmatpush1.bf16.msra.mxu0 %v5361
    %6184 = vmatprep.mubr.bf16.mxu0 %v3292
    %6185 = vmatmul.mubr.bf16.gmra.mrb[0].mxu0 %v3291
    %v6186 = vpop.f32.mrb[0].mxu0
    %v6187 = vadd.f32 %v3816, %v6186
    %v6188 = vpop.f32.mrb[0].mxu0
    %v6189 = vadd.f32 %v3820, %v6188
    %v6190 = vpop.f32.mrb[0].mxu0
    %v6191 = vpop.f32.mrb[0].mxu0
    %6192 = vdwg.mxu0
    %6193 = vmatprep.subr.bf16.mxu0 %v5369
    %6194 = vmatpush1.bf16.msra.mxu0 %v5368
    %6195 = vmatprep.subr.bf16.mxu0 %v5376
    %6196 = vmatpush1.bf16.msra.mxu0 %v5375
    %6197 = vmatprep.subr.bf16.mxu0 %v5383
    %6198 = vmatpush1.bf16.msra.mxu0 %v5382
    %6199 = vmatprep.subr.bf16.mxu0 %v5390
    %6200 = vmatpush1.bf16.msra.mxu0 %v5389
    %6201 = vmatprep.subr.bf16.mxu0 %v5397
    %6202 = vmatpush1.bf16.msra.mxu0 %v5396
    %6203 = vmatprep.subr.bf16.mxu0 %v5404
    %6204 = vmatpush1.bf16.msra.mxu0 %v5403
    %6205 = vmatprep.subr.bf16.mxu0 %v5411
    %6206 = vmatpush1.bf16.msra.mxu0 %v5410
    %6207 = vmatprep.subr.bf16.mxu0 %v5418
    %6208 = vmatpush1.bf16.msra.mxu0 %v5417
    %6209 = vmatprep.subr.bf16.mxu0 %v5425
    %6210 = vmatpush1.bf16.msra.mxu0 %v5424
    %6211 = vmatprep.subr.bf16.mxu0 %v5432
    %6212 = vmatpush1.bf16.msra.mxu0 %v5431
    %6213 = vmatprep.subr.bf16.mxu0 %v5439
    %6214 = vmatpush1.bf16.msra.mxu0 %v5438
    %6215 = vmatprep.subr.bf16.mxu0 %v5446
    %6216 = vmatpush1.bf16.msra.mxu0 %v5445
    %6217 = vmatprep.subr.bf16.mxu0 %v5453
    %6218 = vmatpush1.bf16.msra.mxu0 %v5452
    %6219 = vmatprep.subr.bf16.mxu0 %v5460
    %6220 = vmatpush1.bf16.msra.mxu0 %v5459
    %6221 = vmatprep.subr.bf16.mxu0 %v5467
    %6222 = vmatpush1.bf16.msra.mxu0 %v5466
    %6223 = vmatprep.subr.bf16.mxu0 %v5474
    %6224 = vmatpush1.bf16.msra.mxu0 %v5473
    %6225 = vmatprep.mubr.bf16.mxu0 %v3294
    %6226 = vmatmul.mubr.bf16.gmra.mrb[0].mxu0 %v3293
    %v6227 = vpop.f32.mrb[0].mxu0
    %v6228 = vadd.f32 %v6187, %v6227
    %v6229 = vpop.f32.mrb[0].mxu0
    %v6230 = vadd.f32 %v6189, %v6229
    %v6231 = vpop.f32.mrb[0].mxu0
    %v6232 = vpop.f32.mrb[0].mxu0
    %6233 = vdwg.mxu0
    %6234 = vmatprep.subr.bf16.mxu0 %v5481
    %6235 = vmatpush1.bf16.msra.mxu0 %v5480
    %6236 = vmatprep.subr.bf16.mxu0 %v5488
    %6237 = vmatpush1.bf16.msra.mxu0 %v5487
    %6238 = vmatprep.subr.bf16.mxu0 %v5495
    %6239 = vmatpush1.bf16.msra.mxu0 %v5494
    %6240 = vmatprep.subr.bf16.mxu0 %v5502
    %6241 = vmatpush1.bf16.msra.mxu0 %v5501
    %6242 = vmatprep.subr.bf16.mxu0 %v5509
    %6243 = vmatpush1.bf16.msra.mxu0 %v5508
    %6244 = vmatprep.subr.bf16.mxu0 %v5516
    %6245 = vmatpush1.bf16.msra.mxu0 %v5515
    %6246 = vmatprep.subr.bf16.mxu0 %v5523
    %6247 = vmatpush1.bf16.msra.mxu0 %v5522
    %6248 = vmatprep.subr.bf16.mxu0 %v5530
    %6249 = vmatpush1.bf16.msra.mxu0 %v5529
    %6250 = vmatprep.subr.bf16.mxu0 %v5537
    %6251 = vmatpush1.bf16.msra.mxu0 %v5536
    %6252 = vmatprep.subr.bf16.mxu0 %v5544
    %6253 = vmatpush1.bf16.msra.mxu0 %v5543
    %6254 = vmatprep.subr.bf16.mxu0 %v5551
    %6255 = vmatpush1.bf16.msra.mxu0 %v5550
    %6256 = vmatprep.subr.bf16.mxu0 %v5558
    %6257 = vmatpush1.bf16.msra.mxu0 %v5557
    %6258 = vmatprep.subr.bf16.mxu0 %v5565
    %6259 = vmatpush1.bf16.msra.mxu0 %v5564
    %6260 = vmatprep.subr.bf16.mxu0 %v5572
    %6261 = vmatpush1.bf16.msra.mxu0 %v5571
    %6262 = vmatprep.subr.bf16.mxu0 %v5579
    %6263 = vmatpush1.bf16.msra.mxu0 %v5578
    %6264 = vmatprep.subr.bf16.mxu0 %v5586
    %6265 = vmatpush1.bf16.msra.mxu0 %v5585
    %6266 = vmatprep.mubr.bf16.mxu0 %v3296
    %6267 = vmatmul.mubr.bf16.gmra.mrb[0].mxu0 %v3295
    %v6268 = vpop.f32.mrb[0].mxu0
    %v6269 = vadd.f32 %v6228, %v6268
    %v6270 = vpop.f32.mrb[0].mxu0
    %v6271 = vadd.f32 %v6230, %v6270
    %v6272 = vpop.f32.mrb[0].mxu0
    %v6273 = vpop.f32.mrb[0].mxu0
    %6274 = vdwg.mxu0
    %6275 = vmatprep.subr.bf16.mxu0 %v5593
    %6276 = vmatpush1.bf16.msra.mxu0 %v5592
    %6277 = vmatprep.subr.bf16.mxu0 %v5600
    %6278 = vmatpush1.bf16.msra.mxu0 %v5599
    %6279 = vmatprep.subr.bf16.mxu0 %v5607
    %6280 = vmatpush1.bf16.msra.mxu0 %v5606
    %6281 = vmatprep.subr.bf16.mxu0 %v5614
    %6282 = vmatpush1.bf16.msra.mxu0 %v5613
    %6283 = vmatprep.subr.bf16.mxu0 %v5621
    %6284 = vmatpush1.bf16.msra.mxu0 %v5620
    %6285 = vmatprep.subr.bf16.mxu0 %v5628
    %6286 = vmatpush1.bf16.msra.mxu0 %v5627
    %6287 = vmatprep.subr.bf16.mxu0 %v5635
    %6288 = vmatpush1.bf16.msra.mxu0 %v5634
    %6289 = vmatprep.subr.bf16.mxu0 %v5642
    %6290 = vmatpush1.bf16.msra.mxu0 %v5641
    %6291 = vmatprep.subr.bf16.mxu0 %v5649
    %6292 = vmatpush1.bf16.msra.mxu0 %v5648
    %6293 = vmatprep.subr.bf16.mxu0 %v5656
    %6294 = vmatpush1.bf16.msra.mxu0 %v5655
    %6295 = vmatprep.subr.bf16.mxu0 %v5663
    %6296 = vmatpush1.bf16.msra.mxu0 %v5662
    %6297 = vmatprep.subr.bf16.mxu0 %v5670
    %6298 = vmatpush1.bf16.msra.mxu0 %v5669
    %6299 = vmatprep.subr.bf16.mxu0 %v5677
    %6300 = vmatpush1.bf16.msra.mxu0 %v5676
    %6301 = vmatprep.subr.bf16.mxu0 %v5684
    %6302 = vmatpush1.bf16.msra.mxu0 %v5683
    %6303 = vmatprep.subr.bf16.mxu0 %v5691
    %6304 = vmatpush1.bf16.msra.mxu0 %v5690
    %6305 = vmatprep.subr.bf16.mxu0 %v5698
    %6306 = vmatpush1.bf16.msra.mxu0 %v5697
    %6307 = vmatprep.mubr.bf16.mxu0 %v3298
    %6308 = vmatmul.mubr.bf16.gmra.mrb[0].mxu0 %v3297
    %v6309 = vpop.f32.mrb[0].mxu0
    %v6310 = vadd.f32 %v6269, %v6309
    %v6311 = vpop.f32.mrb[0].mxu0
    %v6312 = vadd.f32 %v6271, %v6311
    %v6313 = vpop.f32.mrb[0].mxu0
    %v6314 = vpop.f32.mrb[0].mxu0
    %6315 = vdwg.mxu0
    %6316 = vmatprep.subr.bf16.mxu0 %v5259
    %6317 = vmatpush1.bf16.msra.mxu0 %v5258
    %6318 = vmatprep.subr.bf16.mxu0 %v5266
    %6319 = vmatpush1.bf16.msra.mxu0 %v5265
    %6320 = vmatprep.subr.bf16.mxu0 %v5273
    %6321 = vmatpush1.bf16.msra.mxu0 %v5272
    %6322 = vmatprep.subr.bf16.mxu0 %v5280
    %6323 = vmatpush1.bf16.msra.mxu0 %v5279
    %6324 = vmatprep.subr.bf16.mxu0 %v5287
    %6325 = vmatpush1.bf16.msra.mxu0 %v5286
    %6326 = vmatprep.subr.bf16.mxu0 %v5294
    %6327 = vmatpush1.bf16.msra.mxu0 %v5293
    %6328 = vmatprep.subr.bf16.mxu0 %v5301
    %6329 = vmatpush1.bf16.msra.mxu0 %v5300
    %6330 = vmatprep.subr.bf16.mxu0 %v5308
    %6331 = vmatpush1.bf16.msra.mxu0 %v5307
    %6332 = vmatprep.subr.bf16.mxu0 %v5315
    %6333 = vmatpush1.bf16.msra.mxu0 %v5314
    %6334 = vmatprep.subr.bf16.mxu0 %v5322
    %6335 = vmatpush1.bf16.msra.mxu0 %v5321
    %6336 = vmatprep.subr.bf16.mxu0 %v5329
    %6337 = vmatpush1.bf16.msra.mxu0 %v5328
    %6338 = vmatprep.subr.bf16.mxu0 %v5336
    %6339 = vmatpush1.bf16.msra.mxu0 %v5335
    %6340 = vmatprep.subr.bf16.mxu0 %v5343
    %6341 = vmatpush1.bf16.msra.mxu0 %v5342
    %6342 = vmatprep.subr.bf16.mxu0 %v5350
    %6343 = vmatpush1.bf16.msra.mxu0 %v5349
    %6344 = vmatprep.subr.bf16.mxu0 %v5357
    %6345 = vmatpush1.bf16.msra.mxu0 %v5356
    %6346 = vmatprep.subr.bf16.mxu0 %v5364
    %6347 = vmatpush1.bf16.msra.mxu0 %v5363
    %6348 = vmatprep.mubr.bf16.mxu0 %v3292
    %6349 = vmatmul.mubr.bf16.gmra.mrb[0].mxu0 %v3291
    %v6350 = vpop.f32.mrb[0].mxu0
    %v6351 = vadd.f32 %v3824, %v6350
    %v6352 = vpop.f32.mrb[0].mxu0
    %v6353 = vadd.f32 %v3828, %v6352
    %v6354 = vpop.f32.mrb[0].mxu0
    %v6355 = vpop.f32.mrb[0].mxu0
    %6356 = vdwg.mxu0
    %6357 = vmatprep.subr.bf16.mxu0 %v5371
    %6358 = vmatpush1.bf16.msra.mxu0 %v5370
    %6359 = vmatprep.subr.bf16.mxu0 %v5378
    %6360 = vmatpush1.bf16.msra.mxu0 %v5377
    %6361 = vmatprep.subr.bf16.mxu0 %v5385
    %6362 = vmatpush1.bf16.msra.mxu0 %v5384
    %6363 = vmatprep.subr.bf16.mxu0 %v5392
    %6364 = vmatpush1.bf16.msra.mxu0 %v5391
    %6365 = vmatprep.subr.bf16.mxu0 %v5399
    %6366 = vmatpush1.bf16.msra.mxu0 %v5398
    %6367 = vmatprep.subr.bf16.mxu0 %v5406
    %6368 = vmatpush1.bf16.msra.mxu0 %v5405
    %6369 = vmatprep.subr.bf16.mxu0 %v5413
    %6370 = vmatpush1.bf16.msra.mxu0 %v5412
    %6371 = vmatprep.subr.bf16.mxu0 %v5420
    %6372 = vmatpush1.bf16.msra.mxu0 %v5419
    %6373 = vmatprep.subr.bf16.mxu0 %v5427
    %6374 = vmatpush1.bf16.msra.mxu0 %v5426
    %6375 = vmatprep.subr.bf16.mxu0 %v5434
    %6376 = vmatpush1.bf16.msra.mxu0 %v5433
    %6377 = vmatprep.subr.bf16.mxu0 %v5441
    %6378 = vmatpush1.bf16.msra.mxu0 %v5440
    %6379 = vmatprep.subr.bf16.mxu0 %v5448
    %6380 = vmatpush1.bf16.msra.mxu0 %v5447
    %6381 = vmatprep.subr.bf16.mxu0 %v5455
    %6382 = vmatpush1.bf16.msra.mxu0 %v5454
    %6383 = vmatprep.subr.bf16.mxu0 %v5462
    %6384 = vmatpush1.bf16.msra.mxu0 %v5461
    %6385 = vmatprep.subr.bf16.mxu0 %v5469
    %6386 = vmatpush1.bf16.msra.mxu0 %v5468
    %6387 = vmatprep.subr.bf16.mxu0 %v5476
    %6388 = vmatpush1.bf16.msra.mxu0 %v5475
    %6389 = vmatprep.mubr.bf16.mxu0 %v3294
    %6390 = vmatmul.mubr.bf16.gmra.mrb[0].mxu0 %v3293
    %v6391 = vpop.f32.mrb[0].mxu0
    %v6392 = vadd.f32 %v6351, %v6391
    %v6393 = vpop.f32.mrb[0].mxu0
    %v6394 = vadd.f32 %v6353, %v6393
    %v6395 = vpop.f32.mrb[0].mxu0
    %v6396 = vpop.f32.mrb[0].mxu0
    %6397 = vdwg.mxu0
    %6398 = vmatprep.subr.bf16.mxu0 %v5483
    %6399 = vmatpush1.bf16.msra.mxu0 %v5482
    %6400 = vmatprep.subr.bf16.mxu0 %v5490
    %6401 = vmatpush1.bf16.msra.mxu0 %v5489
    %6402 = vmatprep.subr.bf16.mxu0 %v5497
    %6403 = vmatpush1.bf16.msra.mxu0 %v5496
    %6404 = vmatprep.subr.bf16.mxu0 %v5504
    %6405 = vmatpush1.bf16.msra.mxu0 %v5503
    %6406 = vmatprep.subr.bf16.mxu0 %v5511
    %6407 = vmatpush1.bf16.msra.mxu0 %v5510
    %6408 = vmatprep.subr.bf16.mxu0 %v5518
    %6409 = vmatpush1.bf16.msra.mxu0 %v5517
    %6410 = vmatprep.subr.bf16.mxu0 %v5525
    %6411 = vmatpush1.bf16.msra.mxu0 %v5524
    %6412 = vmatprep.subr.bf16.mxu0 %v5532
    %6413 = vmatpush1.bf16.msra.mxu0 %v5531
    %6414 = vmatprep.subr.bf16.mxu0 %v5539
    %6415 = vmatpush1.bf16.msra.mxu0 %v5538
    %6416 = vmatprep.subr.bf16.mxu0 %v5546
    %6417 = vmatpush1.bf16.msra.mxu0 %v5545
    %6418 = vmatprep.subr.bf16.mxu0 %v5553
    %6419 = vmatpush1.bf16.msra.mxu0 %v5552
    %6420 = vmatprep.subr.bf16.mxu0 %v5560
    %6421 = vmatpush1.bf16.msra.mxu0 %v5559
    %6422 = vmatprep.subr.bf16.mxu0 %v5567
    %6423 = vmatpush1.bf16.msra.mxu0 %v5566
    %6424 = vmatprep.subr.bf16.mxu0 %v5574
    %6425 = vmatpush1.bf16.msra.mxu0 %v5573
    %6426 = vmatprep.subr.bf16.mxu0 %v5581
    %6427 = vmatpush1.bf16.msra.mxu0 %v5580
    %6428 = vmatprep.subr.bf16.mxu0 %v5588
    %6429 = vmatpush1.bf16.msra.mxu0 %v5587
    %6430 = vmatprep.mubr.bf16.mxu0 %v3296
    %6431 = vmatmul.mubr.bf16.gmra.mrb[0].mxu0 %v3295
    %v6432 = vpop.f32.mrb[0].mxu0
    %v6433 = vadd.f32 %v6392, %v6432
    %v6434 = vpop.f32.mrb[0].mxu0
    %v6435 = vadd.f32 %v6394, %v6434
    %v6436 = vpop.f32.mrb[0].mxu0
    %v6437 = vpop.f32.mrb[0].mxu0
    %6438 = vdwg.mxu0
    %6439 = vmatprep.subr.bf16.mxu0 %v5595
    %6440 = vmatpush1.bf16.msra.mxu0 %v5594
    %6441 = vmatprep.subr.bf16.mxu0 %v5602
    %6442 = vmatpush1.bf16.msra.mxu0 %v5601
    %6443 = vmatprep.subr.bf16.mxu0 %v5609
    %6444 = vmatpush1.bf16.msra.mxu0 %v5608
    %6445 = vmatprep.subr.bf16.mxu0 %v5616
    %6446 = vmatpush1.bf16.msra.mxu0 %v5615
    %6447 = vmatprep.subr.bf16.mxu0 %v5623
    %6448 = vmatpush1.bf16.msra.mxu0 %v5622
    %6449 = vmatprep.subr.bf16.mxu0 %v5630
    %6450 = vmatpush1.bf16.msra.mxu0 %v5629
    %6451 = vmatprep.subr.bf16.mxu0 %v5637
    %6452 = vmatpush1.bf16.msra.mxu0 %v5636
    %6453 = vmatprep.subr.bf16.mxu0 %v5644
    %6454 = vmatpush1.bf16.msra.mxu0 %v5643
    %6455 = vmatprep.subr.bf16.mxu0 %v5651
    %6456 = vmatpush1.bf16.msra.mxu0 %v5650
    %6457 = vmatprep.subr.bf16.mxu0 %v5658
    %6458 = vmatpush1.bf16.msra.mxu0 %v5657
    %6459 = vmatprep.subr.bf16.mxu0 %v5665
    %6460 = vmatpush1.bf16.msra.mxu0 %v5664
    %6461 = vmatprep.subr.bf16.mxu0 %v5672
    %6462 = vmatpush1.bf16.msra.mxu0 %v5671
    %6463 = vmatprep.subr.bf16.mxu0 %v5679
    %6464 = vmatpush1.bf16.msra.mxu0 %v5678
    %6465 = vmatprep.subr.bf16.mxu0 %v5686
    %6466 = vmatpush1.bf16.msra.mxu0 %v5685
    %6467 = vmatprep.subr.bf16.mxu0 %v5693
    %6468 = vmatpush1.bf16.msra.mxu0 %v5692
    %6469 = vmatprep.subr.bf16.mxu0 %v5700
    %6470 = vmatpush1.bf16.msra.mxu0 %v5699
    %6471 = vmatprep.mubr.bf16.mxu0 %v3298
    %6472 = vmatmul.mubr.bf16.gmra.mrb[0].mxu0 %v3297
    %v6473 = vpop.f32.mrb[0].mxu0
    %v6474 = vadd.f32 %v6433, %v6473
    %v6475 = vpop.f32.mrb[0].mxu0
    %v6476 = vadd.f32 %v6435, %v6475
    %v6477 = vpop.f32.mrb[0].mxu0
    %v6478 = vpop.f32.mrb[0].mxu0
    %6479 = vdwg.mxu0
    %6480 = vmatprep.subr.bf16.mxu0 %v5261
    %6481 = vmatpush1.bf16.msra.mxu0 %v5260
    %6482 = vmatprep.subr.bf16.mxu0 %v5268
    %6483 = vmatpush1.bf16.msra.mxu0 %v5267
    %6484 = vmatprep.subr.bf16.mxu0 %v5275
    %6485 = vmatpush1.bf16.msra.mxu0 %v5274
    %6486 = vmatprep.subr.bf16.mxu0 %v5282
    %6487 = vmatpush1.bf16.msra.mxu0 %v5281
    %6488 = vmatprep.subr.bf16.mxu0 %v5289
    %6489 = vmatpush1.bf16.msra.mxu0 %v5288
    %6490 = vmatprep.subr.bf16.mxu0 %v5296
    %6491 = vmatpush1.bf16.msra.mxu0 %v5295
    %6492 = vmatprep.subr.bf16.mxu0 %v5303
    %6493 = vmatpush1.bf16.msra.mxu0 %v5302
    %6494 = vmatprep.subr.bf16.mxu0 %v5310
    %6495 = vmatpush1.bf16.msra.mxu0 %v5309
    %6496 = vmatprep.subr.bf16.mxu0 %v5317
    %6497 = vmatpush1.bf16.msra.mxu0 %v5316
    %6498 = vmatprep.subr.bf16.mxu0 %v5324
    %6499 = vmatpush1.bf16.msra.mxu0 %v5323
    %6500 = vmatprep.subr.bf16.mxu0 %v5331
    %6501 = vmatpush1.bf16.msra.mxu0 %v5330
    %6502 = vmatprep.subr.bf16.mxu0 %v5338
    %6503 = vmatpush1.bf16.msra.mxu0 %v5337
    %6504 = vmatprep.subr.bf16.mxu0 %v5345
    %6505 = vmatpush1.bf16.msra.mxu0 %v5344
    %6506 = vmatprep.subr.bf16.mxu0 %v5352
    %6507 = vmatpush1.bf16.msra.mxu0 %v5351
    %6508 = vmatprep.subr.bf16.mxu0 %v5359
    %6509 = vmatpush1.bf16.msra.mxu0 %v5358
    %6510 = vmatprep.subr.bf16.mxu0 %v5366
    %6511 = vmatpush1.bf16.msra.mxu0 %v5365
    %6512 = vmatprep.mubr.bf16.mxu0 %v3292
    %6513 = vmatmul.mubr.bf16.gmra.mrb[0].mxu0 %v3291
    %v6514 = vpop.f32.mrb[0].mxu0
    %v6515 = vadd.f32 %v3832, %v6514
    %v6516 = vpop.f32.mrb[0].mxu0
    %v6517 = vadd.f32 %v3836, %v6516
    %v6518 = vpop.f32.mrb[0].mxu0
    %v6519 = vpop.f32.mrb[0].mxu0
    %6520 = vdwg.mxu0
    %6521 = vmatprep.subr.bf16.mxu0 %v5373
    %6522 = vmatpush1.bf16.msra.mxu0 %v5372
    %6523 = vmatprep.subr.bf16.mxu0 %v5380
    %6524 = vmatpush1.bf16.msra.mxu0 %v5379
    %6525 = vmatprep.subr.bf16.mxu0 %v5387
    %6526 = vmatpush1.bf16.msra.mxu0 %v5386
    %6527 = vmatprep.subr.bf16.mxu0 %v5394
    %6528 = vmatpush1.bf16.msra.mxu0 %v5393
    %6529 = vmatprep.subr.bf16.mxu0 %v5401
    %6530 = vmatpush1.bf16.msra.mxu0 %v5400
    %6531 = vmatprep.subr.bf16.mxu0 %v5408
    %6532 = vmatpush1.bf16.msra.mxu0 %v5407
    %6533 = vmatprep.subr.bf16.mxu0 %v5415
    %6534 = vmatpush1.bf16.msra.mxu0 %v5414
    %6535 = vmatprep.subr.bf16.mxu0 %v5422
    %6536 = vmatpush1.bf16.msra.mxu0 %v5421
    %6537 = vmatprep.subr.bf16.mxu0 %v5429
    %6538 = vmatpush1.bf16.msra.mxu0 %v5428
    %6539 = vmatprep.subr.bf16.mxu0 %v5436
    %6540 = vmatpush1.bf16.msra.mxu0 %v5435
    %6541 = vmatprep.subr.bf16.mxu0 %v5443
    %6542 = vmatpush1.bf16.msra.mxu0 %v5442
    %6543 = vmatprep.subr.bf16.mxu0 %v5450
    %6544 = vmatpush1.bf16.msra.mxu0 %v5449
    %6545 = vmatprep.subr.bf16.mxu0 %v5457
    %6546 = vmatpush1.bf16.msra.mxu0 %v5456
    %6547 = vmatprep.subr.bf16.mxu0 %v5464
    %6548 = vmatpush1.bf16.msra.mxu0 %v5463
    %6549 = vmatprep.subr.bf16.mxu0 %v5471
    %6550 = vmatpush1.bf16.msra.mxu0 %v5470
    %6551 = vmatprep.subr.bf16.mxu0 %v5478
    %6552 = vmatpush1.bf16.msra.mxu0 %v5477
    %6553 = vmatprep.mubr.bf16.mxu0 %v3294
    %6554 = vmatmul.mubr.bf16.gmra.mrb[0].mxu0 %v3293
    %v6555 = vpop.f32.mrb[0].mxu0
    %v6556 = vadd.f32 %v6515, %v6555
    %v6557 = vpop.f32.mrb[0].mxu0
    %v6558 = vadd.f32 %v6517, %v6557
    %v6559 = vpop.f32.mrb[0].mxu0
    %v6560 = vpop.f32.mrb[0].mxu0
    %6561 = vdwg.mxu0
    %6562 = vmatprep.subr.bf16.mxu0 %v5485
    %6563 = vmatpush1.bf16.msra.mxu0 %v5484
    %6564 = vmatprep.subr.bf16.mxu0 %v5492
    %6565 = vmatpush1.bf16.msra.mxu0 %v5491
    %6566 = vmatprep.subr.bf16.mxu0 %v5499
    %6567 = vmatpush1.bf16.msra.mxu0 %v5498
    %6568 = vmatprep.subr.bf16.mxu0 %v5506
    %6569 = vmatpush1.bf16.msra.mxu0 %v5505
    %6570 = vmatprep.subr.bf16.mxu0 %v5513
    %6571 = vmatpush1.bf16.msra.mxu0 %v5512
    %6572 = vmatprep.subr.bf16.mxu0 %v5520
    %6573 = vmatpush1.bf16.msra.mxu0 %v5519
    %6574 = vmatprep.subr.bf16.mxu0 %v5527
    %6575 = vmatpush1.bf16.msra.mxu0 %v5526
    %6576 = vmatprep.subr.bf16.mxu0 %v5534
    %6577 = vmatpush1.bf16.msra.mxu0 %v5533
    %6578 = vmatprep.subr.bf16.mxu0 %v5541
    %6579 = vmatpush1.bf16.msra.mxu0 %v5540
    %6580 = vmatprep.subr.bf16.mxu0 %v5548
    %6581 = vmatpush1.bf16.msra.mxu0 %v5547
    %6582 = vmatprep.subr.bf16.mxu0 %v5555
    %6583 = vmatpush1.bf16.msra.mxu0 %v5554
    %6584 = vmatprep.subr.bf16.mxu0 %v5562
    %6585 = vmatpush1.bf16.msra.mxu0 %v5561
    %6586 = vmatprep.subr.bf16.mxu0 %v5569
    %6587 = vmatpush1.bf16.msra.mxu0 %v5568
    %6588 = vmatprep.subr.bf16.mxu0 %v5576
    %6589 = vmatpush1.bf16.msra.mxu0 %v5575
    %6590 = vmatprep.subr.bf16.mxu0 %v5583
    %6591 = vmatpush1.bf16.msra.mxu0 %v5582
    %6592 = vmatprep.subr.bf16.mxu0 %v5590
    %6593 = vmatpush1.bf16.msra.mxu0 %v5589
    %6594 = vmatprep.mubr.bf16.mxu0 %v3296
    %6595 = vmatmul.mubr.bf16.gmra.mrb[0].mxu0 %v3295
    %v6596 = vpop.f32.mrb[0].mxu0
    %v6597 = vadd.f32 %v6556, %v6596
    %v6598 = vpop.f32.mrb[0].mxu0
    %v6599 = vadd.f32 %v6558, %v6598
    %v6600 = vpop.f32.mrb[0].mxu0
    %v6601 = vpop.f32.mrb[0].mxu0
    %6602 = vdwg.mxu0
    %6603 = vmatprep.subr.bf16.mxu0 %v5597
    %6604 = vmatpush1.bf16.msra.mxu0 %v5596
    %6605 = vmatprep.subr.bf16.mxu0 %v5604
    %6606 = vmatpush1.bf16.msra.mxu0 %v5603
    %6607 = vmatprep.subr.bf16.mxu0 %v5611
    %6608 = vmatpush1.bf16.msra.mxu0 %v5610
    %6609 = vmatprep.subr.bf16.mxu0 %v5618
    %6610 = vmatpush1.bf16.msra.mxu0 %v5617
    %6611 = vmatprep.subr.bf16.mxu0 %v5625
    %6612 = vmatpush1.bf16.msra.mxu0 %v5624
    %6613 = vmatprep.subr.bf16.mxu0 %v5632
    %6614 = vmatpush1.bf16.msra.mxu0 %v5631
    %6615 = vmatprep.subr.bf16.mxu0 %v5639
    %6616 = vmatpush1.bf16.msra.mxu0 %v5638
    %6617 = vmatprep.subr.bf16.mxu0 %v5646
    %6618 = vmatpush1.bf16.msra.mxu0 %v5645
    %6619 = vmatprep.subr.bf16.mxu0 %v5653
    %6620 = vmatpush1.bf16.msra.mxu0 %v5652
    %6621 = vmatprep.subr.bf16.mxu0 %v5660
    %6622 = vmatpush1.bf16.msra.mxu0 %v5659
    %6623 = vmatprep.subr.bf16.mxu0 %v5667
    %6624 = vmatpush1.bf16.msra.mxu0 %v5666
    %6625 = vmatprep.subr.bf16.mxu0 %v5674
    %6626 = vmatpush1.bf16.msra.mxu0 %v5673
    %6627 = vmatprep.subr.bf16.mxu0 %v5681
    %6628 = vmatpush1.bf16.msra.mxu0 %v5680
    %6629 = vmatprep.subr.bf16.mxu0 %v5688
    %6630 = vmatpush1.bf16.msra.mxu0 %v5687
    %6631 = vmatprep.subr.bf16.mxu0 %v5695
    %6632 = vmatpush1.bf16.msra.mxu0 %v5694
    %6633 = vmatprep.subr.bf16.mxu0 %v5702
    %6634 = vmatpush1.bf16.msra.mxu0 %v5701
    %6635 = vmatprep.mubr.bf16.mxu0 %v3298
    %6636 = vmatmul.mubr.bf16.gmra.mrb[0].mxu0 %v3297
    %v6637 = vpop.f32.mrb[0].mxu0
    %v6638 = vadd.f32 %v6597, %v6637
    %v6639 = vpop.f32.mrb[0].mxu0
    %v6640 = vadd.f32 %v6599, %v6639
    %v6641 = vpop.f32.mrb[0].mxu0
    %v6642 = vpop.f32.mrb[0].mxu0
    %6643 = vdwg.mxu0
    %6644 = vmatprep.subr.bf16.mxu0 0
    %6645 = vmatpush1.bf16.msra.mxu0 %v5262
    %6646 = vmatprep.subr.bf16.mxu0 0
    %6647 = vmatpush1.bf16.msra.mxu0 %v5269
    %6648 = vmatprep.subr.bf16.mxu0 0
    %6649 = vmatpush1.bf16.msra.mxu0 %v5276
    %6650 = vmatprep.subr.bf16.mxu0 0
    %6651 = vmatpush1.bf16.msra.mxu0 %v5283
    %6652 = vmatprep.subr.bf16.mxu0 0
    %6653 = vmatpush1.bf16.msra.mxu0 %v5290
    %6654 = vmatprep.subr.bf16.mxu0 0
    %6655 = vmatpush1.bf16.msra.mxu0 %v5297
    %6656 = vmatprep.subr.bf16.mxu0 0
    %6657 = vmatpush1.bf16.msra.mxu0 %v5304
    %6658 = vmatprep.subr.bf16.mxu0 0
    %6659 = vmatpush1.bf16.msra.mxu0 %v5311
    %6660 = vmatprep.subr.bf16.mxu0 0
    %6661 = vmatpush1.bf16.msra.mxu0 %v5318
    %6662 = vmatprep.subr.bf16.mxu0 0
    %6663 = vmatpush1.bf16.msra.mxu0 %v5325
    %6664 = vmatprep.subr.bf16.mxu0 0
    %6665 = vmatpush1.bf16.msra.mxu0 %v5332
    %6666 = vmatprep.subr.bf16.mxu0 0
    %6667 = vmatpush1.bf16.msra.mxu0 %v5339
    %6668 = vmatprep.subr.bf16.mxu0 0
    %6669 = vmatpush1.bf16.msra.mxu0 %v5346
    %6670 = vmatprep.subr.bf16.mxu0 0
    %6671 = vmatpush1.bf16.msra.mxu0 %v5353
    %6672 = vmatprep.subr.bf16.mxu0 0
    %6673 = vmatpush1.bf16.msra.mxu0 %v5360
    %6674 = vmatprep.subr.bf16.mxu0 0
    %6675 = vmatpush1.bf16.msra.mxu0 %v5367
    %6676 = vmatprep.mubr.bf16.mxu0 %v3292
    %6677 = vmatmul.mubr.bf16.gmra.mrb[0].mxu0 %v3291
    %v6678 = vpop.f32.mrb[0].mxu0
    %v6679 = vadd.f32 %v3840, %v6678
    %v6680 = vpop.f32.mrb[0].mxu0
    %v6681 = vpop.f32.mrb[0].mxu0
    %v6682 = vpop.f32.mrb[0].mxu0
    %6683 = vdwg.mxu0
    %6684 = vmatprep.subr.bf16.mxu0 0
    %6685 = vmatpush1.bf16.msra.mxu0 %v5374
    %6686 = vmatprep.subr.bf16.mxu0 0
    %6687 = vmatpush1.bf16.msra.mxu0 %v5381
    %6688 = vmatprep.subr.bf16.mxu0 0
    %6689 = vmatpush1.bf16.msra.mxu0 %v5388
    %6690 = vmatprep.subr.bf16.mxu0 0
    %6691 = vmatpush1.bf16.msra.mxu0 %v5395
    %6692 = vmatprep.subr.bf16.mxu0 0
    %6693 = vmatpush1.bf16.msra.mxu0 %v5402
    %6694 = vmatprep.subr.bf16.mxu0 0
    %6695 = vmatpush1.bf16.msra.mxu0 %v5409
    %6696 = vmatprep.subr.bf16.mxu0 0
    %6697 = vmatpush1.bf16.msra.mxu0 %v5416
    %6698 = vmatprep.subr.bf16.mxu0 0
    %6699 = vmatpush1.bf16.msra.mxu0 %v5423
    %6700 = vmatprep.subr.bf16.mxu0 0
    %6701 = vmatpush1.bf16.msra.mxu0 %v5430
    %6702 = vmatprep.subr.bf16.mxu0 0
    %6703 = vmatpush1.bf16.msra.mxu0 %v5437
    %6704 = vmatprep.subr.bf16.mxu0 0
    %6705 = vmatpush1.bf16.msra.mxu0 %v5444
    %6706 = vmatprep.subr.bf16.mxu0 0
    %6707 = vmatpush1.bf16.msra.mxu0 %v5451
    %6708 = vmatprep.subr.bf16.mxu0 0
    %6709 = vmatpush1.bf16.msra.mxu0 %v5458
    %6710 = vmatprep.subr.bf16.mxu0 0
    %6711 = vmatpush1.bf16.msra.mxu0 %v5465
    %6712 = vmatprep.subr.bf16.mxu0 0
    %6713 = vmatpush1.bf16.msra.mxu0 %v5472
    %6714 = vmatprep.subr.bf16.mxu0 0
    %6715 = vmatpush1.bf16.msra.mxu0 %v5479
    %6716 = vmatprep.mubr.bf16.mxu0 %v3294
    %6717 = vmatmul.mubr.bf16.gmra.mrb[0].mxu0 %v3293
    %v6718 = vpop.f32.mrb[0].mxu0
    %v6719 = vadd.f32 %v6679, %v6718
    %v6720 = vpop.f32.mrb[0].mxu0
    %v6721 = vpop.f32.mrb[0].mxu0
    %v6722 = vpop.f32.mrb[0].mxu0
    %6723 = vdwg.mxu0
    %6724 = vmatprep.subr.bf16.mxu0 0
    %6725 = vmatpush1.bf16.msra.mxu0 %v5486
    %6726 = vmatprep.subr.bf16.mxu0 0
    %6727 = vmatpush1.bf16.msra.mxu0 %v5493
    %6728 = vmatprep.subr.bf16.mxu0 0
    %6729 = vmatpush1.bf16.msra.mxu0 %v5500
    %6730 = vmatprep.subr.bf16.mxu0 0
    %6731 = vmatpush1.bf16.msra.mxu0 %v5507
    %6732 = vmatprep.subr.bf16.mxu0 0
    %6733 = vmatpush1.bf16.msra.mxu0 %v5514
    %6734 = vmatprep.subr.bf16.mxu0 0
    %6735 = vmatpush1.bf16.msra.mxu0 %v5521
    %6736 = vmatprep.subr.bf16.mxu0 0
    %6737 = vmatpush1.bf16.msra.mxu0 %v5528
    %6738 = vmatprep.subr.bf16.mxu0 0
    %6739 = vmatpush1.bf16.msra.mxu0 %v5535
    %6740 = vmatprep.subr.bf16.mxu0 0
    %6741 = vmatpush1.bf16.msra.mxu0 %v5542
    %6742 = vmatprep.subr.bf16.mxu0 0
    %6743 = vmatpush1.bf16.msra.mxu0 %v5549
    %6744 = vmatprep.subr.bf16.mxu0 0
    %6745 = vmatpush1.bf16.msra.mxu0 %v5556
    %6746 = vmatprep.subr.bf16.mxu0 0
    %6747 = vmatpush1.bf16.msra.mxu0 %v5563
    %6748 = vmatprep.subr.bf16.mxu0 0
    %6749 = vmatpush1.bf16.msra.mxu0 %v5570
    %6750 = vmatprep.subr.bf16.mxu0 0
    %6751 = vmatpush1.bf16.msra.mxu0 %v5577
    %6752 = vmatprep.subr.bf16.mxu0 0
    %6753 = vmatpush1.bf16.msra.mxu0 %v5584
    %6754 = vmatprep.subr.bf16.mxu0 0
    %6755 = vmatpush1.bf16.msra.mxu0 %v5591
    %6756 = vmatprep.mubr.bf16.mxu0 %v3296
    %6757 = vmatmul.mubr.bf16.gmra.mrb[0].mxu0 %v3295
    %v6758 = vpop.f32.mrb[0].mxu0
    %v6759 = vadd.f32 %v6719, %v6758
    %v6760 = vpop.f32.mrb[0].mxu0
    %v6761 = vpop.f32.mrb[0].mxu0
    %v6762 = vpop.f32.mrb[0].mxu0
    %6763 = vdwg.mxu0
    %6764 = vmatprep.subr.bf16.mxu0 0
    %6765 = vmatpush1.bf16.msra.mxu0 %v5598
    %6766 = vmatprep.subr.bf16.mxu0 0
    %6767 = vmatpush1.bf16.msra.mxu0 %v5605
    %6768 = vmatprep.subr.bf16.mxu0 0
    %6769 = vmatpush1.bf16.msra.mxu0 %v5612
    %6770 = vmatprep.subr.bf16.mxu0 0
    %6771 = vmatpush1.bf16.msra.mxu0 %v5619
    %6772 = vmatprep.subr.bf16.mxu0 0
    %6773 = vmatpush1.bf16.msra.mxu0 %v5626
    %6774 = vmatprep.subr.bf16.mxu0 0
    %6775 = vmatpush1.bf16.msra.mxu0 %v5633
    %6776 = vmatprep.subr.bf16.mxu0 0
    %6777 = vmatpush1.bf16.msra.mxu0 %v5640
    %6778 = vmatprep.subr.bf16.mxu0 0
    %6779 = vmatpush1.bf16.msra.mxu0 %v5647
    %6780 = vmatprep.subr.bf16.mxu0 0
    %6781 = vmatpush1.bf16.msra.mxu0 %v5654
    %6782 = vmatprep.subr.bf16.mxu0 0
    %6783 = vmatpush1.bf16.msra.mxu0 %v5661
    %6784 = vmatprep.subr.bf16.mxu0 0
    %6785 = vmatpush1.bf16.msra.mxu0 %v5668
    %6786 = vmatprep.subr.bf16.mxu0 0
    %6787 = vmatpush1.bf16.msra.mxu0 %v5675
    %6788 = vmatprep.subr.bf16.mxu0 0
    %6789 = vmatpush1.bf16.msra.mxu0 %v5682
    %6790 = vmatprep.subr.bf16.mxu0 0
    %6791 = vmatpush1.bf16.msra.mxu0 %v5689
    %6792 = vmatprep.subr.bf16.mxu0 0
    %6793 = vmatpush1.bf16.msra.mxu0 %v5696
    %6794 = vmatprep.subr.bf16.mxu0 0
    %6795 = vmatpush1.bf16.msra.mxu0 %v5703
    %6796 = vmatprep.mubr.bf16.mxu0 %v3298
    %6797 = vmatmul.mubr.bf16.gmra.mrb[0].mxu0 %v3297
    %v6798 = vpop.f32.mrb[0].mxu0
    %v6799 = vadd.f32 %v6759, %v6798
    %v6800 = vpop.f32.mrb[0].mxu0
    %v6801 = vpop.f32.mrb[0].mxu0
    %v6802 = vpop.f32.mrb[0].mxu0
    %6803 = vdwg.mxu0
    %v6804 = vtanh.pop %v6310
    %v6805 = vtanh.pop %v6312
    %v6806 = vtanh.pop %v6474
    %v6807 = vtanh.pop %v6476
    %v6808 = vtanh.pop %v6638
    %v6809 = vtanh.pop %v6640
    %v6810 = vtanh.pop %v6799
    %6811 = vst [vmem:[%s15] sm:$0xff] %v6804
    %6812 = vst [vmem:[%s15 + $0x8] sm:$0xff] %v6805
    %6813 = vst [vmem:[%s15 + $0x10] sm:$0xff] %v6806
    %6814 = vst [vmem:[%s15 + $0x18] sm:$0xff] %v6807
    %6815 = vst [vmem:[%s15 + $0x20] sm:$0xff] %v6808
    %6816 = vst [vmem:[%s15 + $0x28] sm:$0xff] %v6809
    %6817 = vst [vmem:[%s15 + $0x30] sm:$0xff] %v6810
    // Predicated region
    $region122: #{generator_forward.1} parent=1 // pred_check
      _
    $region123: #{generator_forward.1} parent=1 // pred_check_branch
      %6819 = sbr.rel (0) target = $region125
    $region124: #{generator_forward.1} parent=1 // pred_region
      _
    $region125: #{generator_forward.1} parent=1 // pred_fallthru
      _
    // Predicated region
    $region126: #{generator_forward.1} parent=1 // pred_check
      _
    $region127: #{generator_forward.1} parent=1 // pred_check_branch
      %6821 = sbr.rel (0) target = $region129
    $region128: #{generator_forward.1} parent=1 // pred_region
      _
    $region129: #{generator_forward.1} parent=1 // pred_fallthru
      _
    %6822 = vsyncpa [#allocation3], 1
    %6823 = vsyncpa [#allocation5], 1
    %6824 = vsyncpa [#allocation8], 1
    %6825 = vsyncpa [#allocation11], 1
    %6826 = vsyncpa [#allocation14], 1
    %6827 = vsyncpa [#allocation17], 1
    %6828 = vsyncpa [#allocation20], 1
    %6829 = vsyncpa [#allocation23], 1

</llo_original>
